<compile_context>
chip_gen: v6e
topology: v6e:2x2x1
jax: 0.10.0
libtpu: 0.0.40
codegen_flags: <defaults>
</compile_context>

<pallas_src>
import jax
import jax.numpy as jnp
import numpy as np
from jax.experimental import pallas as pl
from jax.experimental.pallas import tpu as pltpu

EPS = 1e-5
LANE = 128                      # TPU lane width; channel dims are padded to this.


def _rup(x, m):
    return (x + m - 1) // m * m


_VMEM_LIMIT = None


def _vmem_limit_bytes():
    # ~75% of physical VMEM (96 MiB on v5e/v6e, 48 MiB on v7x), capped at 100 MiB.
    global _VMEM_LIMIT
    if _VMEM_LIMIT is None:
        try:
            cap = int(pltpu.get_tpu_info().vmem_capacity_bytes)
        except Exception:
            cap = 64 * 1024 * 1024
        _VMEM_LIMIT = max(32 * 1024 * 1024, min(cap * 3 // 4, 100 * 1024 * 1024))
    return _VMEM_LIMIT


def _cparams(semantics):
    return pltpu.CompilerParams(dimension_semantics=semantics,
                                vmem_limit_bytes=_vmem_limit_bytes())


def _pick_tm(m):
    # Row-tile size for the stats kernel ((tm, 128) blocks).
    for t in (2048, 1024, 512, 256):
        if m >= t:
            return t
    return max(8, _rup(m, 8))


def _pick_tr(ho, wo, max_rows=2048):
    # Row-band height for the conv kernels: divides Ho, keeps the per-tile
    # matmul M-dim (tr*wo) bounded, prefers >=2 bands (keeps both TensorCores
    # busy on v7x) when that still gives >=128 rows per MXU dot.
    divs = [d for d in range(1, ho + 1) if ho % d == 0 and d * wo <= max_rows]
    if not divs:
        return 1   # TODO(synk): pad Ho + mask for prime Ho with huge Wo.
    banded = [d for d in divs if d < ho and d * wo >= 128]
    return max(banded) if banded else max(divs)


# ------------------------------ kernel bodies ------------------------------ #

def _stats_kernel(x_ref, s_ref):
    # Per-channel partial sum / sum-of-squares of one (tm, C) row tile.
    x = x_ref[...]
    su = jnp.sum(x, axis=0, keepdims=True)
    sq = jnp.sum(x * x, axis=0, keepdims=True)
    s_ref[...] = jnp.concatenate([su, sq], axis=0).reshape(1, 2, x.shape[1])


def _make_conv1_kernel(tr, wo, ci, co, st):
    # Fused: relu(bn1(x)) applied to the halo band in-kernel, 3x3 conv with
    # kx merged into K, partial BN2 stats of y1, partial stats of the raw 1x1
    # identity projection (read from the same raw window).
    rows_span = st * (tr - 1) + 1
    cols_span = st * (wo - 1) + 1

    def kernel(xm_ref, xh_ref, sc_ref, sh_ref, w_ref, cb_ref, wid_ref, bid_ref,
               y_ref, sy_ref, si_ref):
        win = jnp.concatenate([xm_ref[...], xh_ref[...]], axis=1)    # raw band+halo
        a = jnp.maximum(win * sc_ref[...].reshape(1, 1, 1, ci)
                        + sh_ref[...].reshape(1, 1, 1, ci), 0.0)     # BN1 + ReLU
        acc = None
        for ky in range(3):
            rows = a[:, ky:ky + rows_span:st, :, :]                  # (1, tr, wp, ci)
            cols = jnp.concatenate(
                [rows[:, :, kx:kx + cols_span:st, :] for kx in range(3)],
                axis=-1)                                             # (1, tr, wo, 3ci)
            p = jnp.dot(cols.reshape(tr * wo, 3 * ci), w_ref[ky],
                        preferred_element_type=jnp.float32)
            acc = p if acc is None else acc + p
        y = acc + cb_ref[...]
        y_ref[...] = y.reshape(1, tr, wo, co)
        sy_ref[...] = jnp.concatenate(
            [jnp.sum(y, axis=0, keepdims=True),
             jnp.sum(y * y, axis=0, keepdims=True)], axis=0).reshape(1, 1, 2, co)
        # Raw identity projection (1x1 conv, stride st) from the same window.
        xs = win[:, 1:1 + rows_span:st, 1:1 + cols_span:st, :]
        idp = jnp.dot(xs.reshape(tr * wo, ci), wid_ref[...],
                      preferred_element_type=jnp.float32) + bid_ref[...]
        si_ref[...] = jnp.concatenate(
            [jnp.sum(idp, axis=0, keepdims=True),
             jnp.sum(idp * idp, axis=0, keepdims=True)], axis=0).reshape(1, 1, 2, co)

    return kernel


def _make_conv2_kernel(tr, wo, ci_id, co):
    # conv2 with BN2 folded into its weights/bias, plus the BN-folded identity
    # projection recomputed and added in the epilogue.
    def kernel(ym_ref, yh_ref, w_ref, b_ref, xs_ref, widf_ref, bidf_ref, o_ref):
        win = jnp.concatenate([ym_ref[...], yh_ref[...]], axis=1)    # (1, tr+2, wo+2, co)
        acc = None
        for ky in range(3):
            rows = win[:, ky:ky + tr, :, :]
            cols = jnp.concatenate(
                [rows[:, :, kx:kx + wo, :] for kx in range(3)], axis=-1)
            p = jnp.dot(cols.reshape(tr * wo, 3 * co), w_ref[ky],
                        preferred_element_type=jnp.float32)
            acc = p if acc is None else acc + p
        y = acc + b_ref[...]                                         # BN2-folded bias
        idp = jnp.dot(xs_ref[...].reshape(tr * wo, ci_id), widf_ref[...],
                      preferred_element_type=jnp.float32) + bidf_ref[...]
        o_ref[...] = (y + idp).reshape(1, tr, wo, co)

    return kernel


# --------------------------- pallas_call wrappers --------------------------- #

def channel_stats(x2d):
    """Per-channel (sum, sum_sq) of an (M, C) array, tiled over rows."""
    m, c = x2d.shape
    tm = _pick_tm(m)
    mp = _rup(m, tm)
    if mp != m:                         # zero rows contribute nothing to sums
        x2d = jnp.pad(x2d, ((0, mp - m), (0, 0)))
    g = mp // tm
    part = pl.pallas_call(
        _stats_kernel,
        out_shape=jax.ShapeDtypeStruct((g, 2, c), jnp.float32),
        grid=(g,),
        in_specs=[pl.BlockSpec((tm, c), lambda i: (i, 0))],
        out_specs=pl.BlockSpec((1, 2, c), lambda i: (i, 0, 0)),
        compiler_params=_cparams(("parallel",)),
    )(x2d)
    s = jnp.sum(part, axis=0)           # tiny (2, C) reduction in glue
    return s[0:1], s[1:2]


def conv1_pass(xpad, xhalo, sc1, sh1, w1, cb1, wid, cbi, *, n, ho, wo, tr, st):
    """Fused BN1+ReLU -> conv1, plus BN2 / identity-projection partial stats."""
    nb = ho // tr
    cpi = xpad.shape[-1]
    cpo = w1.shape[-1]
    wp = xpad.shape[2]
    band, halo = tr * st, 3 - st
    y, sy, si = pl.pallas_call(
        _make_conv1_kernel(tr, wo, cpi, cpo, st),
        out_shape=(jax.ShapeDtypeStruct((n, ho, wo, cpo), jnp.float32),
                   jax.ShapeDtypeStruct((n, nb, 2, cpo), jnp.float32),
                   jax.ShapeDtypeStruct((n, nb, 2, cpo), jnp.float32)),
        grid=(n, nb),
        in_specs=[pl.BlockSpec((1, band, wp, cpi), lambda i, j: (i, j, 0, 0)),
                  pl.BlockSpec((1, halo, wp, cpi), lambda i, j: (i, j, 0, 0)),
                  pl.BlockSpec((1, cpi), lambda i, j: (0, 0)),
                  pl.BlockSpec((1, cpi), lambda i, j: (0, 0)),
                  pl.BlockSpec((3, 3 * cpi, cpo), lambda i, j: (0, 0, 0)),
                  pl.BlockSpec((1, cpo), lambda i, j: (0, 0)),
                  pl.BlockSpec((cpi, cpo), lambda i, j: (0, 0)),
                  pl.BlockSpec((1, cpo), lambda i, j: (0, 0))],
        out_specs=(pl.BlockSpec((1, tr, wo, cpo), lambda i, j: (i, j, 0, 0)),
                   pl.BlockSpec((1, 1, 2, cpo), lambda i, j: (i, j, 0, 0)),
                   pl.BlockSpec((1, 1, 2, cpo), lambda i, j: (i, j, 0, 0))),
        compiler_params=_cparams(("parallel", "parallel")),
    )(xpad, xhalo, sc1, sh1, w1, cb1, wid, cbi)
    sy = jnp.sum(sy, axis=(0, 1))
    si = jnp.sum(si, axis=(0, 1))
    return y, (sy[0:1], sy[1:2]), (si[0:1], si[1:2])


def conv2_pass(ypad, yhalo, w2f, b2f, xs, widf, bidf, *, n, ho, wo, tr):
    """conv2 with BN2 folded in + fused (BN-folded) identity residual."""
    nb = ho // tr
    cpo = w2f.shape[-1]
    cpi = xs.shape[-1]
    wp = ypad.shape[2]          # wo + 2
    return pl.pallas_call(
        _make_conv2_kernel(tr, wo, cpi, cpo),
        out_shape=jax.ShapeDtypeStruct((n, ho, wo, cpo), jnp.float32),
        grid=(n, nb),
        in_specs=[pl.BlockSpec((1, tr, wp, cpo), lambda i, j: (i, j, 0, 0)),
                  pl.BlockSpec((1, 2, wp, cpo), lambda i, j: (i, j, 0, 0)),
                  pl.BlockSpec((3, 3 * cpo, cpo), lambda i, j: (0, 0, 0)),
                  pl.BlockSpec((1, cpo), lambda i, j: (0, 0)),
                  pl.BlockSpec((1, tr, wo, cpi), lambda i, j: (i, j, 0, 0)),
                  pl.BlockSpec((cpi, cpo), lambda i, j: (0, 0)),
                  pl.BlockSpec((1, cpo), lambda i, j: (0, 0))],
        out_specs=pl.BlockSpec((1, tr, wo, cpo), lambda i, j: (i, j, 0, 0)),
        compiler_params=_cparams(("parallel", "parallel")),
    )(ypad, yhalo, w2f, b2f, xs, widf, bidf)


# --------------------------------- glue ------------------------------------ #

def _bn_affine(s, q, m, gamma, beta):
    # Fold batch-statistic BN into a per-channel scale/shift (rsqrt on (1,C)).
    mean = s / m
    var = jnp.maximum(q / m - mean * mean, 0.0)
    scale = gamma * jax.lax.rsqrt(var + EPS)
    return scale, beta - mean * scale


def _relu_sentinel(scale, shift):
    # Pad value p with scale*p + shift == -4  ->  relu(...) == 0 at the border.
    safe = jnp.where(scale == 0.0, 1.0, scale)
    return jnp.where(jnp.abs(scale) > 1e-12, (-4.0 - shift) / safe, 0.0)


def _lin_sentinel(scale, shift):
    # Pad value p with scale*p + shift == 0 (zero border for the folded BN2).
    safe = jnp.where(scale == 0.0, 1.0, scale)
    return jnp.where(jnp.abs(scale) > 1e-12, -shift / safe, 0.0)


def _sentinel_pad(x, pad_vec):
    # (N,H,W,C) -> (N,H+2,W+2,C) with a 1-pixel per-channel sentinel border.
    n, hh, ww, c = x.shape
    full = jnp.broadcast_to(pad_vec.reshape(1, 1, 1, c), (n, hh + 2, ww + 2, c))
    return jax.lax.dynamic_update_slice(full, x, (0, 1, 1, 0))


def _build_halo(xpad, nb, band_rows, halo_rows):
    # Rows [(j+1)*band_rows, (j+1)*band_rows + halo_rows) for each band j.
    idx = ((jnp.arange(nb)[:, None] + 1) * band_rows
           + jnp.arange(halo_rows)[None, :]).reshape(-1)
    return jnp.take(xpad, idx, axis=1)          # (N, nb*halo_rows, Wp, C)


def _pad_vec(v, c):
    # (C,) -> zero-padded (1, CP); zeros keep padded channels exactly 0.
    return jnp.pad(v.reshape(1, -1).astype(jnp.float32),
                   ((0, 0), (0, c - v.shape[0])))


def _pad_w3x3_4d(w, cip, cop):
    # torch (Co, Ci, 3, 3) -> padded (3, 3, CIP, COP) in (ky, kx, ci, co) order.
    co, ci = w.shape[0], w.shape[1]
    wt = jnp.transpose(w.astype(jnp.float32), (2, 3, 1, 0))
    return jnp.pad(wt, ((0, 0), (0, 0), (0, cip - ci), (0, cop - co)))


def _pad_w3x3_kmerge(w, cip, cop):
    # (3, 3, CIP, COP) -> (3, 3*CIP, COP); contraction index = kx*CIP + ci.
    return _pad_w3x3_4d(w, cip, cop).reshape(3, 3 * cip, cop)


def block_forward(x_nchw, p, st):
    """Pallas implementation of Block.forward; NCHW in / NCHW out."""
    n, cin, h, w = x_nchw.shape
    cout = p["conv1_w"].shape[0]
    cpi, cpo = _rup(cin, LANE), _rup(cout, LANE)

    ho = (h - 1) // st + 1
    wo = (w - 1) // st + 1
    tr = _pick_tr(ho, wo)
    nb = ho // tr

    # NHWC, channels zero-padded to the lane width (padded channels stay
    # exactly 0 through the whole pipeline: gamma/beta/bias/weights are
    # zero-padded too).
    x = jnp.transpose(x_nchw, (0, 2, 3, 1)).astype(jnp.float32)
    x = jnp.pad(x, ((0, 0), (0, 0), (0, 0), (0, cpi - cin)))

    g1, b1 = _pad_vec(p["g1"], cpi), _pad_vec(p["b1"], cpi)
    g2, b2 = _pad_vec(p["g2"], cpo), _pad_vec(p["b2"], cpo)
    g3, b3 = _pad_vec(p["g3"], cpo), _pad_vec(p["b3"], cpo)
    cb1 = _pad_vec(p["conv1_b"], cpo)
    cb2 = _pad_vec(p["conv2_b"], cpo)
    cbi = _pad_vec(p["id_b"], cpo)
    w1 = _pad_w3x3_kmerge(p["conv1_w"], cpi, cpo)          # (3, 3*CPI, CPO)
    w2t = _pad_w3x3_4d(p["conv2_w"], cpo, cpo)             # (3, 3, CPO, CPO)
    wid = jnp.pad(p["id_w"][:, :, 0, 0].T.astype(jnp.float32),
                  ((0, cpi - cin), (0, cpo - cout)))

    # pass 1: batch statistics of x -> BN1 scale/shift
    m0 = n * h * w
    s0, q0 = channel_stats(x.reshape(m0, cpi))
    sc1, sh1 = _bn_affine(s0, q0, m0, g1, b1)

    # conv1 input: x padded spatially with a per-channel sentinel so that the
    # in-kernel relu(sc1*pad + sh1) reproduces the zero-padded relu(bn1(x)).
    pad1 = _relu_sentinel(sc1, sh1)
    xpad = _sentinel_pad(x, pad1)
    xhalo = _build_halo(xpad, nb, tr * st, 3 - st)

    # pass 2: fused BN1+ReLU -> conv1(+bias), BN2 partial stats,
    #         identity-projection partial stats.
    y1, (s1, q1), (si_, qi_) = conv1_pass(
        xpad, xhalo, sc1, sh1, w1, cb1, wid, cbi,
        n=n, ho=ho, wo=wo, tr=tr, st=st)

    m1 = n * ho * wo
    sc2, sh2 = _bn_affine(s1, q1, m1, g2, b2)
    sci, shi = _bn_affine(si_, qi_, m1, g3, b3)

    # Fold BN2 into conv2 (weights scaled over input channels, shift folded
    # into the bias) and fold bn_id into the 1x1 identity weights.
    w2f = (w2t * sc2.reshape(1, 1, cpo, 1)).reshape(3, 3 * cpo, cpo)
    b2f = cb2 + jnp.sum(w2t * sh2.reshape(1, 1, cpo, 1),
                        axis=(0, 1, 2)).reshape(1, cpo)
    widf = wid * sci
    bidf = cbi * sci + shi

    # conv2 input: y1 padded spatially with -sh2/sc2 so the folded BN2 sees an
    # exactly-zero border (matching zero-padding of bn2(y1)).
    pad2 = _lin_sentinel(sc2, sh2)
    ypad = _sentinel_pad(y1, pad2)
    yhalo = _build_halo(ypad, nb, tr, 2)
    xs = x[:, 0:st * (ho - 1) + 1:st, 0:st * (wo - 1) + 1:st, :]

    # pass 3: conv2 (+folded BN2) + fused identity residual
    out = conv2_pass(ypad, yhalo, w2f, b2f, xs, widf, bidf,
                     n=n, ho=ho, wo=wo, tr=tr)

    return jnp.transpose(out[..., :cout], (0, 3, 1, 2))


# ---------------------------- pure-JAX reference ---------------------------- #

def _ref_forward(x, p, st):
    def bn(v, g, b):
        mean = v.mean(axis=(0, 2, 3), keepdims=True)
        var = v.var(axis=(0, 2, 3), keepdims=True)
        return (v - mean) / jnp.sqrt(var + EPS) * g.reshape(1, -1, 1, 1) \
            + b.reshape(1, -1, 1, 1)

    def conv(v, w, b, stride, pad):
        y = jax.lax.conv_general_dilated(
            v, w, (stride, stride), ((pad, pad), (pad, pad)),
            dimension_numbers=("NCHW", "OIHW", "NCHW"))
        return y + b.reshape(1, -1, 1, 1)

    identity = x
    h = jnp.maximum(bn(x, p["g1"], p["b1"]), 0.0)
    h = conv(h, p["conv1_w"], p["conv1_b"], st, 1)
    h = bn(h, p["g2"], p["b2"])
    h = conv(h, p["conv2_w"], p["conv2_b"], 1, 1)
    idp = bn(conv(identity, p["id_w"], p["id_b"], st, 0), p["g3"], p["b3"])
    return h + idp


# ----------------------------------- main ----------------------------------- #

if __name__ == "__main__":
    N, Cin, H, W, Cout, st = 2, 4, 16, 16, 8, 1

    key = jax.random.PRNGKey(0)
    ks = jax.random.split(key, 12)
    f32 = jnp.float32
    params = {
        "conv1_w": 0.1 * jax.random.normal(ks[0], (Cout, Cin, 3, 3), f32),
        "conv1_b": 0.1 * jax.random.normal(ks[1], (Cout,), f32),
        "conv2_w": 0.1 * jax.random.normal(ks[2], (Cout, Cout, 3, 3), f32),
        "conv2_b": 0.1 * jax.random.normal(ks[3], (Cout,), f32),
        "id_w":    0.1 * jax.random.normal(ks[4], (Cout, Cin, 1, 1), f32),
        "id_b":    0.1 * jax.random.normal(ks[5], (Cout,), f32),
        "g1": 1.0 + 0.1 * jax.random.normal(ks[6], (Cin,), f32),
        "b1": 0.1 * jax.random.normal(ks[7], (Cin,), f32),
        "g2": 1.0 + 0.1 * jax.random.normal(ks[8], (Cout,), f32),
        "b2": 0.1 * jax.random.normal(ks[9], (Cout,), f32),
        "g3": 1.0 + 0.1 * jax.random.normal(ks[10], (Cout,), f32),
        "b3": 0.1 * jax.random.normal(ks[11], (Cout,), f32),
    }
    x = jax.random.normal(jax.random.PRNGKey(42), (N, Cin, H, W), f32)

    fwd = jax.jit(block_forward, static_argnums=2)
    out = jax.block_until_ready(fwd(x, params, st))
    ref = jax.block_until_ready(_ref_forward(x, params, st))

    Ho = (H - 1) // st + 1
    Wo = (W - 1) // st + 1
    assert out.shape == (N, Cout, Ho, Wo), out.shape
    np.testing.assert_allclose(np.asarray(out), np.asarray(ref),
                               rtol=2e-3, atol=2e-3)
    print("KERNEL_OK")
</pallas_src>

<mosaic_0001>
module attributes {stable_mosaic.version = 11 : i64} {
  func.func @_stats_kernel(%arg0: i32, %arg1: memref<512x128xf32, #tpu.memory_space<vmem>>, %arg2: memref<1x2x128xf32, #tpu.memory_space<vmem>>) attributes {dimension_semantics = [#tpu.dimension_semantics<parallel>], iteration_bounds = array<i64: 1>, scalar_prefetch = 0 : i64, scratch_operands = 0 : i64, tpu.core_type = #tpu.core_type<tc>, window_params = [{transform_indices = @transform_0, window_bounds = array<i64: 512, 128>}, {transform_indices = @transform_1, window_bounds = array<i64: 1, 2, 128>}]} {
    %c0 = arith.constant 0 : index
    %c0_0 = arith.constant 0 : index
    %0 = vector.load %arg1[%c0, %c0_0] : memref<512x128xf32, #tpu.memory_space<vmem>>, vector<512x128xf32>
    %cst = arith.constant dense<0.000000e+00> : vector<128xf32>
    %1 = vector.multi_reduction <add>, %0, %cst [0] : vector<512x128xf32> to vector<128xf32>
    %2 = vector.shape_cast %1 : vector<128xf32> to vector<1x128xf32>
    %3 = arith.mulf %0, %0 : vector<512x128xf32>
    %cst_1 = arith.constant dense<0.000000e+00> : vector<128xf32>
    %4 = vector.multi_reduction <add>, %3, %cst_1 [0] : vector<512x128xf32> to vector<128xf32>
    %5 = vector.shape_cast %4 : vector<128xf32> to vector<1x128xf32>
    %6 = tpu.concatenate %2, %5 in 0 : vector<1x128xf32>, vector<1x128xf32> -> vector<2x128xf32>
    %7 = vector.shape_cast %6 : vector<2x128xf32> to vector<1x2x128xf32>
    %c0_2 = arith.constant 0 : index
    %c0_3 = arith.constant 0 : index
    %c0_4 = arith.constant 0 : index
    %8 = vector.load %arg2[%c0_2, %c0_3, %c0_4] : memref<1x2x128xf32, #tpu.memory_space<vmem>>, vector<1x2x128xf32>
    tpu.vector_store %arg2[%c0_2, %c0_3, %c0_4], %7 {strides = array<i32>} : memref<1x2x128xf32, #tpu.memory_space<vmem>>, vector<1x2x128xf32>,
    return
  }
  func.func @transform_0(%arg0: i32) -> (i32, i32) {
    %c0_i32 = arith.constant 0 : i32
    %c0_i32_0 = arith.constant 0 : i32
    return %arg0, %c0_i32 : i32, i32
  }
  func.func @transform_1(%arg0: i32) -> (i32, i32, i32) {
    %c0_i32 = arith.constant 0 : i32
    %c0_i32_0 = arith.constant 0 : i32
    %c0_i32_1 = arith.constant 0 : i32
    return %arg0, %c0_i32, %c0_i32_0 : i32, i32, i32
  }
}

module attributes {stable_mosaic.version = 11 : i64} {
  func.func @kernel(%arg0: i32, %arg1: i32, %arg2: memref<1x8x18x128xf32, #tpu.memory_space<vmem>>, %arg3: memref<1x2x18x128xf32, #tpu.memory_space<vmem>>, %arg4: memref<1x128xf32, #tpu.memory_space<vmem>>, %arg5: memref<1x128xf32, #tpu.memory_space<vmem>>, %arg6: memref<3x384x128xf32, #tpu.memory_space<vmem>>, %arg7: memref<1x128xf32, #tpu.memory_space<vmem>>, %arg8: memref<128x128xf32, #tpu.memory_space<vmem>>, %arg9: memref<1x128xf32, #tpu.memory_space<vmem>>, %arg10: memref<1x8x16x128xf32, #tpu.memory_space<vmem>>, %arg11: memref<1x1x2x128xf32, #tpu.memory_space<vmem>>, %arg12: memref<1x1x2x128xf32, #tpu.memory_space<vmem>>) attributes {dimension_semantics = [#tpu.dimension_semantics<parallel>, #tpu.dimension_semantics<parallel>], iteration_bounds = array<i64: 2, 2>, scalar_prefetch = 0 : i64, scratch_operands = 0 : i64, tpu.core_type = #tpu.core_type<tc>, window_params = [{transform_indices = @transform_0, window_bounds = array<i64: 1, 8, 18, 128>}, {transform_indices = @transform_1, window_bounds = array<i64: 1, 2, 18, 128>}, {pipeline_mode = #tpu.pipeline_mode<synchronous>, transform_indices = @transform_2, window_bounds = array<i64: 1, 128>}, {pipeline_mode = #tpu.pipeline_mode<synchronous>, transform_indices = @transform_3, window_bounds = array<i64: 1, 128>}, {pipeline_mode = #tpu.pipeline_mode<synchronous>, transform_indices = @transform_4, window_bounds = array<i64: 3, 384, 128>}, {pipeline_mode = #tpu.pipeline_mode<synchronous>, transform_indices = @transform_5, window_bounds = array<i64: 1, 128>}, {pipeline_mode = #tpu.pipeline_mode<synchronous>, transform_indices = @transform_6, window_bounds = array<i64: 128, 128>}, {pipeline_mode = #tpu.pipeline_mode<synchronous>, transform_indices = @transform_7, window_bounds = array<i64: 1, 128>}, {transform_indices = @transform_8, window_bounds = array<i64: 1, 8, 16, 128>}, {transform_indices = @transform_9, window_bounds = array<i64: 1, 1, 2, 128>}, {transform_indices = @transform_10, window_bounds = array<i64: 1, 1, 2, 128>}]} {
    %c0 = arith.constant 0 : index
    %c0_0 = arith.constant 0 : index
    %c0_1 = arith.constant 0 : index
    %c0_2 = arith.constant 0 : index
    %0 = vector.load %arg2[%c0, %c0_0, %c0_1, %c0_2] : memref<1x8x18x128xf32, #tpu.memory_space<vmem>>, vector<1x8x18x128xf32>
    %c0_3 = arith.constant 0 : index
    %c0_4 = arith.constant 0 : index
    %c0_5 = arith.constant 0 : index
    %c0_6 = arith.constant 0 : index
    %1 = vector.load %arg3[%c0_3, %c0_4, %c0_5, %c0_6] : memref<1x2x18x128xf32, #tpu.memory_space<vmem>>, vector<1x2x18x128xf32>
    %2 = tpu.concatenate %0, %1 in 1 : vector<1x8x18x128xf32>, vector<1x2x18x128xf32> -> vector<1x10x18x128xf32>
    %c0_7 = arith.constant 0 : index
    %c0_8 = arith.constant 0 : index
    %3 = vector.load %arg4[%c0_7, %c0_8] : memref<1x128xf32, #tpu.memory_space<vmem>>, vector<1x128xf32>
    %4 = vector.shape_cast %3 : vector<1x128xf32> to vector<1x1x1x128xf32>
    %5 = vector.broadcast %4 : vector<1x1x1x128xf32> to vector<1x10x18x128xf32>
    %6 = arith.mulf %2, %5 : vector<1x10x18x128xf32>
    %c0_9 = arith.constant 0 : index
    %c0_10 = arith.constant 0 : index
    %7 = vector.load %arg5[%c0_9, %c0_10] : memref<1x128xf32, #tpu.memory_space<vmem>>, vector<1x128xf32>
    %8 = vector.shape_cast %7 : vector<1x128xf32> to vector<1x1x1x128xf32>
    %9 = vector.broadcast %8 : vector<1x1x1x128xf32> to vector<1x10x18x128xf32>
    %10 = arith.addf %6, %9 : vector<1x10x18x128xf32>
    %cst = arith.constant 0.000000e+00 : f32
    %11 = vector.broadcast %cst : f32 to vector<1x10x18x128xf32>
    %12 = arith.maximumf %10, %11 : vector<1x10x18x128xf32>
    %13 = vector.extract_strided_slice %12 {offsets = [0, 0, 0, 0], sizes = [1, 8, 18, 128], strides = [1, 1, 1, 1]} : vector<1x10x18x128xf32> to vector<1x8x18x128xf32>
    %14 = vector.extract_strided_slice %13 {offsets = [0, 0, 0, 0], sizes = [1, 8, 16, 128], strides = [1, 1, 1, 1]} : vector<1x8x18x128xf32> to vector<1x8x16x128xf32>
    %15 = vector.extract_strided_slice %13 {offsets = [0, 0, 1, 0], sizes = [1, 8, 16, 128], strides = [1, 1, 1, 1]} : vector<1x8x18x128xf32> to vector<1x8x16x128xf32>
    %16 = vector.extract_strided_slice %13 {offsets = [0, 0, 2, 0], sizes = [1, 8, 16, 128], strides = [1, 1, 1, 1]} : vector<1x8x18x128xf32> to vector<1x8x16x128xf32>
    %17 = tpu.concatenate %14, %15, %16 in 3 : vector<1x8x16x128xf32>, vector<1x8x16x128xf32>, vector<1x8x16x128xf32> -> vector<1x8x16x384xf32>
    %18 = vector.shape_cast %17 : vector<1x8x16x384xf32> to vector<128x384xf32>
    %c0_11 = arith.constant 0 : index
    %c0_12 = arith.constant 0 : index
    %c0_13 = arith.constant 0 : index
    %19 = vector.load %arg6[%c0_11, %c0_12, %c0_13] : memref<3x384x128xf32, #tpu.memory_space<vmem>>, vector<1x384x128xf32>
    %20 = vector.shape_cast %19 : vector<1x384x128xf32> to vector<384x128xf32>
    %cst_14 = arith.constant dense<0.000000e+00> : vector<128x128xf32>
    %21 = tpu.matmul %18, %20, %cst_14 {dimension_numbers = #tpu.dot_dimension_numbers<[1], [0], [0], [1], [0, 0, 1, 1], [], []>} : vector<128x384xf32>, vector<384x128xf32>, vector<128x128xf32> -> vector<128x128xf32>
    %22 = vector.extract_strided_slice %12 {offsets = [0, 1, 0, 0], sizes = [1, 8, 18, 128], strides = [1, 1, 1, 1]} : vector<1x10x18x128xf32> to vector<1x8x18x128xf32>
    %23 = vector.extract_strided_slice %22 {offsets = [0, 0, 0, 0], sizes = [1, 8, 16, 128], strides = [1, 1, 1, 1]} : vector<1x8x18x128xf32> to vector<1x8x16x128xf32>
    %24 = vector.extract_strided_slice %22 {offsets = [0, 0, 1, 0], sizes = [1, 8, 16, 128], strides = [1, 1, 1, 1]} : vector<1x8x18x128xf32> to vector<1x8x16x128xf32>
    %25 = vector.extract_strided_slice %22 {offsets = [0, 0, 2, 0], sizes = [1, 8, 16, 128], strides = [1, 1, 1, 1]} : vector<1x8x18x128xf32> to vector<1x8x16x128xf32>
    %26 = tpu.concatenate %23, %24, %25 in 3 : vector<1x8x16x128xf32>, vector<1x8x16x128xf32>, vector<1x8x16x128xf32> -> vector<1x8x16x384xf32>
    %27 = vector.shape_cast %26 : vector<1x8x16x384xf32> to vector<128x384xf32>
    %c1 = arith.constant 1 : index
    %c0_15 = arith.constant 0 : index
    %c0_16 = arith.constant 0 : index
    %28 = vector.load %arg6[%c1, %c0_15, %c0_16] : memref<3x384x128xf32, #tpu.memory_space<vmem>>, vector<1x384x128xf32>
    %29 = vector.shape_cast %28 : vector<1x384x128xf32> to vector<384x128xf32>
    %cst_17 = arith.constant dense<0.000000e+00> : vector<128x128xf32>
    %30 = tpu.matmul %27, %29, %cst_17 {dimension_numbers = #tpu.dot_dimension_numbers<[1], [0], [0], [1], [0, 0, 1, 1], [], []>} : vector<128x384xf32>, vector<384x128xf32>, vector<128x128xf32> -> vector<128x128xf32>
    %31 = arith.addf %21, %30 : vector<128x128xf32>
    %32 = vector.extract_strided_slice %12 {offsets = [0, 2, 0, 0], sizes = [1, 8, 18, 128], strides = [1, 1, 1, 1]} : vector<1x10x18x128xf32> to vector<1x8x18x128xf32>
    %33 = vector.extract_strided_slice %32 {offsets = [0, 0, 0, 0], sizes = [1, 8, 16, 128], strides = [1, 1, 1, 1]} : vector<1x8x18x128xf32> to vector<1x8x16x128xf32>
    %34 = vector.extract_strided_slice %32 {offsets = [0, 0, 1, 0], sizes = [1, 8, 16, 128], strides = [1, 1, 1, 1]} : vector<1x8x18x128xf32> to vector<1x8x16x128xf32>
    %35 = vector.extract_strided_slice %32 {offsets = [0, 0, 2, 0], sizes = [1, 8, 16, 128], strides = [1, 1, 1, 1]} : vector<1x8x18x128xf32> to vector<1x8x16x128xf32>
    %36 = tpu.concatenate %33, %34, %35 in 3 : vector<1x8x16x128xf32>, vector<1x8x16x128xf32>, vector<1x8x16x128xf32> -> vector<1x8x16x384xf32>
    %37 = vector.shape_cast %36 : vector<1x8x16x384xf32> to vector<128x384xf32>
    %c2 = arith.constant 2 : index
    %c0_18 = arith.constant 0 : index
    %c0_19 = arith.constant 0 : index
    %38 = vector.load %arg6[%c2, %c0_18, %c0_19] : memref<3x384x128xf32, #tpu.memory_space<vmem>>, vector<1x384x128xf32>
    %39 = vector.shape_cast %38 : vector<1x384x128xf32> to vector<384x128xf32>
    %cst_20 = arith.constant dense<0.000000e+00> : vector<128x128xf32>
    %40 = tpu.matmul %37, %39, %cst_20 {dimension_numbers = #tpu.dot_dimension_numbers<[1], [0], [0], [1], [0, 0, 1, 1], [], []>} : vector<128x384xf32>, vector<384x128xf32>, vector<128x128xf32> -> vector<128x128xf32>
    %41 = arith.addf %31, %40 : vector<128x128xf32>
    %c0_21 = arith.constant 0 : index
    %c0_22 = arith.constant 0 : index
    %42 = vector.load %arg7[%c0_21, %c0_22] : memref<1x128xf32, #tpu.memory_space<vmem>>, vector<1x128xf32>
    %43 = vector.broadcast %42 : vector<1x128xf32> to vector<128x128xf32>
    %44 = arith.addf %41, %43 : vector<128x128xf32>
    %45 = vector.shape_cast %44 : vector<128x128xf32> to vector<1x8x16x128xf32>
    %c0_23 = arith.constant 0 : index
    %c0_24 = arith.constant 0 : index
    %c0_25 = arith.constant 0 : index
    %c0_26 = arith.constant 0 : index
    %46 = vector.load %arg10[%c0_23, %c0_24, %c0_25, %c0_26] : memref<1x8x16x128xf32, #tpu.memory_space<vmem>>, vector<1x8x16x128xf32>
    tpu.vector_store %arg10[%c0_23, %c0_24, %c0_25, %c0_26], %45 {strides = array<i32>} : memref<1x8x16x128xf32, #tpu.memory_space<vmem>>, vector<1x8x16x128xf32>,
    %cst_27 = arith.constant dense<0.000000e+00> : vector<128xf32>
    %47 = vector.multi_reduction <add>, %44, %cst_27 [0] : vector<128x128xf32> to vector<128xf32>
    %48 = vector.shape_cast %47 : vector<128xf32> to vector<1x128xf32>
    %49 = arith.mulf %44, %44 : vector<128x128xf32>
    %cst_28 = arith.constant dense<0.000000e+00> : vector<128xf32>
    %50 = vector.multi_reduction <add>, %49, %cst_28 [0] : vector<128x128xf32> to vector<128xf32>
    %51 = vector.shape_cast %50 : vector<128xf32> to vector<1x128xf32>
    %52 = tpu.concatenate %48, %51 in 0 : vector<1x128xf32>, vector<1x128xf32> -> vector<2x128xf32>
    %53 = vector.shape_cast %52 : vector<2x128xf32> to vector<1x1x2x128xf32>
    %c0_29 = arith.constant 0 : index
    %c0_30 = arith.constant 0 : index
    %c0_31 = arith.constant 0 : index
    %c0_32 = arith.constant 0 : index
    %54 = vector.load %arg11[%c0_29, %c0_30, %c0_31, %c0_32] : memref<1x1x2x128xf32, #tpu.memory_space<vmem>>, vector<1x1x2x128xf32>
    tpu.vector_store %arg11[%c0_29, %c0_30, %c0_31, %c0_32], %53 {strides = array<i32>} : memref<1x1x2x128xf32, #tpu.memory_space<vmem>>, vector<1x1x2x128xf32>,
    %55 = vector.extract_strided_slice %2 {offsets = [0, 1, 1, 0], sizes = [1, 8, 16, 128], strides = [1, 1, 1, 1]} : vector<1x10x18x128xf32> to vector<1x8x16x128xf32>
    %56 = vector.shape_cast %55 : vector<1x8x16x128xf32> to vector<128x128xf32>
    %c0_33 = arith.constant 0 : index
    %c0_34 = arith.constant 0 : index
    %57 = vector.load %arg8[%c0_33, %c0_34] : memref<128x128xf32, #tpu.memory_space<vmem>>, vector<128x128xf32>
    %cst_35 = arith.constant dense<0.000000e+00> : vector<128x128xf32>
    %58 = tpu.matmul %56, %57, %cst_35 {dimension_numbers = #tpu.dot_dimension_numbers<[1], [0], [0], [1], [0, 0, 1, 1], [], []>} : vector<128x128xf32>, vector<128x128xf32>, vector<128x128xf32> -> vector<128x128xf32>
    %c0_36 = arith.constant 0 : index
    %c0_37 = arith.constant 0 : index
    %59 = vector.load %arg9[%c0_36, %c0_37] : memref<1x128xf32, #tpu.memory_space<vmem>>, vector<1x128xf32>
    %60 = vector.broadcast %59 : vector<1x128xf32> to vector<128x128xf32>
    %61 = arith.addf %58, %60 : vector<128x128xf32>
    %cst_38 = arith.constant dense<0.000000e+00> : vector<128xf32>
    %62 = vector.multi_reduction <add>, %61, %cst_38 [0] : vector<128x128xf32> to vector<128xf32>
    %63 = vector.shape_cast %62 : vector<128xf32> to vector<1x128xf32>
    %64 = arith.mulf %61, %61 : vector<128x128xf32>
    %cst_39 = arith.constant dense<0.000000e+00> : vector<128xf32>
    %65 = vector.multi_reduction <add>, %64, %cst_39 [0] : vector<128x128xf32> to vector<128xf32>
    %66 = vector.shape_cast %65 : vector<128xf32> to vector<1x128xf32>
    %67 = tpu.concatenate %63, %66 in 0 : vector<1x128xf32>, vector<1x128xf32> -> vector<2x128xf32>
    %68 = vector.shape_cast %67 : vector<2x128xf32> to vector<1x1x2x128xf32>
    %c0_40 = arith.constant 0 : index
    %c0_41 = arith.constant 0 : index
    %c0_42 = arith.constant 0 : index
    %c0_43 = arith.constant 0 : index
    %69 = vector.load %arg12[%c0_40, %c0_41, %c0_42, %c0_43] : memref<1x1x2x128xf32, #tpu.memory_space<vmem>>, vector<1x1x2x128xf32>
    tpu.vector_store %arg12[%c0_40, %c0_41, %c0_42, %c0_43], %68 {strides = array<i32>} : memref<1x1x2x128xf32, #tpu.memory_space<vmem>>, vector<1x1x2x128xf32>,
    return
  }
  func.func @transform_0(%arg0: i32, %arg1: i32) -> (i32, i32, i32, i32) {
    %c0_i32 = arith.constant 0 : i32
    %c0_i32_0 = arith.constant 0 : i32
    %c0_i32_1 = arith.constant 0 : i32
    return %arg0, %arg1, %c0_i32, %c0_i32_0 : i32, i32, i32, i32
  }
  func.func @transform_1(%arg0: i32, %arg1: i32) -> (i32, i32, i32, i32) {
    %c0_i32 = arith.constant 0 : i32
    %c0_i32_0 = arith.constant 0 : i32
    %c0_i32_1 = arith.constant 0 : i32
    return %arg0, %arg1, %c0_i32, %c0_i32_0 : i32, i32, i32, i32
  }
  func.func @transform_2(%arg0: i32, %arg1: i32) -> (i32, i32) {
    %c0_i32 = arith.constant 0 : i32
    %c0_i32_0 = arith.constant 0 : i32
    %c0_i32_1 = arith.constant 0 : i32
    return %c0_i32, %c0_i32_0 : i32, i32
  }
  func.func @transform_3(%arg0: i32, %arg1: i32) -> (i32, i32) {
    %c0_i32 = arith.constant 0 : i32
    %c0_i32_0 = arith.constant 0 : i32
    %c0_i32_1 = arith.constant 0 : i32
    return %c0_i32, %c0_i32_0 : i32, i32
  }
  func.func @transform_4(%arg0: i32, %arg1: i32) -> (i32, i32, i32) {
    %c0_i32 = arith.constant 0 : i32
    %c0_i32_0 = arith.constant 0 : i32
    %c0_i32_1 = arith.constant 0 : i32
    %c0_i32_2 = arith.constant 0 : i32
    return %c0_i32, %c0_i32_0, %c0_i32_1 : i32, i32, i32
  }
  func.func @transform_5(%arg0: i32, %arg1: i32) -> (i32, i32) {
    %c0_i32 = arith.constant 0 : i32
    %c0_i32_0 = arith.constant 0 : i32
    %c0_i32_1 = arith.constant 0 : i32
    return %c0_i32, %c0_i32_0 : i32, i32
  }
  func.func @transform_6(%arg0: i32, %arg1: i32) -> (i32, i32) {
    %c0_i32 = arith.constant 0 : i32
    %c0_i32_0 = arith.constant 0 : i32
    %c0_i32_1 = arith.constant 0 : i32
    return %c0_i32, %c0_i32_0 : i32, i32
  }
  func.func @transform_7(%arg0: i32, %arg1: i32) -> (i32, i32) {
    %c0_i32 = arith.constant 0 : i32
    %c0_i32_0 = arith.constant 0 : i32
    %c0_i32_1 = arith.constant 0 : i32
    return %c0_i32, %c0_i32_0 : i32, i32
  }
  func.func @transform_8(%arg0: i32, %arg1: i32) -> (i32, i32, i32, i32) {
    %c0_i32 = arith.constant 0 : i32
    %c0_i32_0 = arith.constant 0 : i32
    %c0_i32_1 = arith.constant 0 : i32
    return %arg0, %arg1, %c0_i32, %c0_i32_0 : i32, i32, i32, i32
  }
  func.func @transform_9(%arg0: i32, %arg1: i32) -> (i32, i32, i32, i32) {
    %c0_i32 = arith.constant 0 : i32
    %c0_i32_0 = arith.constant 0 : i32
    %c0_i32_1 = arith.constant 0 : i32
    return %arg0, %arg1, %c0_i32, %c0_i32_0 : i32, i32, i32, i32
  }
  func.func @transform_10(%arg0: i32, %arg1: i32) -> (i32, i32, i32, i32) {
    %c0_i32 = arith.constant 0 : i32
    %c0_i32_0 = arith.constant 0 : i32
    %c0_i32_1 = arith.constant 0 : i32
    return %arg0, %arg1, %c0_i32, %c0_i32_0 : i32, i32, i32, i32
  }
}

module attributes {stable_mosaic.version = 11 : i64} {
  func.func @kernel(%arg0: i32, %arg1: i32, %arg2: memref<1x8x18x128xf32, #tpu.memory_space<vmem>>, %arg3: memref<1x2x18x128xf32, #tpu.memory_space<vmem>>, %arg4: memref<3x384x128xf32, #tpu.memory_space<vmem>>, %arg5: memref<1x128xf32, #tpu.memory_space<vmem>>, %arg6: memref<1x8x16x128xf32, #tpu.memory_space<vmem>>, %arg7: memref<128x128xf32, #tpu.memory_space<vmem>>, %arg8: memref<1x128xf32, #tpu.memory_space<vmem>>, %arg9: memref<1x8x16x128xf32, #tpu.memory_space<vmem>>) attributes {dimension_semantics = [#tpu.dimension_semantics<parallel>, #tpu.dimension_semantics<parallel>], iteration_bounds = array<i64: 2, 2>, scalar_prefetch = 0 : i64, scratch_operands = 0 : i64, tpu.core_type = #tpu.core_type<tc>, window_params = [{transform_indices = @transform_0, window_bounds = array<i64: 1, 8, 18, 128>}, {transform_indices = @transform_1, window_bounds = array<i64: 1, 2, 18, 128>}, {pipeline_mode = #tpu.pipeline_mode<synchronous>, transform_indices = @transform_2, window_bounds = array<i64: 3, 384, 128>}, {pipeline_mode = #tpu.pipeline_mode<synchronous>, transform_indices = @transform_3, window_bounds = array<i64: 1, 128>}, {transform_indices = @transform_4, window_bounds = array<i64: 1, 8, 16, 128>}, {pipeline_mode = #tpu.pipeline_mode<synchronous>, transform_indices = @transform_5, window_bounds = array<i64: 128, 128>}, {pipeline_mode = #tpu.pipeline_mode<synchronous>, transform_indices = @transform_6, window_bounds = array<i64: 1, 128>}, {transform_indices = @transform_7, window_bounds = array<i64: 1, 8, 16, 128>}]} {
    %c0 = arith.constant 0 : index
    %c0_0 = arith.constant 0 : index
    %c0_1 = arith.constant 0 : index
    %c0_2 = arith.constant 0 : index
    %0 = vector.load %arg2[%c0, %c0_0, %c0_1, %c0_2] : memref<1x8x18x128xf32, #tpu.memory_space<vmem>>, vector<1x8x18x128xf32>
    %c0_3 = arith.constant 0 : index
    %c0_4 = arith.constant 0 : index
    %c0_5 = arith.constant 0 : index
    %c0_6 = arith.constant 0 : index
    %1 = vector.load %arg3[%c0_3, %c0_4, %c0_5, %c0_6] : memref<1x2x18x128xf32, #tpu.memory_space<vmem>>, vector<1x2x18x128xf32>
    %2 = tpu.concatenate %0, %1 in 1 : vector<1x8x18x128xf32>, vector<1x2x18x128xf32> -> vector<1x10x18x128xf32>
    %3 = vector.extract_strided_slice %2 {offsets = [0, 0, 0, 0], sizes = [1, 8, 18, 128], strides = [1, 1, 1, 1]} : vector<1x10x18x128xf32> to vector<1x8x18x128xf32>
    %4 = vector.extract_strided_slice %3 {offsets = [0, 0, 0, 0], sizes = [1, 8, 16, 128], strides = [1, 1, 1, 1]} : vector<1x8x18x128xf32> to vector<1x8x16x128xf32>
    %5 = vector.extract_strided_slice %3 {offsets = [0, 0, 1, 0], sizes = [1, 8, 16, 128], strides = [1, 1, 1, 1]} : vector<1x8x18x128xf32> to vector<1x8x16x128xf32>
    %6 = vector.extract_strided_slice %3 {offsets = [0, 0, 2, 0], sizes = [1, 8, 16, 128], strides = [1, 1, 1, 1]} : vector<1x8x18x128xf32> to vector<1x8x16x128xf32>
    %7 = tpu.concatenate %4, %5, %6 in 3 : vector<1x8x16x128xf32>, vector<1x8x16x128xf32>, vector<1x8x16x128xf32> -> vector<1x8x16x384xf32>
    %8 = vector.shape_cast %7 : vector<1x8x16x384xf32> to vector<128x384xf32>
    %c0_7 = arith.constant 0 : index
    %c0_8 = arith.constant 0 : index
    %c0_9 = arith.constant 0 : index
    %9 = vector.load %arg4[%c0_7, %c0_8, %c0_9] : memref<3x384x128xf32, #tpu.memory_space<vmem>>, vector<1x384x128xf32>
    %10 = vector.shape_cast %9 : vector<1x384x128xf32> to vector<384x128xf32>
    %cst = arith.constant dense<0.000000e+00> : vector<128x128xf32>
    %11 = tpu.matmul %8, %10, %cst {dimension_numbers = #tpu.dot_dimension_numbers<[1], [0], [0], [1], [0, 0, 1, 1], [], []>} : vector<128x384xf32>, vector<384x128xf32>, vector<128x128xf32> -> vector<128x128xf32>
    %12 = vector.extract_strided_slice %2 {offsets = [0, 1, 0, 0], sizes = [1, 8, 18, 128], strides = [1, 1, 1, 1]} : vector<1x10x18x128xf32> to vector<1x8x18x128xf32>
    %13 = vector.extract_strided_slice %12 {offsets = [0, 0, 0, 0], sizes = [1, 8, 16, 128], strides = [1, 1, 1, 1]} : vector<1x8x18x128xf32> to vector<1x8x16x128xf32>
    %14 = vector.extract_strided_slice %12 {offsets = [0, 0, 1, 0], sizes = [1, 8, 16, 128], strides = [1, 1, 1, 1]} : vector<1x8x18x128xf32> to vector<1x8x16x128xf32>
    %15 = vector.extract_strided_slice %12 {offsets = [0, 0, 2, 0], sizes = [1, 8, 16, 128], strides = [1, 1, 1, 1]} : vector<1x8x18x128xf32> to vector<1x8x16x128xf32>
    %16 = tpu.concatenate %13, %14, %15 in 3 : vector<1x8x16x128xf32>, vector<1x8x16x128xf32>, vector<1x8x16x128xf32> -> vector<1x8x16x384xf32>
    %17 = vector.shape_cast %16 : vector<1x8x16x384xf32> to vector<128x384xf32>
    %c1 = arith.constant 1 : index
    %c0_10 = arith.constant 0 : index
    %c0_11 = arith.constant 0 : index
    %18 = vector.load %arg4[%c1, %c0_10, %c0_11] : memref<3x384x128xf32, #tpu.memory_space<vmem>>, vector<1x384x128xf32>
    %19 = vector.shape_cast %18 : vector<1x384x128xf32> to vector<384x128xf32>
    %cst_12 = arith.constant dense<0.000000e+00> : vector<128x128xf32>
    %20 = tpu.matmul %17, %19, %cst_12 {dimension_numbers = #tpu.dot_dimension_numbers<[1], [0], [0], [1], [0, 0, 1, 1], [], []>} : vector<128x384xf32>, vector<384x128xf32>, vector<128x128xf32> -> vector<128x128xf32>
    %21 = arith.addf %11, %20 : vector<128x128xf32>
    %22 = vector.extract_strided_slice %2 {offsets = [0, 2, 0, 0], sizes = [1, 8, 18, 128], strides = [1, 1, 1, 1]} : vector<1x10x18x128xf32> to vector<1x8x18x128xf32>
    %23 = vector.extract_strided_slice %22 {offsets = [0, 0, 0, 0], sizes = [1, 8, 16, 128], strides = [1, 1, 1, 1]} : vector<1x8x18x128xf32> to vector<1x8x16x128xf32>
    %24 = vector.extract_strided_slice %22 {offsets = [0, 0, 1, 0], sizes = [1, 8, 16, 128], strides = [1, 1, 1, 1]} : vector<1x8x18x128xf32> to vector<1x8x16x128xf32>
    %25 = vector.extract_strided_slice %22 {offsets = [0, 0, 2, 0], sizes = [1, 8, 16, 128], strides = [1, 1, 1, 1]} : vector<1x8x18x128xf32> to vector<1x8x16x128xf32>
    %26 = tpu.concatenate %23, %24, %25 in 3 : vector<1x8x16x128xf32>, vector<1x8x16x128xf32>, vector<1x8x16x128xf32> -> vector<1x8x16x384xf32>
    %27 = vector.shape_cast %26 : vector<1x8x16x384xf32> to vector<128x384xf32>
    %c2 = arith.constant 2 : index
    %c0_13 = arith.constant 0 : index
    %c0_14 = arith.constant 0 : index
    %28 = vector.load %arg4[%c2, %c0_13, %c0_14] : memref<3x384x128xf32, #tpu.memory_space<vmem>>, vector<1x384x128xf32>
    %29 = vector.shape_cast %28 : vector<1x384x128xf32> to vector<384x128xf32>
    %cst_15 = arith.constant dense<0.000000e+00> : vector<128x128xf32>
    %30 = tpu.matmul %27, %29, %cst_15 {dimension_numbers = #tpu.dot_dimension_numbers<[1], [0], [0], [1], [0, 0, 1, 1], [], []>} : vector<128x384xf32>, vector<384x128xf32>, vector<128x128xf32> -> vector<128x128xf32>
    %31 = arith.addf %21, %30 : vector<128x128xf32>
    %c0_16 = arith.constant 0 : index
    %c0_17 = arith.constant 0 : index
    %32 = vector.load %arg5[%c0_16, %c0_17] : memref<1x128xf32, #tpu.memory_space<vmem>>, vector<1x128xf32>
    %33 = vector.broadcast %32 : vector<1x128xf32> to vector<128x128xf32>
    %34 = arith.addf %31, %33 : vector<128x128xf32>
    %c0_18 = arith.constant 0 : index
    %c0_19 = arith.constant 0 : index
    %c0_20 = arith.constant 0 : index
    %c0_21 = arith.constant 0 : index
    %35 = vector.load %arg6[%c0_18, %c0_19, %c0_20, %c0_21] : memref<1x8x16x128xf32, #tpu.memory_space<vmem>>, vector<1x8x16x128xf32>
    %36 = vector.shape_cast %35 : vector<1x8x16x128xf32> to vector<128x128xf32>
    %c0_22 = arith.constant 0 : index
    %c0_23 = arith.constant 0 : index
    %37 = vector.load %arg7[%c0_22, %c0_23] : memref<128x128xf32, #tpu.memory_space<vmem>>, vector<128x128xf32>
    %cst_24 = arith.constant dense<0.000000e+00> : vector<128x128xf32>
    %38 = tpu.matmul %36, %37, %cst_24 {dimension_numbers = #tpu.dot_dimension_numbers<[1], [0], [0], [1], [0, 0, 1, 1], [], []>} : vector<128x128xf32>, vector<128x128xf32>, vector<128x128xf32> -> vector<128x128xf32>
    %c0_25 = arith.constant 0 : index
    %c0_26 = arith.constant 0 : index
    %39 = vector.load %arg8[%c0_25, %c0_26] : memref<1x128xf32, #tpu.memory_space<vmem>>, vector<1x128xf32>
    %40 = vector.broadcast %39 : vector<1x128xf32> to vector<128x128xf32>
    %41 = arith.addf %38, %40 : vector<128x128xf32>
    %42 = arith.addf %34, %41 : vector<128x128xf32>
    %43 = vector.shape_cast %42 : vector<128x128xf32> to vector<1x8x16x128xf32>
    %c0_27 = arith.constant 0 : index
    %c0_28 = arith.constant 0 : index
    %c0_29 = arith.constant 0 : index
    %c0_30 = arith.constant 0 : index
    %44 = vector.load %arg9[%c0_27, %c0_28, %c0_29, %c0_30] : memref<1x8x16x128xf32, #tpu.memory_space<vmem>>, vector<1x8x16x128xf32>
    tpu.vector_store %arg9[%c0_27, %c0_28, %c0_29, %c0_30], %43 {strides = array<i32>} : memref<1x8x16x128xf32, #tpu.memory_space<vmem>>, vector<1x8x16x128xf32>,
    return
  }
  func.func @transform_0(%arg0: i32, %arg1: i32) -> (i32, i32, i32, i32) {
    %c0_i32 = arith.constant 0 : i32
    %c0_i32_0 = arith.constant 0 : i32
    %c0_i32_1 = arith.constant 0 : i32
    return %arg0, %arg1, %c0_i32, %c0_i32_0 : i32, i32, i32, i32
  }
  func.func @transform_1(%arg0: i32, %arg1: i32) -> (i32, i32, i32, i32) {
    %c0_i32 = arith.constant 0 : i32
    %c0_i32_0 = arith.constant 0 : i32
    %c0_i32_1 = arith.constant 0 : i32
    return %arg0, %arg1, %c0_i32, %c0_i32_0 : i32, i32, i32, i32
  }
  func.func @transform_2(%arg0: i32, %arg1: i32) -> (i32, i32, i32) {
    %c0_i32 = arith.constant 0 : i32
    %c0_i32_0 = arith.constant 0 : i32
    %c0_i32_1 = arith.constant 0 : i32
    %c0_i32_2 = arith.constant 0 : i32
    return %c0_i32, %c0_i32_0, %c0_i32_1 : i32, i32, i32
  }
  func.func @transform_3(%arg0: i32, %arg1: i32) -> (i32, i32) {
    %c0_i32 = arith.constant 0 : i32
    %c0_i32_0 = arith.constant 0 : i32
    %c0_i32_1 = arith.constant 0 : i32
    return %c0_i32, %c0_i32_0 : i32, i32
  }
  func.func @transform_4(%arg0: i32, %arg1: i32) -> (i32, i32, i32, i32) {
    %c0_i32 = arith.constant 0 : i32
    %c0_i32_0 = arith.constant 0 : i32
    %c0_i32_1 = arith.constant 0 : i32
    return %arg0, %arg1, %c0_i32, %c0_i32_0 : i32, i32, i32, i32
  }
  func.func @transform_5(%arg0: i32, %arg1: i32) -> (i32, i32) {
    %c0_i32 = arith.constant 0 : i32
    %c0_i32_0 = arith.constant 0 : i32
    %c0_i32_1 = arith.constant 0 : i32
    return %c0_i32, %c0_i32_0 : i32, i32
  }
  func.func @transform_6(%arg0: i32, %arg1: i32) -> (i32, i32) {
    %c0_i32 = arith.constant 0 : i32
    %c0_i32_0 = arith.constant 0 : i32
    %c0_i32_1 = arith.constant 0 : i32
    return %c0_i32, %c0_i32_0 : i32, i32
  }
  func.func @transform_7(%arg0: i32, %arg1: i32) -> (i32, i32, i32, i32) {
    %c0_i32 = arith.constant 0 : i32
    %c0_i32_0 = arith.constant 0 : i32
    %c0_i32_1 = arith.constant 0 : i32
    return %arg0, %arg1, %c0_i32, %c0_i32_0 : i32, i32, i32, i32
  }
}

</mosaic_0001>

<llo_original>
// kernel: block_forward.3
$region0: #{block_forward.3}
  #allocation0 [shape = 'u32[]', space=smem, size = 0x4, offset = 0x4, fixed_abs, tag = 'smem constant byte address 0x4 - core index']
  #allocation1 [shape = 'u32[144,128]{1,0:T(1,128)}', space=vmem, size = 0x12000, scoped, tag = 'internal scratch']
  %s0 = inlined_call_operand.vmem [shape: f32[512,128], index: 0, kind: input, shape index: {}]
  %s1 = inlined_call_operand.vmem [shape: f32[1,2,128], index: 1, kind: output, shape index: {}]
  %s2 = sld [smem:[#allocation0]]
  $region14: #{block_forward.3} parent=0
    _
  %s4 = ssub.s32 1, %s2
  %s5 = scalar_select 0, %s4, %s2
  // Predicated region
  $region2: #{block_forward.3} parent=0 // pred_check
    _
  $region3: #{block_forward.3} parent=0 // pred_check_branch
    %7 = sbr.rel (0) target = $region5
  $region4: #{block_forward.3} parent=0 // pred_region
    _
  $region5: #{block_forward.3} parent=0 // pred_fallthru
    _
  %v8 = vld [vmem:[%s0] sm:$0xff]
  %v9 = vld [vmem:[%s0 + $0x8] sm:$0xff]
  %v10 = vld [vmem:[%s0 + $0x10] sm:$0xff]
  %v11 = vld [vmem:[%s0 + $0x18] sm:$0xff]
  %v12 = vld [vmem:[%s0 + $0x20] sm:$0xff]
  %v13 = vld [vmem:[%s0 + $0x28] sm:$0xff]
  %v14 = vld [vmem:[%s0 + $0x30] sm:$0xff]
  %v15 = vld [vmem:[%s0 + $0x38] sm:$0xff]
  %v16 = vld [vmem:[%s0 + $0x40] sm:$0xff]
  %v17 = vld [vmem:[%s0 + $0x48] sm:$0xff]
  %v18 = vld [vmem:[%s0 + $0x50] sm:$0xff]
  %v19 = vld [vmem:[%s0 + $0x58] sm:$0xff]
  %v20 = vld [vmem:[%s0 + $0x60] sm:$0xff]
  %v21 = vld [vmem:[%s0 + $0x68] sm:$0xff]
  %v22 = vld [vmem:[%s0 + $0x70] sm:$0xff]
  %v23 = vld [vmem:[%s0 + $0x78] sm:$0xff]
  %v24 = vld [vmem:[%s0 + $0x80] sm:$0xff]
  %v25 = vld [vmem:[%s0 + $0x88] sm:$0xff]
  %v26 = vld [vmem:[%s0 + $0x90] sm:$0xff]
  %v27 = vld [vmem:[%s0 + $0x98] sm:$0xff]
  %v28 = vld [vmem:[%s0 + $0xa0] sm:$0xff]
  %v29 = vld [vmem:[%s0 + $0xa8] sm:$0xff]
  %v30 = vld [vmem:[%s0 + $0xb0] sm:$0xff]
  %v31 = vld [vmem:[%s0 + $0xb8] sm:$0xff]
  %v32 = vld [vmem:[%s0 + $0xc0] sm:$0xff]
  %v33 = vld [vmem:[%s0 + $0xc8] sm:$0xff]
  %v34 = vld [vmem:[%s0 + $0xd0] sm:$0xff]
  %v35 = vld [vmem:[%s0 + $0xd8] sm:$0xff]
  %v36 = vld [vmem:[%s0 + $0xe0] sm:$0xff]
  %v37 = vld [vmem:[%s0 + $0xe8] sm:$0xff]
  %v38 = vld [vmem:[%s0 + $0xf0] sm:$0xff]
  %v39 = vld [vmem:[%s0 + $0xf8] sm:$0xff]
  %v40 = vld [vmem:[%s0 + $0x100] sm:$0xff]
  %v41 = vld [vmem:[%s0 + $0x108] sm:$0xff]
  %v42 = vld [vmem:[%s0 + $0x110] sm:$0xff]
  %v43 = vld [vmem:[%s0 + $0x118] sm:$0xff]
  %v44 = vld [vmem:[%s0 + $0x120] sm:$0xff]
  %v45 = vld [vmem:[%s0 + $0x128] sm:$0xff]
  %v46 = vld [vmem:[%s0 + $0x130] sm:$0xff]
  %v47 = vld [vmem:[%s0 + $0x138] sm:$0xff]
  %v48 = vld [vmem:[%s0 + $0x140] sm:$0xff]
  %v49 = vld [vmem:[%s0 + $0x148] sm:$0xff]
  %v50 = vld [vmem:[%s0 + $0x150] sm:$0xff]
  %v51 = vld [vmem:[%s0 + $0x158] sm:$0xff]
  %v52 = vld [vmem:[%s0 + $0x160] sm:$0xff]
  %v53 = vld [vmem:[%s0 + $0x168] sm:$0xff]
  %v54 = vld [vmem:[%s0 + $0x170] sm:$0xff]
  %v55 = vld [vmem:[%s0 + $0x178] sm:$0xff]
  %v56 = vld [vmem:[%s0 + $0x180] sm:$0xff]
  %v57 = vld [vmem:[%s0 + $0x188] sm:$0xff]
  %v58 = vld [vmem:[%s0 + $0x190] sm:$0xff]
  %v59 = vld [vmem:[%s0 + $0x198] sm:$0xff]
  %v60 = vld [vmem:[%s0 + $0x1a0] sm:$0xff]
  %v61 = vld [vmem:[%s0 + $0x1a8] sm:$0xff]
  %v62 = vld [vmem:[%s0 + $0x1b0] sm:$0xff]
  %v63 = vld [vmem:[%s0 + $0x1b8] sm:$0xff]
  %v64 = vld [vmem:[%s0 + $0x1c0] sm:$0xff]
  %v65 = vld [vmem:[%s0 + $0x1c8] sm:$0xff]
  %v66 = vld [vmem:[%s0 + $0x1d0] sm:$0xff]
  %v67 = vld [vmem:[%s0 + $0x1d8] sm:$0xff]
  %v68 = vld [vmem:[%s0 + $0x1e0] sm:$0xff]
  %v69 = vld [vmem:[%s0 + $0x1e8] sm:$0xff]
  %v70 = vld [vmem:[%s0 + $0x1f0] sm:$0xff]
  %v71 = vld [vmem:[%s0 + $0x1f8] sm:$0xff]
  %v72 = vadd.f32 %v8, %v9
  %v73 = vadd.f32 %v72, %v10
  %v74 = vadd.f32 %v73, %v11
  %v75 = vadd.f32 %v74, %v12
  %v76 = vadd.f32 %v75, %v13
  %v77 = vadd.f32 %v76, %v14
  %v78 = vadd.f32 %v77, %v15
  %v79 = vadd.f32 %v78, %v16
  %v80 = vadd.f32 %v79, %v17
  %v81 = vadd.f32 %v80, %v18
  %v82 = vadd.f32 %v81, %v19
  %v83 = vadd.f32 %v82, %v20
  %v84 = vadd.f32 %v83, %v21
  %v85 = vadd.f32 %v84, %v22
  %v86 = vadd.f32 %v85, %v23
  %v87 = vadd.f32 %v86, %v24
  %v88 = vadd.f32 %v87, %v25
  %v89 = vadd.f32 %v88, %v26
  %v90 = vadd.f32 %v89, %v27
  %v91 = vadd.f32 %v90, %v28
  %v92 = vadd.f32 %v91, %v29
  %v93 = vadd.f32 %v92, %v30
  %v94 = vadd.f32 %v93, %v31
  %v95 = vadd.f32 %v94, %v32
  %v96 = vadd.f32 %v95, %v33
  %v97 = vadd.f32 %v96, %v34
  %v98 = vadd.f32 %v97, %v35
  %v99 = vadd.f32 %v98, %v36
  %v100 = vadd.f32 %v99, %v37
  %v101 = vadd.f32 %v100, %v38
  %v102 = vadd.f32 %v101, %v39
  %v103 = vadd.f32 %v102, %v40
  %v104 = vadd.f32 %v103, %v41
  %v105 = vadd.f32 %v104, %v42
  %v106 = vadd.f32 %v105, %v43
  %v107 = vadd.f32 %v106, %v44
  %v108 = vadd.f32 %v107, %v45
  %v109 = vadd.f32 %v108, %v46
  %v110 = vadd.f32 %v109, %v47
  %v111 = vadd.f32 %v110, %v48
  %v112 = vadd.f32 %v111, %v49
  %v113 = vadd.f32 %v112, %v50
  %v114 = vadd.f32 %v113, %v51
  %v115 = vadd.f32 %v114, %v52
  %v116 = vadd.f32 %v115, %v53
  %v117 = vadd.f32 %v116, %v54
  %v118 = vadd.f32 %v117, %v55
  %v119 = vadd.f32 %v118, %v56
  %v120 = vadd.f32 %v119, %v57
  %v121 = vadd.f32 %v120, %v58
  %v122 = vadd.f32 %v121, %v59
  %v123 = vadd.f32 %v122, %v60
  %v124 = vadd.f32 %v123, %v61
  %v125 = vadd.f32 %v124, %v62
  %v126 = vadd.f32 %v125, %v63
  %v127 = vadd.f32 %v126, %v64
  %v128 = vadd.f32 %v127, %v65
  %v129 = vadd.f32 %v128, %v66
  %v130 = vadd.f32 %v129, %v67
  %v131 = vadd.f32 %v130, %v68
  %v132 = vadd.f32 %v131, %v69
  %v133 = vadd.f32 %v132, %v70
  %v134 = vadd.f32 %v133, %v71
  %v135 = vrot.slane %v134, 4
  %v136 = vadd.f32 %v134, %v135
  %v137 = vrot.slane %v136, 2
  %v138 = vadd.f32 %v136, %v137
  %v139 = vrot.slane %v138, 1
  %v140 = vadd.f32 %v138, %v139
  %v141 = vmul.f32 %v8, %v8
  %v142 = vmul.f32 %v9, %v9
  %v143 = vmul.f32 %v10, %v10
  %v144 = vmul.f32 %v11, %v11
  %v145 = vmul.f32 %v12, %v12
  %v146 = vmul.f32 %v13, %v13
  %v147 = vmul.f32 %v14, %v14
  %v148 = vmul.f32 %v15, %v15
  %v149 = vmul.f32 %v16, %v16
  %v150 = vmul.f32 %v17, %v17
  %v151 = vmul.f32 %v18, %v18
  %v152 = vmul.f32 %v19, %v19
  %v153 = vmul.f32 %v20, %v20
  %v154 = vmul.f32 %v21, %v21
  %v155 = vmul.f32 %v22, %v22
  %v156 = vmul.f32 %v23, %v23
  %v157 = vmul.f32 %v24, %v24
  %v158 = vmul.f32 %v25, %v25
  %v159 = vmul.f32 %v26, %v26
  %v160 = vmul.f32 %v27, %v27
  %v161 = vmul.f32 %v28, %v28
  %v162 = vmul.f32 %v29, %v29
  %v163 = vmul.f32 %v30, %v30
  %v164 = vmul.f32 %v31, %v31
  %v165 = vmul.f32 %v32, %v32
  %v166 = vmul.f32 %v33, %v33
  %v167 = vmul.f32 %v34, %v34
  %v168 = vmul.f32 %v35, %v35
  %v169 = vmul.f32 %v36, %v36
  %v170 = vmul.f32 %v37, %v37
  %v171 = vmul.f32 %v38, %v38
  %v172 = vmul.f32 %v39, %v39
  %v173 = vmul.f32 %v40, %v40
  %v174 = vmul.f32 %v41, %v41
  %v175 = vmul.f32 %v42, %v42
  %v176 = vmul.f32 %v43, %v43
  %v177 = vmul.f32 %v44, %v44
  %v178 = vmul.f32 %v45, %v45
  %v179 = vmul.f32 %v46, %v46
  %v180 = vmul.f32 %v47, %v47
  %v181 = vmul.f32 %v48, %v48
  %v182 = vmul.f32 %v49, %v49
  %v183 = vmul.f32 %v50, %v50
  %v184 = vmul.f32 %v51, %v51
  %v185 = vmul.f32 %v52, %v52
  %v186 = vmul.f32 %v53, %v53
  %v187 = vmul.f32 %v54, %v54
  %v188 = vmul.f32 %v55, %v55
  %v189 = vmul.f32 %v56, %v56
  %v190 = vmul.f32 %v57, %v57
  %v191 = vmul.f32 %v58, %v58
  %v192 = vmul.f32 %v59, %v59
  %v193 = vmul.f32 %v60, %v60
  %v194 = vmul.f32 %v61, %v61
  %v195 = vmul.f32 %v62, %v62
  %v196 = vmul.f32 %v63, %v63
  %v197 = vmul.f32 %v64, %v64
  %v198 = vmul.f32 %v65, %v65
  %v199 = vmul.f32 %v66, %v66
  %v200 = vmul.f32 %v67, %v67
  %v201 = vmul.f32 %v68, %v68
  %v202 = vmul.f32 %v69, %v69
  %v203 = vmul.f32 %v70, %v70
  %v204 = vmul.f32 %v71, %v71
  %v205 = vadd.f32 %v141, %v142
  %v206 = vadd.f32 %v205, %v143
  %v207 = vadd.f32 %v206, %v144
  %v208 = vadd.f32 %v207, %v145
  %v209 = vadd.f32 %v208, %v146
  %v210 = vadd.f32 %v209, %v147
  %v211 = vadd.f32 %v210, %v148
  %v212 = vadd.f32 %v211, %v149
  %v213 = vadd.f32 %v212, %v150
  %v214 = vadd.f32 %v213, %v151
  %v215 = vadd.f32 %v214, %v152
  %v216 = vadd.f32 %v215, %v153
  %v217 = vadd.f32 %v216, %v154
  %v218 = vadd.f32 %v217, %v155
  %v219 = vadd.f32 %v218, %v156
  %v220 = vadd.f32 %v219, %v157
  %v221 = vadd.f32 %v220, %v158
  %v222 = vadd.f32 %v221, %v159
  %v223 = vadd.f32 %v222, %v160
  %v224 = vadd.f32 %v223, %v161
  %v225 = vadd.f32 %v224, %v162
  %v226 = vadd.f32 %v225, %v163
  %v227 = vadd.f32 %v226, %v164
  %v228 = vadd.f32 %v227, %v165
  %v229 = vadd.f32 %v228, %v166
  %v230 = vadd.f32 %v229, %v167
  %v231 = vadd.f32 %v230, %v168
  %v232 = vadd.f32 %v231, %v169
  %v233 = vadd.f32 %v232, %v170
  %v234 = vadd.f32 %v233, %v171
  %v235 = vadd.f32 %v234, %v172
  %v236 = vadd.f32 %v235, %v173
  %v237 = vadd.f32 %v236, %v174
  %v238 = vadd.f32 %v237, %v175
  %v239 = vadd.f32 %v238, %v176
  %v240 = vadd.f32 %v239, %v177
  %v241 = vadd.f32 %v240, %v178
  %v242 = vadd.f32 %v241, %v179
  %v243 = vadd.f32 %v242, %v180
  %v244 = vadd.f32 %v243, %v181
  %v245 = vadd.f32 %v244, %v182
  %v246 = vadd.f32 %v245, %v183
  %v247 = vadd.f32 %v246, %v184
  %v248 = vadd.f32 %v247, %v185
  %v249 = vadd.f32 %v248, %v186
  %v250 = vadd.f32 %v249, %v187
  %v251 = vadd.f32 %v250, %v188
  %v252 = vadd.f32 %v251, %v189
  %v253 = vadd.f32 %v252, %v190
  %v254 = vadd.f32 %v253, %v191
  %v255 = vadd.f32 %v254, %v192
  %v256 = vadd.f32 %v255, %v193
  %v257 = vadd.f32 %v256, %v194
  %v258 = vadd.f32 %v257, %v195
  %v259 = vadd.f32 %v258, %v196
  %v260 = vadd.f32 %v259, %v197
  %v261 = vadd.f32 %v260, %v198
  %v262 = vadd.f32 %v261, %v199
  %v263 = vadd.f32 %v262, %v200
  %v264 = vadd.f32 %v263, %v201
  %v265 = vadd.f32 %v264, %v202
  %v266 = vadd.f32 %v265, %v203
  %v267 = vadd.f32 %v266, %v204
  %v268 = vrot.slane %v267, 4
  %v269 = vadd.f32 %v267, %v268
  %v270 = vrot.slane %v269, 2
  %v271 = vadd.f32 %v269, %v270
  %v272 = vrot.slane %v271, 1
  %v273 = vadd.f32 %v271, %v272
  %vm274 = vcmask 1040384
  %v275 = vsel %vm274, %v140, %v273
  %276 = vst [vmem:[%s1] sm:$0x3] %v275
  // Predicated region
  $region6: #{block_forward.3} parent=0 // pred_check
    _
  $region7: #{block_forward.3} parent=0 // pred_check_branch
    %278 = sbr.rel (0) target = $region9
  $region8: #{block_forward.3} parent=0 // pred_region
    _
  $region9: #{block_forward.3} parent=0 // pred_fallthru
    _
  // Predicated region
  $region10: #{block_forward.3} parent=0 // pred_check
    _
  $region11: #{block_forward.3} parent=0 // pred_check_branch
    %280 = sbr.rel (0) target = $region13
  $region12: #{block_forward.3} parent=0 // pred_region
    _
  $region13: #{block_forward.3} parent=0 // pred_fallthru
    _

// kernel: block_forward.4
$region0: #{block_forward.4}
  #allocation0 [shape = 'u32[]', space=smem, size = 0x4, offset = 0x4, fixed_abs, tag = 'smem constant byte address 0x4 - core index']
  #allocation1 [shape = 'u32[144,128]{1,0:T(1,128)}', space=vmem, size = 0x12000, scoped, tag = 'internal scratch']
  %s0 = inlined_call_operand.vmem [shape: f32[2,18,18,128], index: 0, kind: input, shape index: {}]
  %s1 = inlined_call_operand.vmem [shape: f32[2,4,18,128], index: 1, kind: input, shape index: {}]
  %s2 = inlined_call_operand.vmem [shape: f32[1,128], index: 2, kind: input, shape index: {}]
  %s3 = inlined_call_operand.vmem [shape: f32[1,128], index: 3, kind: input, shape index: {}]
  %s4 = inlined_call_operand.vmem [shape: f32[3,384,128], index: 4, kind: input, shape index: {}]
  %s5 = inlined_call_operand.vmem [shape: f32[1,128], index: 5, kind: input, shape index: {}]
  %s6 = inlined_call_operand.vmem [shape: f32[128,128], index: 6, kind: input, shape index: {}]
  %s7 = inlined_call_operand.vmem [shape: f32[1,128], index: 7, kind: input, shape index: {}]
  %s8 = inlined_call_operand.vmem [shape: f32[2,16,16,128], index: 8, kind: output, shape index: {0}]
  %s9 = inlined_call_operand.vmem [shape: f32[2,2,2,128], index: 9, kind: output, shape index: {1}]
  %s10 = inlined_call_operand.vmem [shape: f32[2,2,2,128], index: 10, kind: output, shape index: {2}]
  %11 = xla_tuple %s8, %s9, %s10
  %s12 = sld [smem:[#allocation0]]
  $region81: #{block_forward.4} parent=0
    _
  %s14 = ssub.s32 1, %s12
  %s15 = scalar_select 0, %s14, %s12
  loop: start=0, step=1, limit=6
  $region2: #{block_forward.4} parent=0 // loop_pre_header
    _
  $region3: #{block_forward.4} parent=0 // loop_header
    %s17 = sphi 0, %s21
    %p18 = scmp.ge.s32.totalorder %s17, 6
    %s24 = sphi 0, %s36
    %s25 = sphi 0, %s32
    %s26 = sphi 0, %s24
    %s27 = sphi 0, %s25
    %s28 = sphi 0, %s26
    %s29 = sphi 0, %s27
    %s41 = sphi 0, %s43
    %s44 = sphi 0, %s41
    %s45 = sphi 0, %s44
    %s61 = sphi 0, %s45
    %s69 = sphi 0, %s71
    %s72 = sphi 0, %s69
    %s73 = sphi 0, %s72
    %s89 = sphi 0, %s73
    %s93 = sphi 0, %s93
    %s95 = sphi 0, %s93
    %s96 = sphi 0, %s95
    %s110 = sphi 0, %s96
    %s114 = sphi 0, %s114
    %s116 = sphi 0, %s114
    %s117 = sphi 0, %s116
    %s131 = sphi 0, %s117
    %s135 = sphi 0, %s135
    %s137 = sphi 0, %s135
    %s138 = sphi 0, %s137
    %s152 = sphi 0, %s138
    %s156 = sphi 0, %s156
    %s158 = sphi 0, %s156
    %s159 = sphi 0, %s158
    %s173 = sphi 0, %s159
    %s177 = sphi 0, %s177
    %s179 = sphi 0, %s177
    %s180 = sphi 0, %s179
    %s194 = sphi 0, %s180
    %s198 = sphi 0, %s198
    %s200 = sphi 0, %s198
    %s201 = sphi 0, %s200
    %s215 = sphi 0, %s201
    %s223 = sphi 0, %s225
    %s226 = sphi 0, %s223
    %s227 = sphi 0, %s226
    %s243 = sphi 0, %s227
    %s251 = sphi 0, %s253
    %s254 = sphi 0, %s251
    %s255 = sphi 0, %s254
    %s271 = sphi 0, %s255
    %s279 = sphi 0, %s281
    %s282 = sphi 0, %s279
    %s283 = sphi 0, %s282
    %s299 = sphi 0, %s283
  $region4: #{block_forward.4} parent=0 // loop_header_branch
    %20 = sbr.rel (%p18) target = $region8
  $region5: #{block_forward.4} parent=0 // loop_body
    %s22 = ssub.s32 %s17, 1
    %s23 = ssub.s32 %s17, 2
    %s30 = sadd.s32 1, %s25
    %p31 = scmp.ge.s32.totalorder %s30, 2
    %s32 = scalar_select %p31, 0, %s30
    %s33 = sadd.s32 1, %s24
    %s34 = scalar_select %p31, %s33, %s24
    %p35 = scmp.ge.s32.totalorder %s34, 2
    %s36 = scalar_select %p35, 0, %s34
    %s37 = ssub.s32 %s24, %s36
    %s38 = ssub.s32 %s25, %s32
    %s39 = sor.u32 %s37, %s38
    %p40 = scmp.eq.s32.totalorder %s39, 0
    %s42 = sadd.s32 %s41, 1
    %s43 = scalar_select %p40, %s41, %s42
    %p46 = pneg %p40
    %p47 = scmp.eq.s32.totalorder %s17, 3
    %p48 = por %p46, %p47
    %p49 = scmp.ne.s32.totalorder %s41, %s44
    %p50 = scmp.eq.s32.totalorder %s17, 0
    %p51 = por %p49, %p50
    %p52 = scmp.ne.s32.totalorder %s41, %s44
    %p53 = scmp.eq.s32.totalorder %s22, 3
    %p54 = por %p52, %p53
    %p55 = scmp.ne.s32.totalorder %s44, %s45
    %p56 = scmp.eq.s32.totalorder %s22, 0
    %p57 = por %p55, %p56
    %p58 = scmp.ne.s32.totalorder %s44, %s45
    %p59 = scmp.eq.s32.totalorder %s23, 3
    %p60 = por %p58, %p59
    %p62 = scmp.ne.s32.totalorder %s45, %s61
    %p63 = scmp.eq.s32.totalorder %s23, 0
    %p64 = por %p62, %p63
    %s65 = ssub.s32 %s24, %s36
    %s66 = ssub.s32 %s25, %s32
    %s67 = sor.u32 %s65, %s66
    %p68 = scmp.eq.s32.totalorder %s67, 0
    %s70 = sadd.s32 %s69, 1
    %s71 = scalar_select %p68, %s69, %s70
    %p74 = pneg %p68
    %p75 = scmp.eq.s32.totalorder %s17, 3
    %p76 = por %p74, %p75
    %p77 = scmp.ne.s32.totalorder %s69, %s72
    %p78 = scmp.eq.s32.totalorder %s17, 0
    %p79 = por %p77, %p78
    %p80 = scmp.ne.s32.totalorder %s69, %s72
    %p81 = scmp.eq.s32.totalorder %s22, 3
    %p82 = por %p80, %p81
    %p83 = scmp.ne.s32.totalorder %s72, %s73
    %p84 = scmp.eq.s32.totalorder %s22, 0
    %p85 = por %p83, %p84
    %p86 = scmp.ne.s32.totalorder %s72, %s73
    %p87 = scmp.eq.s32.totalorder %s23, 3
    %p88 = por %p86, %p87
    %p90 = scmp.ne.s32.totalorder %s73, %s89
    %p91 = scmp.eq.s32.totalorder %s23, 0
    %p92 = por %p90, %p91
    %s94 = sadd.s32 %s93, 1
    %p97 = scmp.eq.s32.totalorder %s17, 3
    %p98 = scmp.ne.s32.totalorder %s93, %s95
    %p99 = scmp.eq.s32.totalorder %s17, 0
    %p100 = por %p98, %p99
    %p101 = scmp.ne.s32.totalorder %s93, %s95
    %p102 = scmp.eq.s32.totalorder %s22, 3
    %p103 = por %p101, %p102
    %p104 = scmp.ne.s32.totalorder %s95, %s96
    %p105 = scmp.eq.s32.totalorder %s22, 0
    %p106 = por %p104, %p105
    %p107 = scmp.ne.s32.totalorder %s95, %s96
    %p108 = scmp.eq.s32.totalorder %s23, 3
    %p109 = por %p107, %p108
    %p111 = scmp.ne.s32.totalorder %s96, %s110
    %p112 = scmp.eq.s32.totalorder %s23, 0
    %p113 = por %p111, %p112
    %s115 = sadd.s32 %s114, 1
    %p118 = scmp.eq.s32.totalorder %s17, 3
    %p119 = scmp.ne.s32.totalorder %s114, %s116
    %p120 = scmp.eq.s32.totalorder %s17, 0
    %p121 = por %p119, %p120
    %p122 = scmp.ne.s32.totalorder %s114, %s116
    %p123 = scmp.eq.s32.totalorder %s22, 3
    %p124 = por %p122, %p123
    %p125 = scmp.ne.s32.totalorder %s116, %s117
    %p126 = scmp.eq.s32.totalorder %s22, 0
    %p127 = por %p125, %p126
    %p128 = scmp.ne.s32.totalorder %s116, %s117
    %p129 = scmp.eq.s32.totalorder %s23, 3
    %p130 = por %p128, %p129
    %p132 = scmp.ne.s32.totalorder %s117, %s131
    %p133 = scmp.eq.s32.totalorder %s23, 0
    %p134 = por %p132, %p133
    %s136 = sadd.s32 %s135, 1
    %p139 = scmp.eq.s32.totalorder %s17, 3
    %p140 = scmp.ne.s32.totalorder %s135, %s137
    %p141 = scmp.eq.s32.totalorder %s17, 0
    %p142 = por %p140, %p141
    %p143 = scmp.ne.s32.totalorder %s135, %s137
    %p144 = scmp.eq.s32.totalorder %s22, 3
    %p145 = por %p143, %p144
    %p146 = scmp.ne.s32.totalorder %s137, %s138
    %p147 = scmp.eq.s32.totalorder %s22, 0
    %p148 = por %p146, %p147
    %p149 = scmp.ne.s32.totalorder %s137, %s138
    %p150 = scmp.eq.s32.totalorder %s23, 3
    %p151 = por %p149, %p150
    %p153 = scmp.ne.s32.totalorder %s138, %s152
    %p154 = scmp.eq.s32.totalorder %s23, 0
    %p155 = por %p153, %p154
    %s157 = sadd.s32 %s156, 1
    %p160 = scmp.eq.s32.totalorder %s17, 3
    %p161 = scmp.ne.s32.totalorder %s156, %s158
    %p162 = scmp.eq.s32.totalorder %s17, 0
    %p163 = por %p161, %p162
    %p164 = scmp.ne.s32.totalorder %s156, %s158
    %p165 = scmp.eq.s32.totalorder %s22, 3
    %p166 = por %p164, %p165
    %p167 = scmp.ne.s32.totalorder %s158, %s159
    %p168 = scmp.eq.s32.totalorder %s22, 0
    %p169 = por %p167, %p168
    %p170 = scmp.ne.s32.totalorder %s158, %s159
    %p171 = scmp.eq.s32.totalorder %s23, 3
    %p172 = por %p170, %p171
    %p174 = scmp.ne.s32.totalorder %s159, %s173
    %p175 = scmp.eq.s32.totalorder %s23, 0
    %p176 = por %p174, %p175
    %s178 = sadd.s32 %s177, 1
    %p181 = scmp.eq.s32.totalorder %s17, 3
    %p182 = scmp.ne.s32.totalorder %s177, %s179
    %p183 = scmp.eq.s32.totalorder %s17, 0
    %p184 = por %p182, %p183
    %p185 = scmp.ne.s32.totalorder %s177, %s179
    %p186 = scmp.eq.s32.totalorder %s22, 3
    %p187 = por %p185, %p186
    %p188 = scmp.ne.s32.totalorder %s179, %s180
    %p189 = scmp.eq.s32.totalorder %s22, 0
    %p190 = por %p188, %p189
    %p191 = scmp.ne.s32.totalorder %s179, %s180
    %p192 = scmp.eq.s32.totalorder %s23, 3
    %p193 = por %p191, %p192
    %p195 = scmp.ne.s32.totalorder %s180, %s194
    %p196 = scmp.eq.s32.totalorder %s23, 0
    %p197 = por %p195, %p196
    %s199 = sadd.s32 %s198, 1
    %p202 = scmp.eq.s32.totalorder %s17, 3
    %p203 = scmp.ne.s32.totalorder %s198, %s200
    %p204 = scmp.eq.s32.totalorder %s17, 0
    %p205 = por %p203, %p204
    %p206 = scmp.ne.s32.totalorder %s198, %s200
    %p207 = scmp.eq.s32.totalorder %s22, 3
    %p208 = por %p206, %p207
    %p209 = scmp.ne.s32.totalorder %s200, %s201
    %p210 = scmp.eq.s32.totalorder %s22, 0
    %p211 = por %p209, %p210
    %p212 = scmp.ne.s32.totalorder %s200, %s201
    %p213 = scmp.eq.s32.totalorder %s23, 3
    %p214 = por %p212, %p213
    %p216 = scmp.ne.s32.totalorder %s201, %s215
    %p217 = scmp.eq.s32.totalorder %s23, 0
    %p218 = por %p216, %p217
    %s219 = ssub.s32 %s24, %s36
    %s220 = ssub.s32 %s25, %s32
    %s221 = sor.u32 %s219, %s220
    %p222 = scmp.eq.s32.totalorder %s221, 0
    %s224 = sadd.s32 %s223, 1
    %s225 = scalar_select %p222, %s223, %s224
    %p228 = pneg %p222
    %p229 = scmp.eq.s32.totalorder %s17, 3
    %p230 = por %p228, %p229
    %p231 = scmp.ne.s32.totalorder %s223, %s226
    %p232 = scmp.eq.s32.totalorder %s17, 0
    %p233 = por %p231, %p232
    %p234 = scmp.ne.s32.totalorder %s223, %s226
    %p235 = scmp.eq.s32.totalorder %s22, 3
    %p236 = por %p234, %p235
    %p237 = scmp.ne.s32.totalorder %s226, %s227
    %p238 = scmp.eq.s32.totalorder %s22, 0
    %p239 = por %p237, %p238
    %p240 = scmp.ne.s32.totalorder %s226, %s227
    %p241 = scmp.eq.s32.totalorder %s23, 3
    %p242 = por %p240, %p241
    %p244 = scmp.ne.s32.totalorder %s227, %s243
    %p245 = scmp.eq.s32.totalorder %s23, 0
    %p246 = por %p244, %p245
    %s247 = ssub.s32 %s24, %s36
    %s248 = ssub.s32 %s25, %s32
    %s249 = sor.u32 %s247, %s248
    %p250 = scmp.eq.s32.totalorder %s249, 0
    %s252 = sadd.s32 %s251, 1
    %s253 = scalar_select %p250, %s251, %s252
    %p256 = pneg %p250
    %p257 = scmp.eq.s32.totalorder %s17, 3
    %p258 = por %p256, %p257
    %p259 = scmp.ne.s32.totalorder %s251, %s254
    %p260 = scmp.eq.s32.totalorder %s17, 0
    %p261 = por %p259, %p260
    %p262 = scmp.ne.s32.totalorder %s251, %s254
    %p263 = scmp.eq.s32.totalorder %s22, 3
    %p264 = por %p262, %p263
    %p265 = scmp.ne.s32.totalorder %s254, %s255
    %p266 = scmp.eq.s32.totalorder %s22, 0
    %p267 = por %p265, %p266
    %p268 = scmp.ne.s32.totalorder %s254, %s255
    %p269 = scmp.eq.s32.totalorder %s23, 3
    %p270 = por %p268, %p269
    %p272 = scmp.ne.s32.totalorder %s255, %s271
    %p273 = scmp.eq.s32.totalorder %s23, 0
    %p274 = por %p272, %p273
    %s275 = ssub.s32 %s24, %s36
    %s276 = ssub.s32 %s25, %s32
    %s277 = sor.u32 %s275, %s276
    %p278 = scmp.eq.s32.totalorder %s277, 0
    %s280 = sadd.s32 %s279, 1
    %s281 = scalar_select %p278, %s279, %s280
    %p284 = pneg %p278
    %p285 = scmp.eq.s32.totalorder %s17, 3
    %p286 = por %p284, %p285
    %p287 = scmp.ne.s32.totalorder %s279, %s282
    %p288 = scmp.eq.s32.totalorder %s17, 0
    %p289 = por %p287, %p288
    %p290 = scmp.ne.s32.totalorder %s279, %s282
    %p291 = scmp.eq.s32.totalorder %s22, 3
    %p292 = por %p290, %p291
    %p293 = scmp.ne.s32.totalorder %s282, %s283
    %p294 = scmp.eq.s32.totalorder %s22, 0
    %p295 = por %p293, %p294
    %p296 = scmp.ne.s32.totalorder %s282, %s283
    %p297 = scmp.eq.s32.totalorder %s23, 3
    %p298 = por %p296, %p297
    %p300 = scmp.ne.s32.totalorder %s283, %s299
    %p301 = scmp.eq.s32.totalorder %s23, 0
    %p302 = por %p300, %p301
    %p303 = scmp.le.s32.totalorder 1, %s17
    %p304 = scmp.lt.s32.totalorder %s17, 5
    %p305 = pnand %p303, %p304
    %p306 = pneg %p305
    // Predicated region
    $region9: #{block_forward.4} parent=5 // pred_check
      _
    $region10: #{block_forward.4} parent=5 // pred_check_branch
      %308 = sbr.rel (%p305) target = $region12
    $region11: #{block_forward.4} parent=5 // pred_region
      %s309 = ssub.s32 %s17, 1
      // Predicated region
      $region13: #{block_forward.4} parent=11 // pred_check
        %p310 = pneg %p106
      $region14: #{block_forward.4} parent=11 // pred_check_branch
        %312 = sbr.rel (%p310) target = $region16
      $region15: #{block_forward.4} parent=11 // pred_region
        _
      $region16: #{block_forward.4} parent=11 // pred_fallthru
        _
      // Predicated region
      $region17: #{block_forward.4} parent=11 // pred_check
        %p313 = pneg %p127
      $region18: #{block_forward.4} parent=11 // pred_check_branch
        %315 = sbr.rel (%p313) target = $region20
      $region19: #{block_forward.4} parent=11 // pred_region
        _
      $region20: #{block_forward.4} parent=11 // pred_fallthru
        _
      // Predicated region
      $region21: #{block_forward.4} parent=11 // pred_check
        %p316 = pneg %p148
      $region22: #{block_forward.4} parent=11 // pred_check_branch
        %318 = sbr.rel (%p316) target = $region24
      $region23: #{block_forward.4} parent=11 // pred_region
        _
      $region24: #{block_forward.4} parent=11 // pred_fallthru
        _
      // Predicated region
      $region25: #{block_forward.4} parent=11 // pred_check
        %p319 = pneg %p169
      $region26: #{block_forward.4} parent=11 // pred_check_branch
        %321 = sbr.rel (%p319) target = $region28
      $region27: #{block_forward.4} parent=11 // pred_region
        _
      $region28: #{block_forward.4} parent=11 // pred_fallthru
        _
      // Predicated region
      $region29: #{block_forward.4} parent=11 // pred_check
        %p322 = pneg %p190
      $region30: #{block_forward.4} parent=11 // pred_check_branch
        %324 = sbr.rel (%p322) target = $region32
      $region31: #{block_forward.4} parent=11 // pred_region
        _
      $region32: #{block_forward.4} parent=11 // pred_fallthru
        _
      // Predicated region
      $region33: #{block_forward.4} parent=11 // pred_check
        %p325 = pneg %p211
      $region34: #{block_forward.4} parent=11 // pred_check_branch
        %327 = sbr.rel (%p325) target = $region36
      $region35: #{block_forward.4} parent=11 // pred_region
        _
      $region36: #{block_forward.4} parent=11 // pred_fallthru
        _
    $region12: #{block_forward.4} parent=5 // pred_fallthru
      _
    %p328 = scmp.lt.s32.totalorder %s17, 4
    // Predicated region
    $region37: #{block_forward.4} parent=5 // pred_check
      %p329 = pneg %p328
    $region38: #{block_forward.4} parent=5 // pred_check_branch
      %331 = sbr.rel (%p329) target = $region40
    $region39: #{block_forward.4} parent=5 // pred_region
      // Predicated region
      $region41: #{block_forward.4} parent=39 // pred_check
        %p332 = pneg %p51
      $region42: #{block_forward.4} parent=39 // pred_check_branch
        %334 = sbr.rel (%p332) target = $region44
      $region43: #{block_forward.4} parent=39 // pred_region
        %s335 = smul.u32 8, %s25
        %s336 = ssub.s32 18, %s335
        %p337 = scmp.lt.s32.totalorder %s336, 8
        %s338 = scalar_select %p337, %s336, 8
        %s339 = smul.u32 128, %s338
        %s340 = smul.u32 %s339, 3
        %p341 = scmp.lt.s32.totalorder %s24, 1
        %s342 = scalar_select %p341, %s24, 1
        %p343 = scmp.lt.s32.totalorder %s335, 17
        %s344 = scalar_select %p343, %s335, 17
        %s345 = smul.addr %s344, 3
        %s346 = smul.addr %s342, 54
        %s347 = sadd.s32 %s345, %s346
        %s348 = smul.addr %s347, 8
        %s349 = scalar_lea.vmem %s0, %s348
        %s350 = smul.u32 8, %s25
        %s351 = ssub.s32 18, %s350
        %p352 = scmp.lt.s32.totalorder %s351, 8
        %s353 = scalar_select %p352, %s351, 8
        %s354 = smul.u32 128, %s353
        %s355 = smul.u32 %s354, 3
      $region44: #{block_forward.4} parent=39 // pred_fallthru
        _
      // Predicated region
      $region45: #{block_forward.4} parent=39 // pred_check
        %p356 = pneg %p79
      $region46: #{block_forward.4} parent=39 // pred_check_branch
        %358 = sbr.rel (%p356) target = $region48
      $region47: #{block_forward.4} parent=39 // pred_region
        %s359 = smul.u32 2, %s25
        %p360 = scmp.lt.s32.totalorder %s24, 1
        %s361 = scalar_select %p360, %s24, 1
        %p362 = scmp.lt.s32.totalorder %s359, 3
        %s363 = scalar_select %p362, %s359, 3
        %s364 = smul.addr %s363, 3
        %s365 = smul.addr %s361, 12
        %s366 = sadd.s32 %s364, %s365
        %s367 = smul.addr %s366, 8
        %s368 = scalar_lea.vmem %s1, %s367
        %s369 = smul.u32 2, %s25
      $region48: #{block_forward.4} parent=39 // pred_fallthru
        _
    $region40: #{block_forward.4} parent=5 // pred_fallthru
      _
    %p370 = scmp.le.s32.totalorder 1, %s17
    %p371 = scmp.lt.s32.totalorder %s17, 5
    %p372 = pnand %p370, %p371
    %p373 = pneg %p372
    // Predicated region
    $region49: #{block_forward.4} parent=5 // pred_check
      _
    $region50: #{block_forward.4} parent=5 // pred_check_branch
      %375 = sbr.rel (%p372) target = $region52
    $region51: #{block_forward.4} parent=5 // pred_region
      %s376 = ssub.s32 %s17, 1
      %s377 = smul.u32 8, %s27
      %s378 = ssub.s32 18, %s377
      %p379 = scmp.lt.s32.totalorder %s378, 8
      %s380 = scalar_select %p379, %s378, 8
      %s381 = smul.u32 128, %s380
      %s382 = smul.u32 %s381, 3
      %p383 = scmp.lt.s32.totalorder %s26, 1
      %s384 = scalar_select %p383, %s26, 1
      %p385 = scmp.lt.s32.totalorder %s377, 17
      %s386 = scalar_select %p385, %s377, 17
      %s387 = smul.addr %s386, 3
      %s388 = smul.addr %s384, 54
      %s389 = sadd.s32 %s387, %s388
      %s390 = smul.addr %s389, 8
      %s391 = scalar_lea.vmem %s0, %s390
      %p392 = pneg %p57
      %p393 = pneg %p54
      %s394 = smul.u32 2, %s27
      %p395 = scmp.lt.s32.totalorder %s26, 1
      %s396 = scalar_select %p395, %s26, 1
      %p397 = scmp.lt.s32.totalorder %s394, 3
      %s398 = scalar_select %p397, %s394, 3
      %s399 = smul.addr %s398, 3
      %s400 = smul.addr %s396, 12
      %s401 = sadd.s32 %s399, %s400
      %s402 = smul.addr %s401, 8
      %s403 = scalar_lea.vmem %s1, %s402
      %p404 = pneg %p85
      %p405 = pneg %p82
      %p406 = pneg %p106
      %p407 = pneg %p103
      %p408 = pneg %p127
      %p409 = pneg %p124
      %p410 = pneg %p148
      %p411 = pneg %p145
      %p412 = pneg %p169
      %p413 = pneg %p166
      %p414 = pneg %p190
      %p415 = pneg %p187
      %p416 = pneg %p211
      %p417 = pneg %p208
      %p418 = pneg %p239
      %p419 = pneg %p236
      %s420 = smul.u32 8, %s27
      %p421 = scmp.lt.s32.totalorder %s26, 1
      %s422 = scalar_select %p421, %s26, 1
      %p423 = scmp.lt.s32.totalorder %s420, 15
      %s424 = scalar_select %p423, %s420, 15
      %s425 = smul.addr %s424, 2
      %s426 = smul.addr %s422, 32
      %s427 = sadd.s32 %s425, %s426
      %s428 = smul.addr %s427, 8
      %s429 = scalar_lea.vmem %s8, %s428
      %p430 = pneg %p267
      %p431 = pneg %p264
      %p432 = scmp.lt.s32.totalorder %s26, 1
      %s433 = scalar_select %p432, %s26, 1
      %p434 = scmp.lt.s32.totalorder %s27, 1
      %s435 = scalar_select %p434, %s27, 1
      %s436 = smul.addr %s433, 2
      %s437 = sadd.s32 %s435, %s436
      %s438 = smul.addr %s437, 2
      %s439 = scalar_lea.vmem %s9, %s438
      %p440 = pneg %p295
      %p441 = pneg %p292
      %p442 = scmp.lt.s32.totalorder %s26, 1
      %s443 = scalar_select %p442, %s26, 1
      %p444 = scmp.lt.s32.totalorder %s27, 1
      %s445 = scalar_select %p444, %s27, 1
      %s446 = smul.addr %s443, 2
      %s447 = sadd.s32 %s445, %s446
      %s448 = smul.addr %s447, 2
      %s449 = scalar_lea.vmem %s10, %s448
      %s450 = smul.u32 8, %s27
      %s451 = ssub.s32 18, %s450
      %p452 = scmp.lt.s32.totalorder %s451, 8
      %s453 = scalar_select %p452, %s451, 8
      %s454 = smul.u32 128, %s453
      %s455 = smul.u32 %s454, 3
      %p456 = scmp.lt.s32.totalorder %s26, 1
      %s457 = scalar_select %p456, %s26, 1
      %p458 = scmp.lt.s32.totalorder %s450, 17
      %s459 = scalar_select %p458, %s450, 17
      %s460 = smul.addr %s459, 3
      %s461 = smul.addr %s457, 54
      %s462 = sadd.s32 %s460, %s461
      %s463 = smul.addr %s462, 8
      %s464 = scalar_lea.vmem %s0, %s463
      %s465 = smul.u32 8, %s27
      %s466 = ssub.s32 18, %s465
      %p467 = scmp.lt.s32.totalorder %s466, 8
      %s468 = scalar_select %p467, %s466, 8
      %s469 = smul.u32 128, %s468
      %s470 = smul.u32 %s469, 3
      %s471 = smul.u32 2, %s27
      %p472 = scmp.lt.s32.totalorder %s26, 1
      %s473 = scalar_select %p472, %s26, 1
      %p474 = scmp.lt.s32.totalorder %s471, 3
      %s475 = scalar_select %p474, %s471, 3
      %s476 = smul.addr %s475, 3
      %s477 = smul.addr %s473, 12
      %s478 = sadd.s32 %s476, %s477
      %s479 = smul.addr %s478, 8
      %s480 = scalar_lea.vmem %s1, %s479
      %s481 = smul.u32 2, %s27
      %s482 = smul.u32 8, %s27
      %p483 = scmp.lt.s32.totalorder %s26, 1
      %s484 = scalar_select %p483, %s26, 1
      %p485 = scmp.lt.s32.totalorder %s482, 15
      %s486 = scalar_select %p485, %s482, 15
      %s487 = smul.addr %s486, 2
      %s488 = smul.addr %s484, 32
      %s489 = sadd.s32 %s487, %s488
      %s490 = smul.addr %s489, 8
      %s491 = scalar_lea.vmem %s8, %s490
      %s492 = smul.u32 8, %s27
      %p493 = scmp.lt.s32.totalorder %s26, 1
      %s494 = scalar_select %p493, %s26, 1
      %p495 = scmp.lt.s32.totalorder %s27, 1
      %s496 = scalar_select %p495, %s27, 1
      %s497 = smul.addr %s494, 2
      %s498 = sadd.s32 %s496, %s497
      %s499 = smul.addr %s498, 2
      %s500 = scalar_lea.vmem %s9, %s499
      %p501 = scmp.lt.s32.totalorder %s26, 1
      %s502 = scalar_select %p501, %s26, 1
      %p503 = scmp.lt.s32.totalorder %s27, 1
      %s504 = scalar_select %p503, %s27, 1
      %s505 = smul.addr %s502, 2
      %s506 = sadd.s32 %s504, %s505
      %s507 = smul.addr %s506, 2
      %s508 = scalar_lea.vmem %s10, %s507
      %v509 = vld [vmem:[%s464] sm:$0xff]
      %v510 = vld [vmem:[%s464 + $0x8] sm:$0xff]
      %v511 = vld [vmem:[%s464 + $0x10] sm:$0x3]
      %v512 = vld [vmem:[%s464 + $0x18] sm:$0xff]
      %v513 = vld [vmem:[%s464 + $0x20] sm:$0xff]
      %v514 = vld [vmem:[%s464 + $0x28] sm:$0x3]
      %v515 = vld [vmem:[%s464 + $0x30] sm:$0xff]
      %v516 = vld [vmem:[%s464 + $0x38] sm:$0xff]
      %v517 = vld [vmem:[%s464 + $0x40] sm:$0x3]
      %v518 = vld [vmem:[%s464 + $0x48] sm:$0xff]
      %v519 = vld [vmem:[%s464 + $0x50] sm:$0xff]
      %v520 = vld [vmem:[%s464 + $0x58] sm:$0x3]
      %v521 = vld [vmem:[%s464 + $0x60] sm:$0xff]
      %v522 = vld [vmem:[%s464 + $0x68] sm:$0xff]
      %v523 = vld [vmem:[%s464 + $0x70] sm:$0x3]
      %v524 = vld [vmem:[%s464 + $0x78] sm:$0xff]
      %v525 = vld [vmem:[%s464 + $0x80] sm:$0xff]
      %v526 = vld [vmem:[%s464 + $0x88] sm:$0x3]
      %v527 = vld [vmem:[%s464 + $0x90] sm:$0xff]
      %v528 = vld [vmem:[%s464 + $0x98] sm:$0xff]
      %v529 = vld [vmem:[%s464 + $0xa0] sm:$0x3]
      %v530 = vld [vmem:[%s464 + $0xa8] sm:$0xff]
      %v531 = vld [vmem:[%s464 + $0xb0] sm:$0xff]
      %v532 = vld [vmem:[%s464 + $0xb8] sm:$0x3]
      %v533 = vld [vmem:[%s480] sm:$0xff]
      %v534 = vld [vmem:[%s480 + $0x8] sm:$0xff]
      %v535 = vld [vmem:[%s480 + $0x10] sm:$0x3]
      %v536 = vld [vmem:[%s480 + $0x18] sm:$0xff]
      %v537 = vld [vmem:[%s480 + $0x20] sm:$0xff]
      %v538 = vld [vmem:[%s480 + $0x28] sm:$0x3]
      %v539 = vld [vmem:[%s2] sm:$0x1]
      %v541 = vlaneseq
      %v542 = vshrl.u32 %v541, 7
      %v543 = vsub.s32 0, %v542
      %v544 = vrot.slane %v539, %v543
      %v546 = vmul.f32 %v509, %v544
      %v547 = vmul.f32 %v510, %v544
      %v548 = vmul.f32 %v511, %v544
      %v549 = vmul.f32 %v512, %v544
      %v550 = vmul.f32 %v513, %v544
      %v551 = vmul.f32 %v514, %v544
      %v552 = vmul.f32 %v515, %v544
      %v553 = vmul.f32 %v516, %v544
      %v554 = vmul.f32 %v517, %v544
      %v555 = vmul.f32 %v518, %v544
      %v556 = vmul.f32 %v519, %v544
      %v557 = vmul.f32 %v520, %v544
      %v558 = vmul.f32 %v521, %v544
      %v559 = vmul.f32 %v522, %v544
      %v560 = vmul.f32 %v523, %v544
      %v561 = vmul.f32 %v524, %v544
      %v562 = vmul.f32 %v525, %v544
      %v563 = vmul.f32 %v526, %v544
      %v564 = vmul.f32 %v527, %v544
      %v565 = vmul.f32 %v528, %v544
      %v566 = vmul.f32 %v529, %v544
      %v567 = vmul.f32 %v530, %v544
      %v568 = vmul.f32 %v531, %v544
      %v569 = vmul.f32 %v532, %v544
      %v570 = vmul.f32 %v533, %v544
      %v571 = vmul.f32 %v534, %v544
      %v572 = vmul.f32 %v535, %v544
      %v573 = vmul.f32 %v536, %v544
      %v574 = vmul.f32 %v537, %v544
      %v575 = vmul.f32 %v538, %v544
      %v576 = vld [vmem:[%s3] sm:$0x1]
      %v578 = vlaneseq
      %v579 = vshrl.u32 %v578, 7
      %v580 = vsub.s32 0, %v579
      %v581 = vrot.slane %v576, %v580
      %v583 = vadd.f32 %v546, %v581
      %v584 = vadd.f32 %v547, %v581
      %v585 = vadd.f32 %v548, %v581
      %v586 = vadd.f32 %v549, %v581
      %v587 = vadd.f32 %v550, %v581
      %v588 = vadd.f32 %v551, %v581
      %v589 = vadd.f32 %v552, %v581
      %v590 = vadd.f32 %v553, %v581
      %v591 = vadd.f32 %v554, %v581
      %v592 = vadd.f32 %v555, %v581
      %v593 = vadd.f32 %v556, %v581
      %v594 = vadd.f32 %v557, %v581
      %v595 = vadd.f32 %v558, %v581
      %v596 = vadd.f32 %v559, %v581
      %v597 = vadd.f32 %v560, %v581
      %v598 = vadd.f32 %v561, %v581
      %v599 = vadd.f32 %v562, %v581
      %v600 = vadd.f32 %v563, %v581
      %v601 = vadd.f32 %v564, %v581
      %v602 = vadd.f32 %v565, %v581
      %v603 = vadd.f32 %v566, %v581
      %v604 = vadd.f32 %v567, %v581
      %v605 = vadd.f32 %v568, %v581
      %v606 = vadd.f32 %v569, %v581
      %v607 = vadd.f32 %v570, %v581
      %v608 = vadd.f32 %v571, %v581
      %v609 = vadd.f32 %v572, %v581
      %v610 = vadd.f32 %v573, %v581
      %v611 = vadd.f32 %v574, %v581
      %v612 = vadd.f32 %v575, %v581
      %v613 = vmax.f32 %v583, 0.0
      %v614 = vmax.f32 %v584, 0.0
      %v615 = vmax.f32 %v585, 0.0
      %v616 = vmax.f32 %v586, 0.0
      %v617 = vmax.f32 %v587, 0.0
      %v618 = vmax.f32 %v588, 0.0
      %v619 = vmax.f32 %v589, 0.0
      %v620 = vmax.f32 %v590, 0.0
      %v621 = vmax.f32 %v591, 0.0
      %v622 = vmax.f32 %v592, 0.0
      %v623 = vmax.f32 %v593, 0.0
      %v624 = vmax.f32 %v594, 0.0
      %v625 = vmax.f32 %v595, 0.0
      %v626 = vmax.f32 %v596, 0.0
      %v627 = vmax.f32 %v597, 0.0
      %v628 = vmax.f32 %v598, 0.0
      %v629 = vmax.f32 %v599, 0.0
      %v630 = vmax.f32 %v600, 0.0
      %v631 = vmax.f32 %v601, 0.0
      %v632 = vmax.f32 %v602, 0.0
      %v633 = vmax.f32 %v603, 0.0
      %v634 = vmax.f32 %v604, 0.0
      %v635 = vmax.f32 %v605, 0.0
      %v636 = vmax.f32 %v606, 0.0
      %v637 = vmax.f32 %v607, 0.0
      %v638 = vmax.f32 %v608, 0.0
      %v639 = vmax.f32 %v609, 0.0
      %v640 = vmax.f32 %v610, 0.0
      %v641 = vmax.f32 %v611, 0.0
      %v642 = vmax.f32 %v612, 0.0
      %vm667 = vcmask 1046528
      %v668 = vrot.slane %v613, 1
      %v669 = vrot.slane %v614, 1
      %v670 = vsel %vm667, %v668, %v669
      %v671 = vrot.slane %v615, 1
      %v672 = vsel %vm667, %v669, %v671
      %v673 = vrot.slane %v616, 1
      %v674 = vrot.slane %v617, 1
      %v675 = vsel %vm667, %v673, %v674
      %v676 = vrot.slane %v618, 1
      %v677 = vsel %vm667, %v674, %v676
      %v678 = vrot.slane %v619, 1
      %v679 = vrot.slane %v620, 1
      %v680 = vsel %vm667, %v678, %v679
      %v681 = vrot.slane %v621, 1
      %v682 = vsel %vm667, %v679, %v681
      %v683 = vrot.slane %v622, 1
      %v684 = vrot.slane %v623, 1
      %v685 = vsel %vm667, %v683, %v684
      %v686 = vrot.slane %v624, 1
      %v687 = vsel %vm667, %v684, %v686
      %v688 = vrot.slane %v625, 1
      %v689 = vrot.slane %v626, 1
      %v690 = vsel %vm667, %v688, %v689
      %v691 = vrot.slane %v627, 1
      %v692 = vsel %vm667, %v689, %v691
      %v693 = vrot.slane %v628, 1
      %v694 = vrot.slane %v629, 1
      %v695 = vsel %vm667, %v693, %v694
      %v696 = vrot.slane %v630, 1
      %v697 = vsel %vm667, %v694, %v696
      %v698 = vrot.slane %v631, 1
      %v699 = vrot.slane %v632, 1
      %v700 = vsel %vm667, %v698, %v699
      %v701 = vrot.slane %v633, 1
      %v702 = vsel %vm667, %v699, %v701
      %v703 = vrot.slane %v634, 1
      %v704 = vrot.slane %v635, 1
      %v705 = vsel %vm667, %v703, %v704
      %v706 = vrot.slane %v636, 1
      %v707 = vsel %vm667, %v704, %v706
      %vm724 = vcmask 1045504
      %v725 = vrot.slane %v613, 2
      %v726 = vrot.slane %v614, 2
      %v727 = vsel %vm724, %v725, %v726
      %v728 = vrot.slane %v615, 2
      %v729 = vsel %vm724, %v726, %v728
      %v730 = vrot.slane %v616, 2
      %v731 = vrot.slane %v617, 2
      %v732 = vsel %vm724, %v730, %v731
      %v733 = vrot.slane %v618, 2
      %v734 = vsel %vm724, %v731, %v733
      %v735 = vrot.slane %v619, 2
      %v736 = vrot.slane %v620, 2
      %v737 = vsel %vm724, %v735, %v736
      %v738 = vrot.slane %v621, 2
      %v739 = vsel %vm724, %v736, %v738
      %v740 = vrot.slane %v622, 2
      %v741 = vrot.slane %v623, 2
      %v742 = vsel %vm724, %v740, %v741
      %v743 = vrot.slane %v624, 2
      %v744 = vsel %vm724, %v741, %v743
      %v745 = vrot.slane %v625, 2
      %v746 = vrot.slane %v626, 2
      %v747 = vsel %vm724, %v745, %v746
      %v748 = vrot.slane %v627, 2
      %v749 = vsel %vm724, %v746, %v748
      %v750 = vrot.slane %v628, 2
      %v751 = vrot.slane %v629, 2
      %v752 = vsel %vm724, %v750, %v751
      %v753 = vrot.slane %v630, 2
      %v754 = vsel %vm724, %v751, %v753
      %v755 = vrot.slane %v631, 2
      %v756 = vrot.slane %v632, 2
      %v757 = vsel %vm724, %v755, %v756
      %v758 = vrot.slane %v633, 2
      %v759 = vsel %vm724, %v756, %v758
      %v760 = vrot.slane %v634, 2
      %v761 = vrot.slane %v635, 2
      %v762 = vsel %vm724, %v760, %v761
      %v763 = vrot.slane %v636, 2
      %v764 = vsel %vm724, %v761, %v763
      %v781 = vld [vmem:[%s4] sm:$0xff]
      %v782 = vld [vmem:[%s4 + $0x8] sm:$0xff]
      %v783 = vld [vmem:[%s4 + $0x10] sm:$0xff]
      %v784 = vld [vmem:[%s4 + $0x18] sm:$0xff]
      %v785 = vld [vmem:[%s4 + $0x20] sm:$0xff]
      %v786 = vld [vmem:[%s4 + $0x28] sm:$0xff]
      %v787 = vld [vmem:[%s4 + $0x30] sm:$0xff]
      %v788 = vld [vmem:[%s4 + $0x38] sm:$0xff]
      %v789 = vld [vmem:[%s4 + $0x40] sm:$0xff]
      %v790 = vld [vmem:[%s4 + $0x48] sm:$0xff]
      %v791 = vld [vmem:[%s4 + $0x50] sm:$0xff]
      %v792 = vld [vmem:[%s4 + $0x58] sm:$0xff]
      %v793 = vld [vmem:[%s4 + $0x60] sm:$0xff]
      %v794 = vld [vmem:[%s4 + $0x68] sm:$0xff]
      %v795 = vld [vmem:[%s4 + $0x70] sm:$0xff]
      %v796 = vld [vmem:[%s4 + $0x78] sm:$0xff]
      %v797 = vld [vmem:[%s4 + $0x80] sm:$0xff]
      %v798 = vld [vmem:[%s4 + $0x88] sm:$0xff]
      %v799 = vld [vmem:[%s4 + $0x90] sm:$0xff]
      %v800 = vld [vmem:[%s4 + $0x98] sm:$0xff]
      %v801 = vld [vmem:[%s4 + $0xa0] sm:$0xff]
      %v802 = vld [vmem:[%s4 + $0xa8] sm:$0xff]
      %v803 = vld [vmem:[%s4 + $0xb0] sm:$0xff]
      %v804 = vld [vmem:[%s4 + $0xb8] sm:$0xff]
      %v805 = vld [vmem:[%s4 + $0xc0] sm:$0xff]
      %v806 = vld [vmem:[%s4 + $0xc8] sm:$0xff]
      %v807 = vld [vmem:[%s4 + $0xd0] sm:$0xff]
      %v808 = vld [vmem:[%s4 + $0xd8] sm:$0xff]
      %v809 = vld [vmem:[%s4 + $0xe0] sm:$0xff]
      %v810 = vld [vmem:[%s4 + $0xe8] sm:$0xff]
      %v811 = vld [vmem:[%s4 + $0xf0] sm:$0xff]
      %v812 = vld [vmem:[%s4 + $0xf8] sm:$0xff]
      %v813 = vld [vmem:[%s4 + $0x100] sm:$0xff]
      %v814 = vld [vmem:[%s4 + $0x108] sm:$0xff]
      %v815 = vld [vmem:[%s4 + $0x110] sm:$0xff]
      %v816 = vld [vmem:[%s4 + $0x118] sm:$0xff]
      %v817 = vld [vmem:[%s4 + $0x120] sm:$0xff]
      %v818 = vld [vmem:[%s4 + $0x128] sm:$0xff]
      %v819 = vld [vmem:[%s4 + $0x130] sm:$0xff]
      %v820 = vld [vmem:[%s4 + $0x138] sm:$0xff]
      %v821 = vld [vmem:[%s4 + $0x140] sm:$0xff]
      %v822 = vld [vmem:[%s4 + $0x148] sm:$0xff]
      %v823 = vld [vmem:[%s4 + $0x150] sm:$0xff]
      %v824 = vld [vmem:[%s4 + $0x158] sm:$0xff]
      %v825 = vld [vmem:[%s4 + $0x160] sm:$0xff]
      %v826 = vld [vmem:[%s4 + $0x168] sm:$0xff]
      %v827 = vld [vmem:[%s4 + $0x170] sm:$0xff]
      %v828 = vld [vmem:[%s4 + $0x178] sm:$0xff]
      %v832 = vrot.slane %v637, 1
      %v833 = vrot.slane %v638, 1
      %v834 = vsel %vm667, %v832, %v833
      %v835 = vrot.slane %v639, 1
      %v836 = vsel %vm667, %v833, %v835
      %v839 = vrot.slane %v637, 2
      %v840 = vrot.slane %v638, 2
      %v841 = vsel %vm724, %v839, %v840
      %v842 = vrot.slane %v639, 2
      %v843 = vsel %vm724, %v840, %v842
      %s846 = scalar_lea.vmem %s4, 384
      %v847 = vld [vmem:[%s846] sm:$0xff]
      %v848 = vld [vmem:[%s846 + $0x8] sm:$0xff]
      %v849 = vld [vmem:[%s846 + $0x10] sm:$0xff]
      %v850 = vld [vmem:[%s846 + $0x18] sm:$0xff]
      %v851 = vld [vmem:[%s846 + $0x20] sm:$0xff]
      %v852 = vld [vmem:[%s846 + $0x28] sm:$0xff]
      %v853 = vld [vmem:[%s846 + $0x30] sm:$0xff]
      %v854 = vld [vmem:[%s846 + $0x38] sm:$0xff]
      %v855 = vld [vmem:[%s846 + $0x40] sm:$0xff]
      %v856 = vld [vmem:[%s846 + $0x48] sm:$0xff]
      %v857 = vld [vmem:[%s846 + $0x50] sm:$0xff]
      %v858 = vld [vmem:[%s846 + $0x58] sm:$0xff]
      %v859 = vld [vmem:[%s846 + $0x60] sm:$0xff]
      %v860 = vld [vmem:[%s846 + $0x68] sm:$0xff]
      %v861 = vld [vmem:[%s846 + $0x70] sm:$0xff]
      %v862 = vld [vmem:[%s846 + $0x78] sm:$0xff]
      %v863 = vld [vmem:[%s846 + $0x80] sm:$0xff]
      %v864 = vld [vmem:[%s846 + $0x88] sm:$0xff]
      %v865 = vld [vmem:[%s846 + $0x90] sm:$0xff]
      %v866 = vld [vmem:[%s846 + $0x98] sm:$0xff]
      %v867 = vld [vmem:[%s846 + $0xa0] sm:$0xff]
      %v868 = vld [vmem:[%s846 + $0xa8] sm:$0xff]
      %v869 = vld [vmem:[%s846 + $0xb0] sm:$0xff]
      %v870 = vld [vmem:[%s846 + $0xb8] sm:$0xff]
      %v871 = vld [vmem:[%s846 + $0xc0] sm:$0xff]
      %v872 = vld [vmem:[%s846 + $0xc8] sm:$0xff]
      %v873 = vld [vmem:[%s846 + $0xd0] sm:$0xff]
      %v874 = vld [vmem:[%s846 + $0xd8] sm:$0xff]
      %v875 = vld [vmem:[%s846 + $0xe0] sm:$0xff]
      %v876 = vld [vmem:[%s846 + $0xe8] sm:$0xff]
      %v877 = vld [vmem:[%s846 + $0xf0] sm:$0xff]
      %v878 = vld [vmem:[%s846 + $0xf8] sm:$0xff]
      %v879 = vld [vmem:[%s846 + $0x100] sm:$0xff]
      %v880 = vld [vmem:[%s846 + $0x108] sm:$0xff]
      %v881 = vld [vmem:[%s846 + $0x110] sm:$0xff]
      %v882 = vld [vmem:[%s846 + $0x118] sm:$0xff]
      %v883 = vld [vmem:[%s846 + $0x120] sm:$0xff]
      %v884 = vld [vmem:[%s846 + $0x128] sm:$0xff]
      %v885 = vld [vmem:[%s846 + $0x130] sm:$0xff]
      %v886 = vld [vmem:[%s846 + $0x138] sm:$0xff]
      %v887 = vld [vmem:[%s846 + $0x140] sm:$0xff]
      %v888 = vld [vmem:[%s846 + $0x148] sm:$0xff]
      %v889 = vld [vmem:[%s846 + $0x150] sm:$0xff]
      %v890 = vld [vmem:[%s846 + $0x158] sm:$0xff]
      %v891 = vld [vmem:[%s846 + $0x160] sm:$0xff]
      %v892 = vld [vmem:[%s846 + $0x168] sm:$0xff]
      %v893 = vld [vmem:[%s846 + $0x170] sm:$0xff]
      %v894 = vld [vmem:[%s846 + $0x178] sm:$0xff]
      %895 = vmatprep.subr.mxu0 0.0
      %896 = vmatpush1.msra.mxu0 %v862
      %897 = vmatprep.subr.mxu0 0.0
      %898 = vmatpush1.msra.mxu0 %v861
      %899 = vmatprep.subr.mxu0 0.0
      %900 = vmatpush1.msra.mxu0 %v860
      %901 = vmatprep.subr.mxu0 0.0
      %902 = vmatpush1.msra.mxu0 %v859
      %903 = vmatprep.subr.mxu0 0.0
      %904 = vmatpush1.msra.mxu0 %v858
      %905 = vmatprep.subr.mxu0 0.0
      %906 = vmatpush1.msra.mxu0 %v857
      %907 = vmatprep.subr.mxu0 0.0
      %908 = vmatpush1.msra.mxu0 %v856
      %909 = vmatprep.subr.mxu0 0.0
      %910 = vmatpush1.msra.mxu0 %v855
      %911 = vmatprep.subr.mxu0 0.0
      %912 = vmatpush1.msra.mxu0 %v854
      %913 = vmatprep.subr.mxu0 0.0
      %914 = vmatpush1.msra.mxu0 %v853
      %915 = vmatprep.subr.mxu0 0.0
      %916 = vmatpush1.msra.mxu0 %v852
      %917 = vmatprep.subr.mxu0 0.0
      %918 = vmatpush1.msra.mxu0 %v851
      %919 = vmatprep.subr.mxu0 0.0
      %920 = vmatpush1.msra.mxu0 %v850
      %921 = vmatprep.subr.mxu0 0.0
      %922 = vmatpush1.msra.mxu0 %v849
      %923 = vmatprep.subr.mxu0 0.0
      %924 = vmatpush1.msra.mxu0 %v848
      %925 = vmatprep.subr.mxu0 0.0
      %926 = vmatpush1.msra.mxu0 %v847
      %927 = vmatprep.subr.mxu0 0.0
      %928 = vmatpush2.msra.mxu0 %v878
      %929 = vmatprep.subr.mxu0 0.0
      %930 = vmatpush2.msra.mxu0 %v877
      %931 = vmatprep.subr.mxu0 0.0
      %932 = vmatpush2.msra.mxu0 %v876
      %933 = vmatprep.subr.mxu0 0.0
      %934 = vmatpush2.msra.mxu0 %v875
      %935 = vmatprep.subr.mxu0 0.0
      %936 = vmatpush2.msra.mxu0 %v874
      %937 = vmatprep.subr.mxu0 0.0
      %938 = vmatpush2.msra.mxu0 %v873
      %939 = vmatprep.subr.mxu0 0.0
      %940 = vmatpush2.msra.mxu0 %v872
      %941 = vmatprep.subr.mxu0 0.0
      %942 = vmatpush2.msra.mxu0 %v871
      %943 = vmatprep.subr.mxu0 0.0
      %944 = vmatpush2.msra.mxu0 %v870
      %945 = vmatprep.subr.mxu0 0.0
      %946 = vmatpush2.msra.mxu0 %v869
      %947 = vmatprep.subr.mxu0 0.0
      %948 = vmatpush2.msra.mxu0 %v868
      %949 = vmatprep.subr.mxu0 0.0
      %950 = vmatpush2.msra.mxu0 %v867
      %951 = vmatprep.subr.mxu0 0.0
      %952 = vmatpush2.msra.mxu0 %v866
      %953 = vmatprep.subr.mxu0 0.0
      %954 = vmatpush2.msra.mxu0 %v865
      %955 = vmatprep.subr.mxu0 0.0
      %956 = vmatpush2.msra.mxu0 %v864
      %957 = vmatprep.subr.mxu0 0.0
      %958 = vmatpush2.msra.mxu0 %v863
      %959 = vmatprep.mubr.f32.mxu0 %v675
      %960 = vmatmul.mubr.f32.gmra.mxu0 %v616
      %v961 = vpop.f32.mrf.mxu0
      %v962 = vadd.f32 0.0, %v961
      %v963 = vpop.f32.mrf.mxu0
      %964 = vmatprep.mubr.f32.mxu0 %v677
      %965 = vmatmul.mubr.f32.gmra.mxu0 %v617
      %v966 = vpop.f32.mrf.mxu0
      %v967 = vadd.f32 0.0, %v966
      %v968 = vpop.f32.mrf.mxu0
      %969 = vmatprep.mubr.f32.mxu0 %v680
      %970 = vmatmul.mubr.f32.gmra.mxu0 %v619
      %v971 = vpop.f32.mrf.mxu0
      %v972 = vadd.f32 0.0, %v971
      %v973 = vpop.f32.mrf.mxu0
      %974 = vmatprep.mubr.f32.mxu0 %v682
      %975 = vmatmul.mubr.f32.gmra.mxu0 %v620
      %v976 = vpop.f32.mrf.mxu0
      %v977 = vadd.f32 0.0, %v976
      %v978 = vpop.f32.mrf.mxu0
      %979 = vmatprep.mubr.f32.mxu0 %v685
      %980 = vmatmul.mubr.f32.gmra.mxu0 %v622
      %v981 = vpop.f32.mrf.mxu0
      %v982 = vadd.f32 0.0, %v981
      %v983 = vpop.f32.mrf.mxu0
      %984 = vmatprep.mubr.f32.mxu0 %v687
      %985 = vmatmul.mubr.f32.gmra.mxu0 %v623
      %v986 = vpop.f32.mrf.mxu0
      %v987 = vadd.f32 0.0, %v986
      %v988 = vpop.f32.mrf.mxu0
      %989 = vmatprep.mubr.f32.mxu0 %v690
      %990 = vmatmul.mubr.f32.gmra.mxu0 %v625
      %v991 = vpop.f32.mrf.mxu0
      %v992 = vadd.f32 0.0, %v991
      %v993 = vpop.f32.mrf.mxu0
      %994 = vmatprep.mubr.f32.mxu0 %v692
      %995 = vmatmul.mubr.f32.gmra.mxu0 %v626
      %v996 = vpop.f32.mrf.mxu0
      %v997 = vadd.f32 0.0, %v996
      %v998 = vpop.f32.mrf.mxu0
      %999 = vmatprep.mubr.f32.mxu0 %v695
      %1000 = vmatmul.mubr.f32.gmra.mxu0 %v628
      %v1001 = vpop.f32.mrf.mxu0
      %v1002 = vadd.f32 0.0, %v1001
      %v1003 = vpop.f32.mrf.mxu0
      %1004 = vmatprep.mubr.f32.mxu0 %v697
      %1005 = vmatmul.mubr.f32.gmra.mxu0 %v629
      %v1006 = vpop.f32.mrf.mxu0
      %v1007 = vadd.f32 0.0, %v1006
      %v1008 = vpop.f32.mrf.mxu0
      %1009 = vmatprep.mubr.f32.mxu0 %v700
      %1010 = vmatmul.mubr.f32.gmra.mxu0 %v631
      %v1011 = vpop.f32.mrf.mxu0
      %v1012 = vadd.f32 0.0, %v1011
      %v1013 = vpop.f32.mrf.mxu0
      %1014 = vmatprep.mubr.f32.mxu0 %v702
      %1015 = vmatmul.mubr.f32.gmra.mxu0 %v632
      %v1016 = vpop.f32.mrf.mxu0
      %v1017 = vadd.f32 0.0, %v1016
      %v1018 = vpop.f32.mrf.mxu0
      %1019 = vmatprep.mubr.f32.mxu0 %v705
      %1020 = vmatmul.mubr.f32.gmra.mxu0 %v634
      %v1021 = vpop.f32.mrf.mxu0
      %v1022 = vadd.f32 0.0, %v1021
      %v1023 = vpop.f32.mrf.mxu0
      %1024 = vmatprep.mubr.f32.mxu0 %v707
      %1025 = vmatmul.mubr.f32.gmra.mxu0 %v635
      %v1026 = vpop.f32.mrf.mxu0
      %v1027 = vadd.f32 0.0, %v1026
      %v1028 = vpop.f32.mrf.mxu0
      %1029 = vmatprep.mubr.f32.mxu0 %v834
      %1030 = vmatmul.mubr.f32.gmra.mxu0 %v637
      %v1031 = vpop.f32.mrf.mxu0
      %v1032 = vadd.f32 0.0, %v1031
      %v1033 = vpop.f32.mrf.mxu0
      %1034 = vmatprep.mubr.f32.mxu0 %v836
      %1035 = vmatmul.mubr.f32.gmra.mxu0 %v638
      %v1036 = vpop.f32.mrf.mxu0
      %v1037 = vadd.f32 0.0, %v1036
      %v1038 = vpop.f32.mrf.mxu0
      %1039 = vdwg.mxu0
      %1040 = vmatprep.subr.mxu0 0.0
      %1041 = vmatpush1.msra.mxu0 %v894
      %1042 = vmatprep.subr.mxu0 0.0
      %1043 = vmatpush1.msra.mxu0 %v893
      %1044 = vmatprep.subr.mxu0 0.0
      %1045 = vmatpush1.msra.mxu0 %v892
      %1046 = vmatprep.subr.mxu0 0.0
      %1047 = vmatpush1.msra.mxu0 %v891
      %1048 = vmatprep.subr.mxu0 0.0
      %1049 = vmatpush1.msra.mxu0 %v890
      %1050 = vmatprep.subr.mxu0 0.0
      %1051 = vmatpush1.msra.mxu0 %v889
      %1052 = vmatprep.subr.mxu0 0.0
      %1053 = vmatpush1.msra.mxu0 %v888
      %1054 = vmatprep.subr.mxu0 0.0
      %1055 = vmatpush1.msra.mxu0 %v887
      %1056 = vmatprep.subr.mxu0 0.0
      %1057 = vmatpush1.msra.mxu0 %v886
      %1058 = vmatprep.subr.mxu0 0.0
      %1059 = vmatpush1.msra.mxu0 %v885
      %1060 = vmatprep.subr.mxu0 0.0
      %1061 = vmatpush1.msra.mxu0 %v884
      %1062 = vmatprep.subr.mxu0 0.0
      %1063 = vmatpush1.msra.mxu0 %v883
      %1064 = vmatprep.subr.mxu0 0.0
      %1065 = vmatpush1.msra.mxu0 %v882
      %1066 = vmatprep.subr.mxu0 0.0
      %1067 = vmatpush1.msra.mxu0 %v881
      %1068 = vmatprep.subr.mxu0 0.0
      %1069 = vmatpush1.msra.mxu0 %v880
      %1070 = vmatprep.subr.mxu0 0.0
      %1071 = vmatpush1.msra.mxu0 %v879
      %1072 = vmatprep.subr.mxu0 0.0
      %1073 = vmatpush2.msra.mxu0 0.0
      %1074 = vmatprep.subr.mxu0 0.0
      %1075 = vmatpush2.msra.mxu0 0.0
      %1076 = vmatprep.subr.mxu0 0.0
      %1077 = vmatpush2.msra.mxu0 0.0
      %1078 = vmatprep.subr.mxu0 0.0
      %1079 = vmatpush2.msra.mxu0 0.0
      %1080 = vmatprep.subr.mxu0 0.0
      %1081 = vmatpush2.msra.mxu0 0.0
      %1082 = vmatprep.subr.mxu0 0.0
      %1083 = vmatpush2.msra.mxu0 0.0
      %1084 = vmatprep.subr.mxu0 0.0
      %1085 = vmatpush2.msra.mxu0 0.0
      %1086 = vmatprep.subr.mxu0 0.0
      %1087 = vmatpush2.msra.mxu0 0.0
      %1088 = vmatprep.subr.mxu0 0.0
      %1089 = vmatpush2.msra.mxu0 0.0
      %1090 = vmatprep.subr.mxu0 0.0
      %1091 = vmatpush2.msra.mxu0 0.0
      %1092 = vmatprep.subr.mxu0 0.0
      %1093 = vmatpush2.msra.mxu0 0.0
      %1094 = vmatprep.subr.mxu0 0.0
      %1095 = vmatpush2.msra.mxu0 0.0
      %1096 = vmatprep.subr.mxu0 0.0
      %1097 = vmatpush2.msra.mxu0 0.0
      %1098 = vmatprep.subr.mxu0 0.0
      %1099 = vmatpush2.msra.mxu0 0.0
      %1100 = vmatprep.subr.mxu0 0.0
      %1101 = vmatpush2.msra.mxu0 0.0
      %1102 = vmatprep.subr.mxu0 0.0
      %1103 = vmatpush2.msra.mxu0 0.0
      %1104 = vmatprep.mubr.f32.mxu0 0.0
      %1105 = vmatmul.mubr.f32.gmra.mxu0 %v732
      %v1106 = vpop.f32.mrf.mxu0
      %v1107 = vadd.f32 %v962, %v1106
      %v1108 = vpop.f32.mrf.mxu0
      %1109 = vmatprep.mubr.f32.mxu0 0.0
      %1110 = vmatmul.mubr.f32.gmra.mxu0 %v734
      %v1111 = vpop.f32.mrf.mxu0
      %v1112 = vadd.f32 %v967, %v1111
      %v1113 = vpop.f32.mrf.mxu0
      %1114 = vmatprep.mubr.f32.mxu0 0.0
      %1115 = vmatmul.mubr.f32.gmra.mxu0 %v737
      %v1116 = vpop.f32.mrf.mxu0
      %v1117 = vadd.f32 %v972, %v1116
      %v1118 = vpop.f32.mrf.mxu0
      %1119 = vmatprep.mubr.f32.mxu0 0.0
      %1120 = vmatmul.mubr.f32.gmra.mxu0 %v739
      %v1121 = vpop.f32.mrf.mxu0
      %v1122 = vadd.f32 %v977, %v1121
      %v1123 = vpop.f32.mrf.mxu0
      %1124 = vmatprep.mubr.f32.mxu0 0.0
      %1125 = vmatmul.mubr.f32.gmra.mxu0 %v742
      %v1126 = vpop.f32.mrf.mxu0
      %v1127 = vadd.f32 %v982, %v1126
      %v1128 = vpop.f32.mrf.mxu0
      %1129 = vmatprep.mubr.f32.mxu0 0.0
      %1130 = vmatmul.mubr.f32.gmra.mxu0 %v744
      %v1131 = vpop.f32.mrf.mxu0
      %v1132 = vadd.f32 %v987, %v1131
      %v1133 = vpop.f32.mrf.mxu0
      %1134 = vmatprep.mubr.f32.mxu0 0.0
      %1135 = vmatmul.mubr.f32.gmra.mxu0 %v747
      %v1136 = vpop.f32.mrf.mxu0
      %v1137 = vadd.f32 %v992, %v1136
      %v1138 = vpop.f32.mrf.mxu0
      %1139 = vmatprep.mubr.f32.mxu0 0.0
      %1140 = vmatmul.mubr.f32.gmra.mxu0 %v749
      %v1141 = vpop.f32.mrf.mxu0
      %v1142 = vadd.f32 %v997, %v1141
      %v1143 = vpop.f32.mrf.mxu0
      %1144 = vmatprep.mubr.f32.mxu0 0.0
      %1145 = vmatmul.mubr.f32.gmra.mxu0 %v752
      %v1146 = vpop.f32.mrf.mxu0
      %v1147 = vadd.f32 %v1002, %v1146
      %v1148 = vpop.f32.mrf.mxu0
      %1149 = vmatprep.mubr.f32.mxu0 0.0
      %1150 = vmatmul.mubr.f32.gmra.mxu0 %v754
      %v1151 = vpop.f32.mrf.mxu0
      %v1152 = vadd.f32 %v1007, %v1151
      %v1153 = vpop.f32.mrf.mxu0
      %1154 = vmatprep.mubr.f32.mxu0 0.0
      %1155 = vmatmul.mubr.f32.gmra.mxu0 %v757
      %v1156 = vpop.f32.mrf.mxu0
      %v1157 = vadd.f32 %v1012, %v1156
      %v1158 = vpop.f32.mrf.mxu0
      %1159 = vmatprep.mubr.f32.mxu0 0.0
      %1160 = vmatmul.mubr.f32.gmra.mxu0 %v759
      %v1161 = vpop.f32.mrf.mxu0
      %v1162 = vadd.f32 %v1017, %v1161
      %v1163 = vpop.f32.mrf.mxu0
      %1164 = vmatprep.mubr.f32.mxu0 0.0
      %1165 = vmatmul.mubr.f32.gmra.mxu0 %v762
      %v1166 = vpop.f32.mrf.mxu0
      %v1167 = vadd.f32 %v1022, %v1166
      %v1168 = vpop.f32.mrf.mxu0
      %1169 = vmatprep.mubr.f32.mxu0 0.0
      %1170 = vmatmul.mubr.f32.gmra.mxu0 %v764
      %v1171 = vpop.f32.mrf.mxu0
      %v1172 = vadd.f32 %v1027, %v1171
      %v1173 = vpop.f32.mrf.mxu0
      %1174 = vmatprep.mubr.f32.mxu0 0.0
      %1175 = vmatmul.mubr.f32.gmra.mxu0 %v841
      %v1176 = vpop.f32.mrf.mxu0
      %v1177 = vadd.f32 %v1032, %v1176
      %v1178 = vpop.f32.mrf.mxu0
      %1179 = vmatprep.mubr.f32.mxu0 0.0
      %1180 = vmatmul.mubr.f32.gmra.mxu0 %v843
      %v1181 = vpop.f32.mrf.mxu0
      %v1182 = vadd.f32 %v1037, %v1181
      %v1183 = vpop.f32.mrf.mxu0
      %1184 = vdwg.mxu0
      %1185 = vmatprep.subr.mxu0 0.0
      %1186 = vmatpush1.msra.mxu0 %v796
      %1187 = vmatprep.subr.mxu0 0.0
      %1188 = vmatpush1.msra.mxu0 %v795
      %1189 = vmatprep.subr.mxu0 0.0
      %1190 = vmatpush1.msra.mxu0 %v794
      %1191 = vmatprep.subr.mxu0 0.0
      %1192 = vmatpush1.msra.mxu0 %v793
      %1193 = vmatprep.subr.mxu0 0.0
      %1194 = vmatpush1.msra.mxu0 %v792
      %1195 = vmatprep.subr.mxu0 0.0
      %1196 = vmatpush1.msra.mxu0 %v791
      %1197 = vmatprep.subr.mxu0 0.0
      %1198 = vmatpush1.msra.mxu0 %v790
      %1199 = vmatprep.subr.mxu0 0.0
      %1200 = vmatpush1.msra.mxu0 %v789
      %1201 = vmatprep.subr.mxu0 0.0
      %1202 = vmatpush1.msra.mxu0 %v788
      %1203 = vmatprep.subr.mxu0 0.0
      %1204 = vmatpush1.msra.mxu0 %v787
      %1205 = vmatprep.subr.mxu0 0.0
      %1206 = vmatpush1.msra.mxu0 %v786
      %1207 = vmatprep.subr.mxu0 0.0
      %1208 = vmatpush1.msra.mxu0 %v785
      %1209 = vmatprep.subr.mxu0 0.0
      %1210 = vmatpush1.msra.mxu0 %v784
      %1211 = vmatprep.subr.mxu0 0.0
      %1212 = vmatpush1.msra.mxu0 %v783
      %1213 = vmatprep.subr.mxu0 0.0
      %1214 = vmatpush1.msra.mxu0 %v782
      %1215 = vmatprep.subr.mxu0 0.0
      %1216 = vmatpush1.msra.mxu0 %v781
      %1217 = vmatprep.subr.mxu0 0.0
      %1218 = vmatpush2.msra.mxu0 %v812
      %1219 = vmatprep.subr.mxu0 0.0
      %1220 = vmatpush2.msra.mxu0 %v811
      %1221 = vmatprep.subr.mxu0 0.0
      %1222 = vmatpush2.msra.mxu0 %v810
      %1223 = vmatprep.subr.mxu0 0.0
      %1224 = vmatpush2.msra.mxu0 %v809
      %1225 = vmatprep.subr.mxu0 0.0
      %1226 = vmatpush2.msra.mxu0 %v808
      %1227 = vmatprep.subr.mxu0 0.0
      %1228 = vmatpush2.msra.mxu0 %v807
      %1229 = vmatprep.subr.mxu0 0.0
      %1230 = vmatpush2.msra.mxu0 %v806
      %1231 = vmatprep.subr.mxu0 0.0
      %1232 = vmatpush2.msra.mxu0 %v805
      %1233 = vmatprep.subr.mxu0 0.0
      %1234 = vmatpush2.msra.mxu0 %v804
      %1235 = vmatprep.subr.mxu0 0.0
      %1236 = vmatpush2.msra.mxu0 %v803
      %1237 = vmatprep.subr.mxu0 0.0
      %1238 = vmatpush2.msra.mxu0 %v802
      %1239 = vmatprep.subr.mxu0 0.0
      %1240 = vmatpush2.msra.mxu0 %v801
      %1241 = vmatprep.subr.mxu0 0.0
      %1242 = vmatpush2.msra.mxu0 %v800
      %1243 = vmatprep.subr.mxu0 0.0
      %1244 = vmatpush2.msra.mxu0 %v799
      %1245 = vmatprep.subr.mxu0 0.0
      %1246 = vmatpush2.msra.mxu0 %v798
      %1247 = vmatprep.subr.mxu0 0.0
      %1248 = vmatpush2.msra.mxu0 %v797
      %1249 = vmatprep.mubr.f32.mxu0 %v670
      %1250 = vmatmul.mubr.f32.gmra.mxu0 %v613
      %v1251 = vpop.f32.mrf.mxu0
      %v1252 = vadd.f32 %v1107, %v1251
      %v1253 = vpop.f32.mrf.mxu0
      %1254 = vmatprep.mubr.f32.mxu0 %v672
      %1255 = vmatmul.mubr.f32.gmra.mxu0 %v614
      %v1256 = vpop.f32.mrf.mxu0
      %v1257 = vadd.f32 %v1112, %v1256
      %v1258 = vpop.f32.mrf.mxu0
      %1259 = vmatprep.mubr.f32.mxu0 %v675
      %1260 = vmatmul.mubr.f32.gmra.mxu0 %v616
      %v1261 = vpop.f32.mrf.mxu0
      %v1262 = vadd.f32 %v1117, %v1261
      %v1263 = vpop.f32.mrf.mxu0
      %1264 = vmatprep.mubr.f32.mxu0 %v677
      %1265 = vmatmul.mubr.f32.gmra.mxu0 %v617
      %v1266 = vpop.f32.mrf.mxu0
      %v1267 = vadd.f32 %v1122, %v1266
      %v1268 = vpop.f32.mrf.mxu0
      %1269 = vmatprep.mubr.f32.mxu0 %v680
      %1270 = vmatmul.mubr.f32.gmra.mxu0 %v619
      %v1271 = vpop.f32.mrf.mxu0
      %v1272 = vadd.f32 %v1127, %v1271
      %v1273 = vpop.f32.mrf.mxu0
      %1274 = vmatprep.mubr.f32.mxu0 %v682
      %1275 = vmatmul.mubr.f32.gmra.mxu0 %v620
      %v1276 = vpop.f32.mrf.mxu0
      %v1277 = vadd.f32 %v1132, %v1276
      %v1278 = vpop.f32.mrf.mxu0
      %1279 = vmatprep.mubr.f32.mxu0 %v685
      %1280 = vmatmul.mubr.f32.gmra.mxu0 %v622
      %v1281 = vpop.f32.mrf.mxu0
      %v1282 = vadd.f32 %v1137, %v1281
      %v1283 = vpop.f32.mrf.mxu0
      %1284 = vmatprep.mubr.f32.mxu0 %v687
      %1285 = vmatmul.mubr.f32.gmra.mxu0 %v623
      %v1286 = vpop.f32.mrf.mxu0
      %v1287 = vadd.f32 %v1142, %v1286
      %v1288 = vpop.f32.mrf.mxu0
      %1289 = vmatprep.mubr.f32.mxu0 %v690
      %1290 = vmatmul.mubr.f32.gmra.mxu0 %v625
      %v1291 = vpop.f32.mrf.mxu0
      %v1292 = vadd.f32 %v1147, %v1291
      %v1293 = vpop.f32.mrf.mxu0
      %1294 = vmatprep.mubr.f32.mxu0 %v692
      %1295 = vmatmul.mubr.f32.gmra.mxu0 %v626
      %v1296 = vpop.f32.mrf.mxu0
      %v1297 = vadd.f32 %v1152, %v1296
      %v1298 = vpop.f32.mrf.mxu0
      %1299 = vmatprep.mubr.f32.mxu0 %v695
      %1300 = vmatmul.mubr.f32.gmra.mxu0 %v628
      %v1301 = vpop.f32.mrf.mxu0
      %v1302 = vadd.f32 %v1157, %v1301
      %v1303 = vpop.f32.mrf.mxu0
      %1304 = vmatprep.mubr.f32.mxu0 %v697
      %1305 = vmatmul.mubr.f32.gmra.mxu0 %v629
      %v1306 = vpop.f32.mrf.mxu0
      %v1307 = vadd.f32 %v1162, %v1306
      %v1308 = vpop.f32.mrf.mxu0
      %1309 = vmatprep.mubr.f32.mxu0 %v700
      %1310 = vmatmul.mubr.f32.gmra.mxu0 %v631
      %v1311 = vpop.f32.mrf.mxu0
      %v1312 = vadd.f32 %v1167, %v1311
      %v1313 = vpop.f32.mrf.mxu0
      %1314 = vmatprep.mubr.f32.mxu0 %v702
      %1315 = vmatmul.mubr.f32.gmra.mxu0 %v632
      %v1316 = vpop.f32.mrf.mxu0
      %v1317 = vadd.f32 %v1172, %v1316
      %v1318 = vpop.f32.mrf.mxu0
      %1319 = vmatprep.mubr.f32.mxu0 %v705
      %1320 = vmatmul.mubr.f32.gmra.mxu0 %v634
      %v1321 = vpop.f32.mrf.mxu0
      %v1322 = vadd.f32 %v1177, %v1321
      %v1323 = vpop.f32.mrf.mxu0
      %1324 = vmatprep.mubr.f32.mxu0 %v707
      %1325 = vmatmul.mubr.f32.gmra.mxu0 %v635
      %v1326 = vpop.f32.mrf.mxu0
      %v1327 = vadd.f32 %v1182, %v1326
      %v1328 = vpop.f32.mrf.mxu0
      %1329 = vdwg.mxu0
      %1330 = vmatprep.subr.mxu0 0.0
      %1331 = vmatpush1.msra.mxu0 %v828
      %1332 = vmatprep.subr.mxu0 0.0
      %1333 = vmatpush1.msra.mxu0 %v827
      %1334 = vmatprep.subr.mxu0 0.0
      %1335 = vmatpush1.msra.mxu0 %v826
      %1336 = vmatprep.subr.mxu0 0.0
      %1337 = vmatpush1.msra.mxu0 %v825
      %1338 = vmatprep.subr.mxu0 0.0
      %1339 = vmatpush1.msra.mxu0 %v824
      %1340 = vmatprep.subr.mxu0 0.0
      %1341 = vmatpush1.msra.mxu0 %v823
      %1342 = vmatprep.subr.mxu0 0.0
      %1343 = vmatpush1.msra.mxu0 %v822
      %1344 = vmatprep.subr.mxu0 0.0
      %1345 = vmatpush1.msra.mxu0 %v821
      %1346 = vmatprep.subr.mxu0 0.0
      %1347 = vmatpush1.msra.mxu0 %v820
      %1348 = vmatprep.subr.mxu0 0.0
      %1349 = vmatpush1.msra.mxu0 %v819
      %1350 = vmatprep.subr.mxu0 0.0
      %1351 = vmatpush1.msra.mxu0 %v818
      %1352 = vmatprep.subr.mxu0 0.0
      %1353 = vmatpush1.msra.mxu0 %v817
      %1354 = vmatprep.subr.mxu0 0.0
      %1355 = vmatpush1.msra.mxu0 %v816
      %1356 = vmatprep.subr.mxu0 0.0
      %1357 = vmatpush1.msra.mxu0 %v815
      %1358 = vmatprep.subr.mxu0 0.0
      %1359 = vmatpush1.msra.mxu0 %v814
      %1360 = vmatprep.subr.mxu0 0.0
      %1361 = vmatpush1.msra.mxu0 %v813
      %1362 = vmatprep.subr.mxu0 0.0
      %1363 = vmatpush2.msra.mxu0 0.0
      %1364 = vmatprep.subr.mxu0 0.0
      %1365 = vmatpush2.msra.mxu0 0.0
      %1366 = vmatprep.subr.mxu0 0.0
      %1367 = vmatpush2.msra.mxu0 0.0
      %1368 = vmatprep.subr.mxu0 0.0
      %1369 = vmatpush2.msra.mxu0 0.0
      %1370 = vmatprep.subr.mxu0 0.0
      %1371 = vmatpush2.msra.mxu0 0.0
      %1372 = vmatprep.subr.mxu0 0.0
      %1373 = vmatpush2.msra.mxu0 0.0
      %1374 = vmatprep.subr.mxu0 0.0
      %1375 = vmatpush2.msra.mxu0 0.0
      %1376 = vmatprep.subr.mxu0 0.0
      %1377 = vmatpush2.msra.mxu0 0.0
      %1378 = vmatprep.subr.mxu0 0.0
      %1379 = vmatpush2.msra.mxu0 0.0
      %1380 = vmatprep.subr.mxu0 0.0
      %1381 = vmatpush2.msra.mxu0 0.0
      %1382 = vmatprep.subr.mxu0 0.0
      %1383 = vmatpush2.msra.mxu0 0.0
      %1384 = vmatprep.subr.mxu0 0.0
      %1385 = vmatpush2.msra.mxu0 0.0
      %1386 = vmatprep.subr.mxu0 0.0
      %1387 = vmatpush2.msra.mxu0 0.0
      %1388 = vmatprep.subr.mxu0 0.0
      %1389 = vmatpush2.msra.mxu0 0.0
      %1390 = vmatprep.subr.mxu0 0.0
      %1391 = vmatpush2.msra.mxu0 0.0
      %1392 = vmatprep.subr.mxu0 0.0
      %1393 = vmatpush2.msra.mxu0 0.0
      %1394 = vmatprep.mubr.f32.mxu0 0.0
      %1395 = vmatmul.mubr.f32.gmra.mxu0 %v727
      %v1396 = vpop.f32.mrf.mxu0
      %v1397 = vadd.f32 %v1252, %v1396
      %v1398 = vpop.f32.mrf.mxu0
      %1399 = vmatprep.mubr.f32.mxu0 0.0
      %1400 = vmatmul.mubr.f32.gmra.mxu0 %v729
      %v1401 = vpop.f32.mrf.mxu0
      %v1402 = vadd.f32 %v1257, %v1401
      %v1403 = vpop.f32.mrf.mxu0
      %1404 = vmatprep.mubr.f32.mxu0 0.0
      %1405 = vmatmul.mubr.f32.gmra.mxu0 %v732
      %v1406 = vpop.f32.mrf.mxu0
      %v1407 = vadd.f32 %v1262, %v1406
      %v1408 = vpop.f32.mrf.mxu0
      %1409 = vmatprep.mubr.f32.mxu0 0.0
      %1410 = vmatmul.mubr.f32.gmra.mxu0 %v734
      %v1411 = vpop.f32.mrf.mxu0
      %v1412 = vadd.f32 %v1267, %v1411
      %v1413 = vpop.f32.mrf.mxu0
      %1414 = vmatprep.mubr.f32.mxu0 0.0
      %1415 = vmatmul.mubr.f32.gmra.mxu0 %v737
      %v1416 = vpop.f32.mrf.mxu0
      %v1417 = vadd.f32 %v1272, %v1416
      %v1418 = vpop.f32.mrf.mxu0
      %1419 = vmatprep.mubr.f32.mxu0 0.0
      %1420 = vmatmul.mubr.f32.gmra.mxu0 %v739
      %v1421 = vpop.f32.mrf.mxu0
      %v1422 = vadd.f32 %v1277, %v1421
      %v1423 = vpop.f32.mrf.mxu0
      %1424 = vmatprep.mubr.f32.mxu0 0.0
      %1425 = vmatmul.mubr.f32.gmra.mxu0 %v742
      %v1426 = vpop.f32.mrf.mxu0
      %v1427 = vadd.f32 %v1282, %v1426
      %v1428 = vpop.f32.mrf.mxu0
      %1429 = vmatprep.mubr.f32.mxu0 0.0
      %1430 = vmatmul.mubr.f32.gmra.mxu0 %v744
      %v1431 = vpop.f32.mrf.mxu0
      %v1432 = vadd.f32 %v1287, %v1431
      %v1433 = vpop.f32.mrf.mxu0
      %1434 = vmatprep.mubr.f32.mxu0 0.0
      %1435 = vmatmul.mubr.f32.gmra.mxu0 %v747
      %v1436 = vpop.f32.mrf.mxu0
      %v1437 = vadd.f32 %v1292, %v1436
      %v1438 = vpop.f32.mrf.mxu0
      %1439 = vmatprep.mubr.f32.mxu0 0.0
      %1440 = vmatmul.mubr.f32.gmra.mxu0 %v749
      %v1441 = vpop.f32.mrf.mxu0
      %v1442 = vadd.f32 %v1297, %v1441
      %v1443 = vpop.f32.mrf.mxu0
      %1444 = vmatprep.mubr.f32.mxu0 0.0
      %1445 = vmatmul.mubr.f32.gmra.mxu0 %v752
      %v1446 = vpop.f32.mrf.mxu0
      %v1447 = vadd.f32 %v1302, %v1446
      %v1448 = vpop.f32.mrf.mxu0
      %1449 = vmatprep.mubr.f32.mxu0 0.0
      %1450 = vmatmul.mubr.f32.gmra.mxu0 %v754
      %v1451 = vpop.f32.mrf.mxu0
      %v1452 = vadd.f32 %v1307, %v1451
      %v1453 = vpop.f32.mrf.mxu0
      %1454 = vmatprep.mubr.f32.mxu0 0.0
      %1455 = vmatmul.mubr.f32.gmra.mxu0 %v757
      %v1456 = vpop.f32.mrf.mxu0
      %v1457 = vadd.f32 %v1312, %v1456
      %v1458 = vpop.f32.mrf.mxu0
      %1459 = vmatprep.mubr.f32.mxu0 0.0
      %1460 = vmatmul.mubr.f32.gmra.mxu0 %v759
      %v1461 = vpop.f32.mrf.mxu0
      %v1462 = vadd.f32 %v1317, %v1461
      %v1463 = vpop.f32.mrf.mxu0
      %1464 = vmatprep.mubr.f32.mxu0 0.0
      %1465 = vmatmul.mubr.f32.gmra.mxu0 %v762
      %v1466 = vpop.f32.mrf.mxu0
      %v1467 = vadd.f32 %v1322, %v1466
      %v1468 = vpop.f32.mrf.mxu0
      %1469 = vmatprep.mubr.f32.mxu0 0.0
      %1470 = vmatmul.mubr.f32.gmra.mxu0 %v764
      %v1471 = vpop.f32.mrf.mxu0
      %v1472 = vadd.f32 %v1327, %v1471
      %v1473 = vpop.f32.mrf.mxu0
      %1474 = vdwg.mxu0
      %v1478 = vrot.slane %v640, 1
      %v1479 = vrot.slane %v641, 1
      %v1480 = vsel %vm667, %v1478, %v1479
      %v1481 = vrot.slane %v642, 1
      %v1482 = vsel %vm667, %v1479, %v1481
      %v1485 = vrot.slane %v640, 2
      %v1486 = vrot.slane %v641, 2
      %v1487 = vsel %vm724, %v1485, %v1486
      %v1488 = vrot.slane %v642, 2
      %v1489 = vsel %vm724, %v1486, %v1488
      %s1492 = scalar_lea.vmem %s4, 768
      %v1493 = vld [vmem:[%s1492] sm:$0xff]
      %v1494 = vld [vmem:[%s1492 + $0x8] sm:$0xff]
      %v1495 = vld [vmem:[%s1492 + $0x10] sm:$0xff]
      %v1496 = vld [vmem:[%s1492 + $0x18] sm:$0xff]
      %v1497 = vld [vmem:[%s1492 + $0x20] sm:$0xff]
      %v1498 = vld [vmem:[%s1492 + $0x28] sm:$0xff]
      %v1499 = vld [vmem:[%s1492 + $0x30] sm:$0xff]
      %v1500 = vld [vmem:[%s1492 + $0x38] sm:$0xff]
      %v1501 = vld [vmem:[%s1492 + $0x40] sm:$0xff]
      %v1502 = vld [vmem:[%s1492 + $0x48] sm:$0xff]
      %v1503 = vld [vmem:[%s1492 + $0x50] sm:$0xff]
      %v1504 = vld [vmem:[%s1492 + $0x58] sm:$0xff]
      %v1505 = vld [vmem:[%s1492 + $0x60] sm:$0xff]
      %v1506 = vld [vmem:[%s1492 + $0x68] sm:$0xff]
      %v1507 = vld [vmem:[%s1492 + $0x70] sm:$0xff]
      %v1508 = vld [vmem:[%s1492 + $0x78] sm:$0xff]
      %v1509 = vld [vmem:[%s1492 + $0x80] sm:$0xff]
      %v1510 = vld [vmem:[%s1492 + $0x88] sm:$0xff]
      %v1511 = vld [vmem:[%s1492 + $0x90] sm:$0xff]
      %v1512 = vld [vmem:[%s1492 + $0x98] sm:$0xff]
      %v1513 = vld [vmem:[%s1492 + $0xa0] sm:$0xff]
      %v1514 = vld [vmem:[%s1492 + $0xa8] sm:$0xff]
      %v1515 = vld [vmem:[%s1492 + $0xb0] sm:$0xff]
      %v1516 = vld [vmem:[%s1492 + $0xb8] sm:$0xff]
      %v1517 = vld [vmem:[%s1492 + $0xc0] sm:$0xff]
      %v1518 = vld [vmem:[%s1492 + $0xc8] sm:$0xff]
      %v1519 = vld [vmem:[%s1492 + $0xd0] sm:$0xff]
      %v1520 = vld [vmem:[%s1492 + $0xd8] sm:$0xff]
      %v1521 = vld [vmem:[%s1492 + $0xe0] sm:$0xff]
      %v1522 = vld [vmem:[%s1492 + $0xe8] sm:$0xff]
      %v1523 = vld [vmem:[%s1492 + $0xf0] sm:$0xff]
      %v1524 = vld [vmem:[%s1492 + $0xf8] sm:$0xff]
      %v1525 = vld [vmem:[%s1492 + $0x100] sm:$0xff]
      %v1526 = vld [vmem:[%s1492 + $0x108] sm:$0xff]
      %v1527 = vld [vmem:[%s1492 + $0x110] sm:$0xff]
      %v1528 = vld [vmem:[%s1492 + $0x118] sm:$0xff]
      %v1529 = vld [vmem:[%s1492 + $0x120] sm:$0xff]
      %v1530 = vld [vmem:[%s1492 + $0x128] sm:$0xff]
      %v1531 = vld [vmem:[%s1492 + $0x130] sm:$0xff]
      %v1532 = vld [vmem:[%s1492 + $0x138] sm:$0xff]
      %v1533 = vld [vmem:[%s1492 + $0x140] sm:$0xff]
      %v1534 = vld [vmem:[%s1492 + $0x148] sm:$0xff]
      %v1535 = vld [vmem:[%s1492 + $0x150] sm:$0xff]
      %v1536 = vld [vmem:[%s1492 + $0x158] sm:$0xff]
      %v1537 = vld [vmem:[%s1492 + $0x160] sm:$0xff]
      %v1538 = vld [vmem:[%s1492 + $0x168] sm:$0xff]
      %v1539 = vld [vmem:[%s1492 + $0x170] sm:$0xff]
      %v1540 = vld [vmem:[%s1492 + $0x178] sm:$0xff]
      %1541 = vmatprep.subr.mxu0 0.0
      %1542 = vmatpush1.msra.mxu0 %v1508
      %1543 = vmatprep.subr.mxu0 0.0
      %1544 = vmatpush1.msra.mxu0 %v1507
      %1545 = vmatprep.subr.mxu0 0.0
      %1546 = vmatpush1.msra.mxu0 %v1506
      %1547 = vmatprep.subr.mxu0 0.0
      %1548 = vmatpush1.msra.mxu0 %v1505
      %1549 = vmatprep.subr.mxu0 0.0
      %1550 = vmatpush1.msra.mxu0 %v1504
      %1551 = vmatprep.subr.mxu0 0.0
      %1552 = vmatpush1.msra.mxu0 %v1503
      %1553 = vmatprep.subr.mxu0 0.0
      %1554 = vmatpush1.msra.mxu0 %v1502
      %1555 = vmatprep.subr.mxu0 0.0
      %1556 = vmatpush1.msra.mxu0 %v1501
      %1557 = vmatprep.subr.mxu0 0.0
      %1558 = vmatpush1.msra.mxu0 %v1500
      %1559 = vmatprep.subr.mxu0 0.0
      %1560 = vmatpush1.msra.mxu0 %v1499
      %1561 = vmatprep.subr.mxu0 0.0
      %1562 = vmatpush1.msra.mxu0 %v1498
      %1563 = vmatprep.subr.mxu0 0.0
      %1564 = vmatpush1.msra.mxu0 %v1497
      %1565 = vmatprep.subr.mxu0 0.0
      %1566 = vmatpush1.msra.mxu0 %v1496
      %1567 = vmatprep.subr.mxu0 0.0
      %1568 = vmatpush1.msra.mxu0 %v1495
      %1569 = vmatprep.subr.mxu0 0.0
      %1570 = vmatpush1.msra.mxu0 %v1494
      %1571 = vmatprep.subr.mxu0 0.0
      %1572 = vmatpush1.msra.mxu0 %v1493
      %1573 = vmatprep.subr.mxu0 0.0
      %1574 = vmatpush2.msra.mxu0 %v1524
      %1575 = vmatprep.subr.mxu0 0.0
      %1576 = vmatpush2.msra.mxu0 %v1523
      %1577 = vmatprep.subr.mxu0 0.0
      %1578 = vmatpush2.msra.mxu0 %v1522
      %1579 = vmatprep.subr.mxu0 0.0
      %1580 = vmatpush2.msra.mxu0 %v1521
      %1581 = vmatprep.subr.mxu0 0.0
      %1582 = vmatpush2.msra.mxu0 %v1520
      %1583 = vmatprep.subr.mxu0 0.0
      %1584 = vmatpush2.msra.mxu0 %v1519
      %1585 = vmatprep.subr.mxu0 0.0
      %1586 = vmatpush2.msra.mxu0 %v1518
      %1587 = vmatprep.subr.mxu0 0.0
      %1588 = vmatpush2.msra.mxu0 %v1517
      %1589 = vmatprep.subr.mxu0 0.0
      %1590 = vmatpush2.msra.mxu0 %v1516
      %1591 = vmatprep.subr.mxu0 0.0
      %1592 = vmatpush2.msra.mxu0 %v1515
      %1593 = vmatprep.subr.mxu0 0.0
      %1594 = vmatpush2.msra.mxu0 %v1514
      %1595 = vmatprep.subr.mxu0 0.0
      %1596 = vmatpush2.msra.mxu0 %v1513
      %1597 = vmatprep.subr.mxu0 0.0
      %1598 = vmatpush2.msra.mxu0 %v1512
      %1599 = vmatprep.subr.mxu0 0.0
      %1600 = vmatpush2.msra.mxu0 %v1511
      %1601 = vmatprep.subr.mxu0 0.0
      %1602 = vmatpush2.msra.mxu0 %v1510
      %1603 = vmatprep.subr.mxu0 0.0
      %1604 = vmatpush2.msra.mxu0 %v1509
      %1605 = vmatprep.mubr.f32.mxu0 %v680
      %1606 = vmatmul.mubr.f32.gmra.mxu0 %v619
      %v1607 = vpop.f32.mrf.mxu0
      %v1608 = vadd.f32 0.0, %v1607
      %v1609 = vpop.f32.mrf.mxu0
      %1610 = vmatprep.mubr.f32.mxu0 %v682
      %1611 = vmatmul.mubr.f32.gmra.mxu0 %v620
      %v1612 = vpop.f32.mrf.mxu0
      %v1613 = vadd.f32 0.0, %v1612
      %v1614 = vpop.f32.mrf.mxu0
      %1615 = vmatprep.mubr.f32.mxu0 %v685
      %1616 = vmatmul.mubr.f32.gmra.mxu0 %v622
      %v1617 = vpop.f32.mrf.mxu0
      %v1618 = vadd.f32 0.0, %v1617
      %v1619 = vpop.f32.mrf.mxu0
      %1620 = vmatprep.mubr.f32.mxu0 %v687
      %1621 = vmatmul.mubr.f32.gmra.mxu0 %v623
      %v1622 = vpop.f32.mrf.mxu0
      %v1623 = vadd.f32 0.0, %v1622
      %v1624 = vpop.f32.mrf.mxu0
      %1625 = vmatprep.mubr.f32.mxu0 %v690
      %1626 = vmatmul.mubr.f32.gmra.mxu0 %v625
      %v1627 = vpop.f32.mrf.mxu0
      %v1628 = vadd.f32 0.0, %v1627
      %v1629 = vpop.f32.mrf.mxu0
      %1630 = vmatprep.mubr.f32.mxu0 %v692
      %1631 = vmatmul.mubr.f32.gmra.mxu0 %v626
      %v1632 = vpop.f32.mrf.mxu0
      %v1633 = vadd.f32 0.0, %v1632
      %v1634 = vpop.f32.mrf.mxu0
      %1635 = vmatprep.mubr.f32.mxu0 %v695
      %1636 = vmatmul.mubr.f32.gmra.mxu0 %v628
      %v1637 = vpop.f32.mrf.mxu0
      %v1638 = vadd.f32 0.0, %v1637
      %v1639 = vpop.f32.mrf.mxu0
      %1640 = vmatprep.mubr.f32.mxu0 %v697
      %1641 = vmatmul.mubr.f32.gmra.mxu0 %v629
      %v1642 = vpop.f32.mrf.mxu0
      %v1643 = vadd.f32 0.0, %v1642
      %v1644 = vpop.f32.mrf.mxu0
      %1645 = vmatprep.mubr.f32.mxu0 %v700
      %1646 = vmatmul.mubr.f32.gmra.mxu0 %v631
      %v1647 = vpop.f32.mrf.mxu0
      %v1648 = vadd.f32 0.0, %v1647
      %v1649 = vpop.f32.mrf.mxu0
      %1650 = vmatprep.mubr.f32.mxu0 %v702
      %1651 = vmatmul.mubr.f32.gmra.mxu0 %v632
      %v1652 = vpop.f32.mrf.mxu0
      %v1653 = vadd.f32 0.0, %v1652
      %v1654 = vpop.f32.mrf.mxu0
      %1655 = vmatprep.mubr.f32.mxu0 %v705
      %1656 = vmatmul.mubr.f32.gmra.mxu0 %v634
      %v1657 = vpop.f32.mrf.mxu0
      %v1658 = vadd.f32 0.0, %v1657
      %v1659 = vpop.f32.mrf.mxu0
      %1660 = vmatprep.mubr.f32.mxu0 %v707
      %1661 = vmatmul.mubr.f32.gmra.mxu0 %v635
      %v1662 = vpop.f32.mrf.mxu0
      %v1663 = vadd.f32 0.0, %v1662
      %v1664 = vpop.f32.mrf.mxu0
      %1665 = vmatprep.mubr.f32.mxu0 %v834
      %1666 = vmatmul.mubr.f32.gmra.mxu0 %v637
      %v1667 = vpop.f32.mrf.mxu0
      %v1668 = vadd.f32 0.0, %v1667
      %v1669 = vpop.f32.mrf.mxu0
      %1670 = vmatprep.mubr.f32.mxu0 %v836
      %1671 = vmatmul.mubr.f32.gmra.mxu0 %v638
      %v1672 = vpop.f32.mrf.mxu0
      %v1673 = vadd.f32 0.0, %v1672
      %v1674 = vpop.f32.mrf.mxu0
      %1675 = vmatprep.mubr.f32.mxu0 %v1480
      %1676 = vmatmul.mubr.f32.gmra.mxu0 %v640
      %v1677 = vpop.f32.mrf.mxu0
      %v1678 = vadd.f32 0.0, %v1677
      %v1679 = vpop.f32.mrf.mxu0
      %1680 = vmatprep.mubr.f32.mxu0 %v1482
      %1681 = vmatmul.mubr.f32.gmra.mxu0 %v641
      %v1682 = vpop.f32.mrf.mxu0
      %v1683 = vadd.f32 0.0, %v1682
      %v1684 = vpop.f32.mrf.mxu0
      %1685 = vdwg.mxu0
      %1686 = vmatprep.subr.mxu0 0.0
      %1687 = vmatpush1.msra.mxu0 %v1540
      %1688 = vmatprep.subr.mxu0 0.0
      %1689 = vmatpush1.msra.mxu0 %v1539
      %1690 = vmatprep.subr.mxu0 0.0
      %1691 = vmatpush1.msra.mxu0 %v1538
      %1692 = vmatprep.subr.mxu0 0.0
      %1693 = vmatpush1.msra.mxu0 %v1537
      %1694 = vmatprep.subr.mxu0 0.0
      %1695 = vmatpush1.msra.mxu0 %v1536
      %1696 = vmatprep.subr.mxu0 0.0
      %1697 = vmatpush1.msra.mxu0 %v1535
      %1698 = vmatprep.subr.mxu0 0.0
      %1699 = vmatpush1.msra.mxu0 %v1534
      %1700 = vmatprep.subr.mxu0 0.0
      %1701 = vmatpush1.msra.mxu0 %v1533
      %1702 = vmatprep.subr.mxu0 0.0
      %1703 = vmatpush1.msra.mxu0 %v1532
      %1704 = vmatprep.subr.mxu0 0.0
      %1705 = vmatpush1.msra.mxu0 %v1531
      %1706 = vmatprep.subr.mxu0 0.0
      %1707 = vmatpush1.msra.mxu0 %v1530
      %1708 = vmatprep.subr.mxu0 0.0
      %1709 = vmatpush1.msra.mxu0 %v1529
      %1710 = vmatprep.subr.mxu0 0.0
      %1711 = vmatpush1.msra.mxu0 %v1528
      %1712 = vmatprep.subr.mxu0 0.0
      %1713 = vmatpush1.msra.mxu0 %v1527
      %1714 = vmatprep.subr.mxu0 0.0
      %1715 = vmatpush1.msra.mxu0 %v1526
      %1716 = vmatprep.subr.mxu0 0.0
      %1717 = vmatpush1.msra.mxu0 %v1525
      %1718 = vmatprep.subr.mxu0 0.0
      %1719 = vmatpush2.msra.mxu0 0.0
      %1720 = vmatprep.subr.mxu0 0.0
      %1721 = vmatpush2.msra.mxu0 0.0
      %1722 = vmatprep.subr.mxu0 0.0
      %1723 = vmatpush2.msra.mxu0 0.0
      %1724 = vmatprep.subr.mxu0 0.0
      %1725 = vmatpush2.msra.mxu0 0.0
      %1726 = vmatprep.subr.mxu0 0.0
      %1727 = vmatpush2.msra.mxu0 0.0
      %1728 = vmatprep.subr.mxu0 0.0
      %1729 = vmatpush2.msra.mxu0 0.0
      %1730 = vmatprep.subr.mxu0 0.0
      %1731 = vmatpush2.msra.mxu0 0.0
      %1732 = vmatprep.subr.mxu0 0.0
      %1733 = vmatpush2.msra.mxu0 0.0
      %1734 = vmatprep.subr.mxu0 0.0
      %1735 = vmatpush2.msra.mxu0 0.0
      %1736 = vmatprep.subr.mxu0 0.0
      %1737 = vmatpush2.msra.mxu0 0.0
      %1738 = vmatprep.subr.mxu0 0.0
      %1739 = vmatpush2.msra.mxu0 0.0
      %1740 = vmatprep.subr.mxu0 0.0
      %1741 = vmatpush2.msra.mxu0 0.0
      %1742 = vmatprep.subr.mxu0 0.0
      %1743 = vmatpush2.msra.mxu0 0.0
      %1744 = vmatprep.subr.mxu0 0.0
      %1745 = vmatpush2.msra.mxu0 0.0
      %1746 = vmatprep.subr.mxu0 0.0
      %1747 = vmatpush2.msra.mxu0 0.0
      %1748 = vmatprep.subr.mxu0 0.0
      %1749 = vmatpush2.msra.mxu0 0.0
      %1750 = vmatprep.mubr.f32.mxu0 0.0
      %1751 = vmatmul.mubr.f32.gmra.mxu0 %v737
      %v1752 = vpop.f32.mrf.mxu0
      %v1753 = vadd.f32 %v1608, %v1752
      %v1754 = vpop.f32.mrf.mxu0
      %1755 = vmatprep.mubr.f32.mxu0 0.0
      %1756 = vmatmul.mubr.f32.gmra.mxu0 %v739
      %v1757 = vpop.f32.mrf.mxu0
      %v1758 = vadd.f32 %v1613, %v1757
      %v1759 = vpop.f32.mrf.mxu0
      %1760 = vmatprep.mubr.f32.mxu0 0.0
      %1761 = vmatmul.mubr.f32.gmra.mxu0 %v742
      %v1762 = vpop.f32.mrf.mxu0
      %v1763 = vadd.f32 %v1618, %v1762
      %v1764 = vpop.f32.mrf.mxu0
      %1765 = vmatprep.mubr.f32.mxu0 0.0
      %1766 = vmatmul.mubr.f32.gmra.mxu0 %v744
      %v1767 = vpop.f32.mrf.mxu0
      %v1768 = vadd.f32 %v1623, %v1767
      %v1769 = vpop.f32.mrf.mxu0
      %1770 = vmatprep.mubr.f32.mxu0 0.0
      %1771 = vmatmul.mubr.f32.gmra.mxu0 %v747
      %v1772 = vpop.f32.mrf.mxu0
      %v1773 = vadd.f32 %v1628, %v1772
      %v1774 = vpop.f32.mrf.mxu0
      %1775 = vmatprep.mubr.f32.mxu0 0.0
      %1776 = vmatmul.mubr.f32.gmra.mxu0 %v749
      %v1777 = vpop.f32.mrf.mxu0
      %v1778 = vadd.f32 %v1633, %v1777
      %v1779 = vpop.f32.mrf.mxu0
      %1780 = vmatprep.mubr.f32.mxu0 0.0
      %1781 = vmatmul.mubr.f32.gmra.mxu0 %v752
      %v1782 = vpop.f32.mrf.mxu0
      %v1783 = vadd.f32 %v1638, %v1782
      %v1784 = vpop.f32.mrf.mxu0
      %1785 = vmatprep.mubr.f32.mxu0 0.0
      %1786 = vmatmul.mubr.f32.gmra.mxu0 %v754
      %v1787 = vpop.f32.mrf.mxu0
      %v1788 = vadd.f32 %v1643, %v1787
      %v1789 = vpop.f32.mrf.mxu0
      %1790 = vmatprep.mubr.f32.mxu0 0.0
      %1791 = vmatmul.mubr.f32.gmra.mxu0 %v757
      %v1792 = vpop.f32.mrf.mxu0
      %v1793 = vadd.f32 %v1648, %v1792
      %v1794 = vpop.f32.mrf.mxu0
      %1795 = vmatprep.mubr.f32.mxu0 0.0
      %1796 = vmatmul.mubr.f32.gmra.mxu0 %v759
      %v1797 = vpop.f32.mrf.mxu0
      %v1798 = vadd.f32 %v1653, %v1797
      %v1799 = vpop.f32.mrf.mxu0
      %1800 = vmatprep.mubr.f32.mxu0 0.0
      %1801 = vmatmul.mubr.f32.gmra.mxu0 %v762
      %v1802 = vpop.f32.mrf.mxu0
      %v1803 = vadd.f32 %v1658, %v1802
      %v1804 = vpop.f32.mrf.mxu0
      %1805 = vmatprep.mubr.f32.mxu0 0.0
      %1806 = vmatmul.mubr.f32.gmra.mxu0 %v764
      %v1807 = vpop.f32.mrf.mxu0
      %v1808 = vadd.f32 %v1663, %v1807
      %v1809 = vpop.f32.mrf.mxu0
      %1810 = vmatprep.mubr.f32.mxu0 0.0
      %1811 = vmatmul.mubr.f32.gmra.mxu0 %v841
      %v1812 = vpop.f32.mrf.mxu0
      %v1813 = vadd.f32 %v1668, %v1812
      %v1814 = vpop.f32.mrf.mxu0
      %1815 = vmatprep.mubr.f32.mxu0 0.0
      %1816 = vmatmul.mubr.f32.gmra.mxu0 %v843
      %v1817 = vpop.f32.mrf.mxu0
      %v1818 = vadd.f32 %v1673, %v1817
      %v1819 = vpop.f32.mrf.mxu0
      %1820 = vmatprep.mubr.f32.mxu0 0.0
      %1821 = vmatmul.mubr.f32.gmra.mxu0 %v1487
      %v1822 = vpop.f32.mrf.mxu0
      %v1823 = vadd.f32 %v1678, %v1822
      %v1824 = vpop.f32.mrf.mxu0
      %1825 = vmatprep.mubr.f32.mxu0 0.0
      %1826 = vmatmul.mubr.f32.gmra.mxu0 %v1489
      %v1827 = vpop.f32.mrf.mxu0
      %v1828 = vadd.f32 %v1683, %v1827
      %v1829 = vpop.f32.mrf.mxu0
      %1830 = vdwg.mxu0
      %v1831 = vadd.f32 %v1397, %v1753
      %v1832 = vadd.f32 %v1402, %v1758
      %v1833 = vadd.f32 %v1407, %v1763
      %v1834 = vadd.f32 %v1412, %v1768
      %v1835 = vadd.f32 %v1417, %v1773
      %v1836 = vadd.f32 %v1422, %v1778
      %v1837 = vadd.f32 %v1427, %v1783
      %v1838 = vadd.f32 %v1432, %v1788
      %v1839 = vadd.f32 %v1437, %v1793
      %v1840 = vadd.f32 %v1442, %v1798
      %v1841 = vadd.f32 %v1447, %v1803
      %v1842 = vadd.f32 %v1452, %v1808
      %v1843 = vadd.f32 %v1457, %v1813
      %v1844 = vadd.f32 %v1462, %v1818
      %v1845 = vadd.f32 %v1467, %v1823
      %v1846 = vadd.f32 %v1472, %v1828
      %v1847 = vld [vmem:[%s5] sm:$0x1]
      %v1849 = vlaneseq
      %v1850 = vshrl.u32 %v1849, 7
      %v1851 = vsub.s32 0, %v1850
      %v1852 = vrot.slane %v1847, %v1851
      %v1854 = vadd.f32 %v1831, %v1852
      %v1855 = vadd.f32 %v1832, %v1852
      %v1856 = vadd.f32 %v1833, %v1852
      %v1857 = vadd.f32 %v1834, %v1852
      %v1858 = vadd.f32 %v1835, %v1852
      %v1859 = vadd.f32 %v1836, %v1852
      %v1860 = vadd.f32 %v1837, %v1852
      %v1861 = vadd.f32 %v1838, %v1852
      %v1862 = vadd.f32 %v1839, %v1852
      %v1863 = vadd.f32 %v1840, %v1852
      %v1864 = vadd.f32 %v1841, %v1852
      %v1865 = vadd.f32 %v1842, %v1852
      %v1866 = vadd.f32 %v1843, %v1852
      %v1867 = vadd.f32 %v1844, %v1852
      %v1868 = vadd.f32 %v1845, %v1852
      %v1869 = vadd.f32 %v1846, %v1852
      %1870 = vst [vmem:[%s491] sm:$0xff] %v1854
      %1871 = vst [vmem:[%s491 + $0x8] sm:$0xff] %v1855
      %1872 = vst [vmem:[%s491 + $0x10] sm:$0xff] %v1856
      %1873 = vst [vmem:[%s491 + $0x18] sm:$0xff] %v1857
      %1874 = vst [vmem:[%s491 + $0x20] sm:$0xff] %v1858
      %1875 = vst [vmem:[%s491 + $0x28] sm:$0xff] %v1859
      %1876 = vst [vmem:[%s491 + $0x30] sm:$0xff] %v1860
      %1877 = vst [vmem:[%s491 + $0x38] sm:$0xff] %v1861
      %1878 = vst [vmem:[%s491 + $0x40] sm:$0xff] %v1862
      %1879 = vst [vmem:[%s491 + $0x48] sm:$0xff] %v1863
      %1880 = vst [vmem:[%s491 + $0x50] sm:$0xff] %v1864
      %1881 = vst [vmem:[%s491 + $0x58] sm:$0xff] %v1865
      %1882 = vst [vmem:[%s491 + $0x60] sm:$0xff] %v1866
      %1883 = vst [vmem:[%s491 + $0x68] sm:$0xff] %v1867
      %1884 = vst [vmem:[%s491 + $0x70] sm:$0xff] %v1868
      %1885 = vst [vmem:[%s491 + $0x78] sm:$0xff] %v1869
      %v1886 = vadd.f32 %v1854, %v1855
      %v1887 = vadd.f32 %v1886, %v1856
      %v1888 = vadd.f32 %v1887, %v1857
      %v1889 = vadd.f32 %v1888, %v1858
      %v1890 = vadd.f32 %v1889, %v1859
      %v1891 = vadd.f32 %v1890, %v1860
      %v1892 = vadd.f32 %v1891, %v1861
      %v1893 = vadd.f32 %v1892, %v1862
      %v1894 = vadd.f32 %v1893, %v1863
      %v1895 = vadd.f32 %v1894, %v1864
      %v1896 = vadd.f32 %v1895, %v1865
      %v1897 = vadd.f32 %v1896, %v1866
      %v1898 = vadd.f32 %v1897, %v1867
      %v1899 = vadd.f32 %v1898, %v1868
      %v1900 = vadd.f32 %v1899, %v1869
      %v1901 = vrot.slane %v1900, 4
      %v1902 = vadd.f32 %v1900, %v1901
      %v1903 = vrot.slane %v1902, 2
      %v1904 = vadd.f32 %v1902, %v1903
      %v1905 = vrot.slane %v1904, 1
      %v1906 = vadd.f32 %v1904, %v1905
      %v1907 = vmul.f32 %v1854, %v1854
      %v1908 = vmul.f32 %v1855, %v1855
      %v1909 = vmul.f32 %v1856, %v1856
      %v1910 = vmul.f32 %v1857, %v1857
      %v1911 = vmul.f32 %v1858, %v1858
      %v1912 = vmul.f32 %v1859, %v1859
      %v1913 = vmul.f32 %v1860, %v1860
      %v1914 = vmul.f32 %v1861, %v1861
      %v1915 = vmul.f32 %v1862, %v1862
      %v1916 = vmul.f32 %v1863, %v1863
      %v1917 = vmul.f32 %v1864, %v1864
      %v1918 = vmul.f32 %v1865, %v1865
      %v1919 = vmul.f32 %v1866, %v1866
      %v1920 = vmul.f32 %v1867, %v1867
      %v1921 = vmul.f32 %v1868, %v1868
      %v1922 = vmul.f32 %v1869, %v1869
      %v1923 = vadd.f32 %v1907, %v1908
      %v1924 = vadd.f32 %v1923, %v1909
      %v1925 = vadd.f32 %v1924, %v1910
      %v1926 = vadd.f32 %v1925, %v1911
      %v1927 = vadd.f32 %v1926, %v1912
      %v1928 = vadd.f32 %v1927, %v1913
      %v1929 = vadd.f32 %v1928, %v1914
      %v1930 = vadd.f32 %v1929, %v1915
      %v1931 = vadd.f32 %v1930, %v1916
      %v1932 = vadd.f32 %v1931, %v1917
      %v1933 = vadd.f32 %v1932, %v1918
      %v1934 = vadd.f32 %v1933, %v1919
      %v1935 = vadd.f32 %v1934, %v1920
      %v1936 = vadd.f32 %v1935, %v1921
      %v1937 = vadd.f32 %v1936, %v1922
      %v1938 = vrot.slane %v1937, 4
      %v1939 = vadd.f32 %v1937, %v1938
      %v1940 = vrot.slane %v1939, 2
      %v1941 = vadd.f32 %v1939, %v1940
      %v1942 = vrot.slane %v1941, 1
      %v1943 = vadd.f32 %v1941, %v1942
      %vm1944 = vcmask 1040384
      %v1945 = vsel %vm1944, %v1906, %v1943
      %1946 = vst [vmem:[%s500] sm:$0x3] %v1945
      %v1971 = vrot.slane %v512, 1
      %v1972 = vrot.slane %v513, 1
      %v1973 = vsel %vm667, %v1971, %v1972
      %v1974 = vrot.slane %v514, 1
      %v1975 = vsel %vm667, %v1972, %v1974
      %v1976 = vrot.slane %v515, 1
      %v1977 = vrot.slane %v516, 1
      %v1978 = vsel %vm667, %v1976, %v1977
      %v1979 = vrot.slane %v517, 1
      %v1980 = vsel %vm667, %v1977, %v1979
      %v1981 = vrot.slane %v518, 1
      %v1982 = vrot.slane %v519, 1
      %v1983 = vsel %vm667, %v1981, %v1982
      %v1984 = vrot.slane %v520, 1
      %v1985 = vsel %vm667, %v1982, %v1984
      %v1986 = vrot.slane %v521, 1
      %v1987 = vrot.slane %v522, 1
      %v1988 = vsel %vm667, %v1986, %v1987
      %v1989 = vrot.slane %v523, 1
      %v1990 = vsel %vm667, %v1987, %v1989
      %v1991 = vrot.slane %v524, 1
      %v1992 = vrot.slane %v525, 1
      %v1993 = vsel %vm667, %v1991, %v1992
      %v1994 = vrot.slane %v526, 1
      %v1995 = vsel %vm667, %v1992, %v1994
      %v1996 = vrot.slane %v527, 1
      %v1997 = vrot.slane %v528, 1
      %v1998 = vsel %vm667, %v1996, %v1997
      %v1999 = vrot.slane %v529, 1
      %v2000 = vsel %vm667, %v1997, %v1999
      %v2001 = vrot.slane %v530, 1
      %v2002 = vrot.slane %v531, 1
      %v2003 = vsel %vm667, %v2001, %v2002
      %v2004 = vrot.slane %v532, 1
      %v2005 = vsel %vm667, %v2002, %v2004
      %v2006 = vrot.slane %v533, 1
      %v2007 = vrot.slane %v534, 1
      %v2008 = vsel %vm667, %v2006, %v2007
      %v2009 = vrot.slane %v535, 1
      %v2010 = vsel %vm667, %v2007, %v2009
      %v2027 = vld [vmem:[%s6] sm:$0xff]
      %v2028 = vld [vmem:[%s6 + $0x8] sm:$0xff]
      %v2029 = vld [vmem:[%s6 + $0x10] sm:$0xff]
      %v2030 = vld [vmem:[%s6 + $0x18] sm:$0xff]
      %v2031 = vld [vmem:[%s6 + $0x20] sm:$0xff]
      %v2032 = vld [vmem:[%s6 + $0x28] sm:$0xff]
      %v2033 = vld [vmem:[%s6 + $0x30] sm:$0xff]
      %v2034 = vld [vmem:[%s6 + $0x38] sm:$0xff]
      %v2035 = vld [vmem:[%s6 + $0x40] sm:$0xff]
      %v2036 = vld [vmem:[%s6 + $0x48] sm:$0xff]
      %v2037 = vld [vmem:[%s6 + $0x50] sm:$0xff]
      %v2038 = vld [vmem:[%s6 + $0x58] sm:$0xff]
      %v2039 = vld [vmem:[%s6 + $0x60] sm:$0xff]
      %v2040 = vld [vmem:[%s6 + $0x68] sm:$0xff]
      %v2041 = vld [vmem:[%s6 + $0x70] sm:$0xff]
      %v2042 = vld [vmem:[%s6 + $0x78] sm:$0xff]
      %v2043 = vld [vmem:[%s7] sm:$0x1]
      %v2045 = vlaneseq
      %v2046 = vshrl.u32 %v2045, 7
      %v2047 = vsub.s32 0, %v2046
      %v2048 = vrot.slane %v2043, %v2047
      %2050 = vmatprep.subr.mxu0 0.0
      %2051 = vmatpush1.msra.mxu0 %v2042
      %2052 = vmatprep.subr.mxu0 0.0
      %2053 = vmatpush1.msra.mxu0 %v2041
      %2054 = vmatprep.subr.mxu0 0.0
      %2055 = vmatpush1.msra.mxu0 %v2040
      %2056 = vmatprep.subr.mxu0 0.0
      %2057 = vmatpush1.msra.mxu0 %v2039
      %2058 = vmatprep.subr.mxu0 0.0
      %2059 = vmatpush1.msra.mxu0 %v2038
      %2060 = vmatprep.subr.mxu0 0.0
      %2061 = vmatpush1.msra.mxu0 %v2037
      %2062 = vmatprep.subr.mxu0 0.0
      %2063 = vmatpush1.msra.mxu0 %v2036
      %2064 = vmatprep.subr.mxu0 0.0
      %2065 = vmatpush1.msra.mxu0 %v2035
      %2066 = vmatprep.subr.mxu0 0.0
      %2067 = vmatpush1.msra.mxu0 %v2034
      %2068 = vmatprep.subr.mxu0 0.0
      %2069 = vmatpush1.msra.mxu0 %v2033
      %2070 = vmatprep.subr.mxu0 0.0
      %2071 = vmatpush1.msra.mxu0 %v2032
      %2072 = vmatprep.subr.mxu0 0.0
      %2073 = vmatpush1.msra.mxu0 %v2031
      %2074 = vmatprep.subr.mxu0 0.0
      %2075 = vmatpush1.msra.mxu0 %v2030
      %2076 = vmatprep.subr.mxu0 0.0
      %2077 = vmatpush1.msra.mxu0 %v2029
      %2078 = vmatprep.subr.mxu0 0.0
      %2079 = vmatpush1.msra.mxu0 %v2028
      %2080 = vmatprep.subr.mxu0 0.0
      %2081 = vmatpush1.msra.mxu0 %v2027
      %2082 = vmatprep.subr.mxu0 0.0
      %2083 = vmatpush2.msra.mxu0 0.0
      %2084 = vmatprep.subr.mxu0 0.0
      %2085 = vmatpush2.msra.mxu0 0.0
      %2086 = vmatprep.subr.mxu0 0.0
      %2087 = vmatpush2.msra.mxu0 0.0
      %2088 = vmatprep.subr.mxu0 0.0
      %2089 = vmatpush2.msra.mxu0 0.0
      %2090 = vmatprep.subr.mxu0 0.0
      %2091 = vmatpush2.msra.mxu0 0.0
      %2092 = vmatprep.subr.mxu0 0.0
      %2093 = vmatpush2.msra.mxu0 0.0
      %2094 = vmatprep.subr.mxu0 0.0
      %2095 = vmatpush2.msra.mxu0 0.0
      %2096 = vmatprep.subr.mxu0 0.0
      %2097 = vmatpush2.msra.mxu0 0.0
      %2098 = vmatprep.subr.mxu0 0.0
      %2099 = vmatpush2.msra.mxu0 0.0
      %2100 = vmatprep.subr.mxu0 0.0
      %2101 = vmatpush2.msra.mxu0 0.0
      %2102 = vmatprep.subr.mxu0 0.0
      %2103 = vmatpush2.msra.mxu0 0.0
      %2104 = vmatprep.subr.mxu0 0.0
      %2105 = vmatpush2.msra.mxu0 0.0
      %2106 = vmatprep.subr.mxu0 0.0
      %2107 = vmatpush2.msra.mxu0 0.0
      %2108 = vmatprep.subr.mxu0 0.0
      %2109 = vmatpush2.msra.mxu0 0.0
      %2110 = vmatprep.subr.mxu0 0.0
      %2111 = vmatpush2.msra.mxu0 0.0
      %2112 = vmatprep.subr.mxu0 0.0
      %2113 = vmatpush2.msra.mxu0 0.0
      %2114 = vmatprep.mubr.f32.mxu0 0.0
      %2115 = vmatmul.mubr.f32.gmra.mxu0 %v1973
      %v2116 = vpop.f32.mrf.mxu0
      %v2117 = vadd.f32 %v2048, %v2116
      %v2118 = vpop.f32.mrf.mxu0
      %2119 = vmatprep.mubr.f32.mxu0 0.0
      %2120 = vmatmul.mubr.f32.gmra.mxu0 %v1975
      %v2121 = vpop.f32.mrf.mxu0
      %v2122 = vadd.f32 %v2048, %v2121
      %v2123 = vpop.f32.mrf.mxu0
      %2124 = vmatprep.mubr.f32.mxu0 0.0
      %2125 = vmatmul.mubr.f32.gmra.mxu0 %v1978
      %v2126 = vpop.f32.mrf.mxu0
      %v2127 = vadd.f32 %v2048, %v2126
      %v2128 = vpop.f32.mrf.mxu0
      %2129 = vmatprep.mubr.f32.mxu0 0.0
      %2130 = vmatmul.mubr.f32.gmra.mxu0 %v1980
      %v2131 = vpop.f32.mrf.mxu0
      %v2132 = vadd.f32 %v2048, %v2131
      %v2133 = vpop.f32.mrf.mxu0
      %2134 = vmatprep.mubr.f32.mxu0 0.0
      %2135 = vmatmul.mubr.f32.gmra.mxu0 %v1983
      %v2136 = vpop.f32.mrf.mxu0
      %v2137 = vadd.f32 %v2048, %v2136
      %v2138 = vpop.f32.mrf.mxu0
      %2139 = vmatprep.mubr.f32.mxu0 0.0
      %2140 = vmatmul.mubr.f32.gmra.mxu0 %v1985
      %v2141 = vpop.f32.mrf.mxu0
      %v2142 = vadd.f32 %v2048, %v2141
      %v2143 = vpop.f32.mrf.mxu0
      %2144 = vmatprep.mubr.f32.mxu0 0.0
      %2145 = vmatmul.mubr.f32.gmra.mxu0 %v1988
      %v2146 = vpop.f32.mrf.mxu0
      %v2147 = vadd.f32 %v2048, %v2146
      %v2148 = vpop.f32.mrf.mxu0
      %2149 = vmatprep.mubr.f32.mxu0 0.0
      %2150 = vmatmul.mubr.f32.gmra.mxu0 %v1990
      %v2151 = vpop.f32.mrf.mxu0
      %v2152 = vadd.f32 %v2048, %v2151
      %v2153 = vpop.f32.mrf.mxu0
      %2154 = vmatprep.mubr.f32.mxu0 0.0
      %2155 = vmatmul.mubr.f32.gmra.mxu0 %v1993
      %v2156 = vpop.f32.mrf.mxu0
      %v2157 = vadd.f32 %v2048, %v2156
      %v2158 = vpop.f32.mrf.mxu0
      %2159 = vmatprep.mubr.f32.mxu0 0.0
      %2160 = vmatmul.mubr.f32.gmra.mxu0 %v1995
      %v2161 = vpop.f32.mrf.mxu0
      %v2162 = vadd.f32 %v2048, %v2161
      %v2163 = vpop.f32.mrf.mxu0
      %2164 = vmatprep.mubr.f32.mxu0 0.0
      %2165 = vmatmul.mubr.f32.gmra.mxu0 %v1998
      %v2166 = vpop.f32.mrf.mxu0
      %v2167 = vadd.f32 %v2048, %v2166
      %v2168 = vpop.f32.mrf.mxu0
      %2169 = vmatprep.mubr.f32.mxu0 0.0
      %2170 = vmatmul.mubr.f32.gmra.mxu0 %v2000
      %v2171 = vpop.f32.mrf.mxu0
      %v2172 = vadd.f32 %v2048, %v2171
      %v2173 = vpop.f32.mrf.mxu0
      %2174 = vmatprep.mubr.f32.mxu0 0.0
      %2175 = vmatmul.mubr.f32.gmra.mxu0 %v2003
      %v2176 = vpop.f32.mrf.mxu0
      %v2177 = vadd.f32 %v2048, %v2176
      %v2178 = vpop.f32.mrf.mxu0
      %2179 = vmatprep.mubr.f32.mxu0 0.0
      %2180 = vmatmul.mubr.f32.gmra.mxu0 %v2005
      %v2181 = vpop.f32.mrf.mxu0
      %v2182 = vadd.f32 %v2048, %v2181
      %v2183 = vpop.f32.mrf.mxu0
      %2184 = vmatprep.mubr.f32.mxu0 0.0
      %2185 = vmatmul.mubr.f32.gmra.mxu0 %v2008
      %v2186 = vpop.f32.mrf.mxu0
      %v2187 = vadd.f32 %v2048, %v2186
      %v2188 = vpop.f32.mrf.mxu0
      %2189 = vmatprep.mubr.f32.mxu0 0.0
      %2190 = vmatmul.mubr.f32.gmra.mxu0 %v2010
      %v2191 = vpop.f32.mrf.mxu0
      %v2192 = vadd.f32 %v2048, %v2191
      %v2193 = vpop.f32.mrf.mxu0
      %2194 = vdwg.mxu0
      %v2195 = vadd.f32 %v2117, %v2122
      %v2196 = vadd.f32 %v2195, %v2127
      %v2197 = vadd.f32 %v2196, %v2132
      %v2198 = vadd.f32 %v2197, %v2137
      %v2199 = vadd.f32 %v2198, %v2142
      %v2200 = vadd.f32 %v2199, %v2147
      %v2201 = vadd.f32 %v2200, %v2152
      %v2202 = vadd.f32 %v2201, %v2157
      %v2203 = vadd.f32 %v2202, %v2162
      %v2204 = vadd.f32 %v2203, %v2167
      %v2205 = vadd.f32 %v2204, %v2172
      %v2206 = vadd.f32 %v2205, %v2177
      %v2207 = vadd.f32 %v2206, %v2182
      %v2208 = vadd.f32 %v2207, %v2187
      %v2209 = vadd.f32 %v2208, %v2192
      %v2210 = vrot.slane %v2209, 4
      %v2211 = vadd.f32 %v2209, %v2210
      %v2212 = vrot.slane %v2211, 2
      %v2213 = vadd.f32 %v2211, %v2212
      %v2214 = vrot.slane %v2213, 1
      %v2215 = vadd.f32 %v2213, %v2214
      %v2216 = vmul.f32 %v2117, %v2117
      %v2217 = vmul.f32 %v2122, %v2122
      %v2218 = vmul.f32 %v2127, %v2127
      %v2219 = vmul.f32 %v2132, %v2132
      %v2220 = vmul.f32 %v2137, %v2137
      %v2221 = vmul.f32 %v2142, %v2142
      %v2222 = vmul.f32 %v2147, %v2147
      %v2223 = vmul.f32 %v2152, %v2152
      %v2224 = vmul.f32 %v2157, %v2157
      %v2225 = vmul.f32 %v2162, %v2162
      %v2226 = vmul.f32 %v2167, %v2167
      %v2227 = vmul.f32 %v2172, %v2172
      %v2228 = vmul.f32 %v2177, %v2177
      %v2229 = vmul.f32 %v2182, %v2182
      %v2230 = vmul.f32 %v2187, %v2187
      %v2231 = vmul.f32 %v2192, %v2192
      %v2232 = vadd.f32 %v2216, %v2217
      %v2233 = vadd.f32 %v2232, %v2218
      %v2234 = vadd.f32 %v2233, %v2219
      %v2235 = vadd.f32 %v2234, %v2220
      %v2236 = vadd.f32 %v2235, %v2221
      %v2237 = vadd.f32 %v2236, %v2222
      %v2238 = vadd.f32 %v2237, %v2223
      %v2239 = vadd.f32 %v2238, %v2224
      %v2240 = vadd.f32 %v2239, %v2225
      %v2241 = vadd.f32 %v2240, %v2226
      %v2242 = vadd.f32 %v2241, %v2227
      %v2243 = vadd.f32 %v2242, %v2228
      %v2244 = vadd.f32 %v2243, %v2229
      %v2245 = vadd.f32 %v2244, %v2230
      %v2246 = vadd.f32 %v2245, %v2231
      %v2247 = vrot.slane %v2246, 4
      %v2248 = vadd.f32 %v2246, %v2247
      %v2249 = vrot.slane %v2248, 2
      %v2250 = vadd.f32 %v2248, %v2249
      %v2251 = vrot.slane %v2250, 1
      %v2252 = vadd.f32 %v2250, %v2251
      %v2253 = vsel %vm1944, %v2215, %v2252
      %2254 = vst [vmem:[%s508] sm:$0x3] %v2253
      %s2255 = smul.u32 8, %s27
      %p2256 = scmp.lt.s32.totalorder %s26, 1
      %s2257 = scalar_select %p2256, %s26, 1
      %p2258 = scmp.lt.s32.totalorder %s2255, 15
      %s2259 = scalar_select %p2258, %s2255, 15
      %s2260 = smul.addr %s2259, 2
      %s2261 = smul.addr %s2257, 32
      %s2262 = sadd.s32 %s2260, %s2261
      %s2263 = smul.addr %s2262, 8
      %s2264 = scalar_lea.vmem %s8, %s2263
      %p2265 = scmp.lt.s32.totalorder %s26, 1
      %s2266 = scalar_select %p2265, %s26, 1
      %p2267 = scmp.lt.s32.totalorder %s27, 1
      %s2268 = scalar_select %p2267, %s27, 1
      %s2269 = smul.addr %s2266, 2
      %s2270 = sadd.s32 %s2268, %s2269
      %s2271 = smul.addr %s2270, 2
      %s2272 = scalar_lea.vmem %s9, %s2271
      %p2273 = scmp.lt.s32.totalorder %s26, 1
      %s2274 = scalar_select %p2273, %s26, 1
      %p2275 = scmp.lt.s32.totalorder %s27, 1
      %s2276 = scalar_select %p2275, %s27, 1
      %s2277 = smul.addr %s2274, 2
      %s2278 = sadd.s32 %s2276, %s2277
      %s2279 = smul.addr %s2278, 2
      %s2280 = scalar_lea.vmem %s10, %s2279
      // Predicated region
      $region53: #{block_forward.4} parent=51 // pred_check
        %p2281 = pneg %p236
      $region54: #{block_forward.4} parent=51 // pred_check_branch
        %2283 = sbr.rel (%p2281) target = $region56
      $region55: #{block_forward.4} parent=51 // pred_region
        %s2284 = smul.u32 8, %s27
      $region56: #{block_forward.4} parent=51 // pred_fallthru
        _
      // Predicated region
      $region57: #{block_forward.4} parent=51 // pred_check
        %p2285 = pneg %p264
      $region58: #{block_forward.4} parent=51 // pred_check_branch
        %2287 = sbr.rel (%p2285) target = $region60
      $region59: #{block_forward.4} parent=51 // pred_region
        _
      $region60: #{block_forward.4} parent=51 // pred_fallthru
        _
      // Predicated region
      $region61: #{block_forward.4} parent=51 // pred_check
        %p2288 = pneg %p292
      $region62: #{block_forward.4} parent=51 // pred_check_branch
        %2290 = sbr.rel (%p2288) target = $region64
      $region63: #{block_forward.4} parent=51 // pred_region
        _
      $region64: #{block_forward.4} parent=51 // pred_fallthru
        _
    $region52: #{block_forward.4} parent=5 // pred_fallthru
      _
    %p2291 = scmp.le.s32.totalorder 2, %s17
    // Predicated region
    $region65: #{block_forward.4} parent=5 // pred_check
      %p2292 = pneg %p2291
    $region66: #{block_forward.4} parent=5 // pred_check_branch
      %2294 = sbr.rel (%p2292) target = $region68
    $region67: #{block_forward.4} parent=5 // pred_region
      %s2295 = ssub.s32 %s17, 2
      // Predicated region
      $region69: #{block_forward.4} parent=67 // pred_check
        %p2296 = pneg %p242
      $region70: #{block_forward.4} parent=67 // pred_check_branch
        %2298 = sbr.rel (%p2296) target = $region72
      $region71: #{block_forward.4} parent=67 // pred_region
        %s2299 = smul.u32 8, %s29
        %p2300 = scmp.lt.s32.totalorder %s28, 1
        %s2301 = scalar_select %p2300, %s28, 1
        %p2302 = scmp.lt.s32.totalorder %s2299, 15
        %s2303 = scalar_select %p2302, %s2299, 15
        %s2304 = smul.addr %s2303, 2
        %s2305 = smul.addr %s2301, 32
        %s2306 = sadd.s32 %s2304, %s2305
        %s2307 = smul.addr %s2306, 8
        %s2308 = scalar_lea.vmem %s8, %s2307
      $region72: #{block_forward.4} parent=67 // pred_fallthru
        _
      // Predicated region
      $region73: #{block_forward.4} parent=67 // pred_check
        %p2309 = pneg %p270
      $region74: #{block_forward.4} parent=67 // pred_check_branch
        %2311 = sbr.rel (%p2309) target = $region76
      $region75: #{block_forward.4} parent=67 // pred_region
        %p2312 = scmp.lt.s32.totalorder %s28, 1
        %s2313 = scalar_select %p2312, %s28, 1
        %p2314 = scmp.lt.s32.totalorder %s29, 1
        %s2315 = scalar_select %p2314, %s29, 1
        %s2316 = smul.addr %s2313, 2
        %s2317 = sadd.s32 %s2315, %s2316
        %s2318 = smul.addr %s2317, 2
        %s2319 = scalar_lea.vmem %s9, %s2318
      $region76: #{block_forward.4} parent=67 // pred_fallthru
        _
      // Predicated region
      $region77: #{block_forward.4} parent=67 // pred_check
        %p2320 = pneg %p298
      $region78: #{block_forward.4} parent=67 // pred_check_branch
        %2322 = sbr.rel (%p2320) target = $region80
      $region79: #{block_forward.4} parent=67 // pred_region
        %p2323 = scmp.lt.s32.totalorder %s28, 1
        %s2324 = scalar_select %p2323, %s28, 1
        %p2325 = scmp.lt.s32.totalorder %s29, 1
        %s2326 = scalar_select %p2325, %s29, 1
        %s2327 = smul.addr %s2324, 2
        %s2328 = sadd.s32 %s2326, %s2327
        %s2329 = smul.addr %s2328, 2
        %s2330 = scalar_lea.vmem %s10, %s2329
      $region80: #{block_forward.4} parent=67 // pred_fallthru
        _
    $region68: #{block_forward.4} parent=5 // pred_fallthru
      _
  $region6: #{block_forward.4} parent=0 // loop_footer
    %s21 = sadd.s32 1, %s17
  $region7: #{block_forward.4} parent=0 // loop_footer_branch
    %16 = sbr.rel target = $region3
  $region8: #{block_forward.4} parent=0 // loop_exit
    _

// kernel: block_forward.5
$region0: #{block_forward.5}
  #allocation0 [shape = 'u32[]', space=smem, size = 0x4, offset = 0x4, fixed_abs, tag = 'smem constant byte address 0x4 - core index']
  #allocation1 [shape = 'u32[144,128]{1,0:T(1,128)}', space=vmem, size = 0x12000, scoped, tag = 'internal scratch']
  %s0 = inlined_call_operand.vmem [shape: f32[2,18,18,128], index: 0, kind: input, shape index: {}]
  %s1 = inlined_call_operand.vmem [shape: f32[2,4,18,128], index: 1, kind: input, shape index: {}]
  %s2 = inlined_call_operand.vmem [shape: f32[3,384,128], index: 2, kind: input, shape index: {}]
  %s3 = inlined_call_operand.vmem [shape: f32[1,128], index: 3, kind: input, shape index: {}]
  %s4 = inlined_call_operand.vmem [shape: f32[2,16,16,128], index: 4, kind: input, shape index: {}]
  %s5 = inlined_call_operand.vmem [shape: f32[128,128], index: 5, kind: input, shape index: {}]
  %s6 = inlined_call_operand.vmem [shape: f32[1,128], index: 6, kind: input, shape index: {}]
  %s7 = inlined_call_operand.vmem [shape: f32[2,16,16,128], index: 7, kind: output, shape index: {}]
  %s8 = sld [smem:[#allocation0]]
  $region61: #{block_forward.5} parent=0
    _
  %s10 = ssub.s32 1, %s8
  %s11 = scalar_select 0, %s10, %s8
  loop: start=0, step=1, limit=6
  $region2: #{block_forward.5} parent=0 // loop_pre_header
    _
  $region3: #{block_forward.5} parent=0 // loop_header
    %s13 = sphi 0, %s17
    %p14 = scmp.ge.s32.totalorder %s13, 6
    %s20 = sphi 0, %s32
    %s21 = sphi 0, %s28
    %s22 = sphi 0, %s20
    %s23 = sphi 0, %s21
    %s24 = sphi 0, %s22
    %s25 = sphi 0, %s23
    %s37 = sphi 0, %s39
    %s40 = sphi 0, %s37
    %s41 = sphi 0, %s40
    %s57 = sphi 0, %s41
    %s65 = sphi 0, %s67
    %s68 = sphi 0, %s65
    %s69 = sphi 0, %s68
    %s85 = sphi 0, %s69
    %s89 = sphi 0, %s89
    %s91 = sphi 0, %s89
    %s92 = sphi 0, %s91
    %s106 = sphi 0, %s92
    %s110 = sphi 0, %s110
    %s112 = sphi 0, %s110
    %s113 = sphi 0, %s112
    %s127 = sphi 0, %s113
    %s135 = sphi 0, %s137
    %s138 = sphi 0, %s135
    %s139 = sphi 0, %s138
    %s155 = sphi 0, %s139
    %s159 = sphi 0, %s159
    %s161 = sphi 0, %s159
    %s162 = sphi 0, %s161
    %s176 = sphi 0, %s162
    %s180 = sphi 0, %s180
    %s182 = sphi 0, %s180
    %s183 = sphi 0, %s182
    %s197 = sphi 0, %s183
    %s205 = sphi 0, %s207
    %s208 = sphi 0, %s205
    %s209 = sphi 0, %s208
    %s225 = sphi 0, %s209
  $region4: #{block_forward.5} parent=0 // loop_header_branch
    %16 = sbr.rel (%p14) target = $region8
  $region5: #{block_forward.5} parent=0 // loop_body
    %s18 = ssub.s32 %s13, 1
    %s19 = ssub.s32 %s13, 2
    %s26 = sadd.s32 1, %s21
    %p27 = scmp.ge.s32.totalorder %s26, 2
    %s28 = scalar_select %p27, 0, %s26
    %s29 = sadd.s32 1, %s20
    %s30 = scalar_select %p27, %s29, %s20
    %p31 = scmp.ge.s32.totalorder %s30, 2
    %s32 = scalar_select %p31, 0, %s30
    %s33 = ssub.s32 %s20, %s32
    %s34 = ssub.s32 %s21, %s28
    %s35 = sor.u32 %s33, %s34
    %p36 = scmp.eq.s32.totalorder %s35, 0
    %s38 = sadd.s32 %s37, 1
    %s39 = scalar_select %p36, %s37, %s38
    %p42 = pneg %p36
    %p43 = scmp.eq.s32.totalorder %s13, 3
    %p44 = por %p42, %p43
    %p45 = scmp.ne.s32.totalorder %s37, %s40
    %p46 = scmp.eq.s32.totalorder %s13, 0
    %p47 = por %p45, %p46
    %p48 = scmp.ne.s32.totalorder %s37, %s40
    %p49 = scmp.eq.s32.totalorder %s18, 3
    %p50 = por %p48, %p49
    %p51 = scmp.ne.s32.totalorder %s40, %s41
    %p52 = scmp.eq.s32.totalorder %s18, 0
    %p53 = por %p51, %p52
    %p54 = scmp.ne.s32.totalorder %s40, %s41
    %p55 = scmp.eq.s32.totalorder %s19, 3
    %p56 = por %p54, %p55
    %p58 = scmp.ne.s32.totalorder %s41, %s57
    %p59 = scmp.eq.s32.totalorder %s19, 0
    %p60 = por %p58, %p59
    %s61 = ssub.s32 %s20, %s32
    %s62 = ssub.s32 %s21, %s28
    %s63 = sor.u32 %s61, %s62
    %p64 = scmp.eq.s32.totalorder %s63, 0
    %s66 = sadd.s32 %s65, 1
    %s67 = scalar_select %p64, %s65, %s66
    %p70 = pneg %p64
    %p71 = scmp.eq.s32.totalorder %s13, 3
    %p72 = por %p70, %p71
    %p73 = scmp.ne.s32.totalorder %s65, %s68
    %p74 = scmp.eq.s32.totalorder %s13, 0
    %p75 = por %p73, %p74
    %p76 = scmp.ne.s32.totalorder %s65, %s68
    %p77 = scmp.eq.s32.totalorder %s18, 3
    %p78 = por %p76, %p77
    %p79 = scmp.ne.s32.totalorder %s68, %s69
    %p80 = scmp.eq.s32.totalorder %s18, 0
    %p81 = por %p79, %p80
    %p82 = scmp.ne.s32.totalorder %s68, %s69
    %p83 = scmp.eq.s32.totalorder %s19, 3
    %p84 = por %p82, %p83
    %p86 = scmp.ne.s32.totalorder %s69, %s85
    %p87 = scmp.eq.s32.totalorder %s19, 0
    %p88 = por %p86, %p87
    %s90 = sadd.s32 %s89, 1
    %p93 = scmp.eq.s32.totalorder %s13, 3
    %p94 = scmp.ne.s32.totalorder %s89, %s91
    %p95 = scmp.eq.s32.totalorder %s13, 0
    %p96 = por %p94, %p95
    %p97 = scmp.ne.s32.totalorder %s89, %s91
    %p98 = scmp.eq.s32.totalorder %s18, 3
    %p99 = por %p97, %p98
    %p100 = scmp.ne.s32.totalorder %s91, %s92
    %p101 = scmp.eq.s32.totalorder %s18, 0
    %p102 = por %p100, %p101
    %p103 = scmp.ne.s32.totalorder %s91, %s92
    %p104 = scmp.eq.s32.totalorder %s19, 3
    %p105 = por %p103, %p104
    %p107 = scmp.ne.s32.totalorder %s92, %s106
    %p108 = scmp.eq.s32.totalorder %s19, 0
    %p109 = por %p107, %p108
    %s111 = sadd.s32 %s110, 1
    %p114 = scmp.eq.s32.totalorder %s13, 3
    %p115 = scmp.ne.s32.totalorder %s110, %s112
    %p116 = scmp.eq.s32.totalorder %s13, 0
    %p117 = por %p115, %p116
    %p118 = scmp.ne.s32.totalorder %s110, %s112
    %p119 = scmp.eq.s32.totalorder %s18, 3
    %p120 = por %p118, %p119
    %p121 = scmp.ne.s32.totalorder %s112, %s113
    %p122 = scmp.eq.s32.totalorder %s18, 0
    %p123 = por %p121, %p122
    %p124 = scmp.ne.s32.totalorder %s112, %s113
    %p125 = scmp.eq.s32.totalorder %s19, 3
    %p126 = por %p124, %p125
    %p128 = scmp.ne.s32.totalorder %s113, %s127
    %p129 = scmp.eq.s32.totalorder %s19, 0
    %p130 = por %p128, %p129
    %s131 = ssub.s32 %s20, %s32
    %s132 = ssub.s32 %s21, %s28
    %s133 = sor.u32 %s131, %s132
    %p134 = scmp.eq.s32.totalorder %s133, 0
    %s136 = sadd.s32 %s135, 1
    %s137 = scalar_select %p134, %s135, %s136
    %p140 = pneg %p134
    %p141 = scmp.eq.s32.totalorder %s13, 3
    %p142 = por %p140, %p141
    %p143 = scmp.ne.s32.totalorder %s135, %s138
    %p144 = scmp.eq.s32.totalorder %s13, 0
    %p145 = por %p143, %p144
    %p146 = scmp.ne.s32.totalorder %s135, %s138
    %p147 = scmp.eq.s32.totalorder %s18, 3
    %p148 = por %p146, %p147
    %p149 = scmp.ne.s32.totalorder %s138, %s139
    %p150 = scmp.eq.s32.totalorder %s18, 0
    %p151 = por %p149, %p150
    %p152 = scmp.ne.s32.totalorder %s138, %s139
    %p153 = scmp.eq.s32.totalorder %s19, 3
    %p154 = por %p152, %p153
    %p156 = scmp.ne.s32.totalorder %s139, %s155
    %p157 = scmp.eq.s32.totalorder %s19, 0
    %p158 = por %p156, %p157
    %s160 = sadd.s32 %s159, 1
    %p163 = scmp.eq.s32.totalorder %s13, 3
    %p164 = scmp.ne.s32.totalorder %s159, %s161
    %p165 = scmp.eq.s32.totalorder %s13, 0
    %p166 = por %p164, %p165
    %p167 = scmp.ne.s32.totalorder %s159, %s161
    %p168 = scmp.eq.s32.totalorder %s18, 3
    %p169 = por %p167, %p168
    %p170 = scmp.ne.s32.totalorder %s161, %s162
    %p171 = scmp.eq.s32.totalorder %s18, 0
    %p172 = por %p170, %p171
    %p173 = scmp.ne.s32.totalorder %s161, %s162
    %p174 = scmp.eq.s32.totalorder %s19, 3
    %p175 = por %p173, %p174
    %p177 = scmp.ne.s32.totalorder %s162, %s176
    %p178 = scmp.eq.s32.totalorder %s19, 0
    %p179 = por %p177, %p178
    %s181 = sadd.s32 %s180, 1
    %p184 = scmp.eq.s32.totalorder %s13, 3
    %p185 = scmp.ne.s32.totalorder %s180, %s182
    %p186 = scmp.eq.s32.totalorder %s13, 0
    %p187 = por %p185, %p186
    %p188 = scmp.ne.s32.totalorder %s180, %s182
    %p189 = scmp.eq.s32.totalorder %s18, 3
    %p190 = por %p188, %p189
    %p191 = scmp.ne.s32.totalorder %s182, %s183
    %p192 = scmp.eq.s32.totalorder %s18, 0
    %p193 = por %p191, %p192
    %p194 = scmp.ne.s32.totalorder %s182, %s183
    %p195 = scmp.eq.s32.totalorder %s19, 3
    %p196 = por %p194, %p195
    %p198 = scmp.ne.s32.totalorder %s183, %s197
    %p199 = scmp.eq.s32.totalorder %s19, 0
    %p200 = por %p198, %p199
    %s201 = ssub.s32 %s20, %s32
    %s202 = ssub.s32 %s21, %s28
    %s203 = sor.u32 %s201, %s202
    %p204 = scmp.eq.s32.totalorder %s203, 0
    %s206 = sadd.s32 %s205, 1
    %s207 = scalar_select %p204, %s205, %s206
    %p210 = pneg %p204
    %p211 = scmp.eq.s32.totalorder %s13, 3
    %p212 = por %p210, %p211
    %p213 = scmp.ne.s32.totalorder %s205, %s208
    %p214 = scmp.eq.s32.totalorder %s13, 0
    %p215 = por %p213, %p214
    %p216 = scmp.ne.s32.totalorder %s205, %s208
    %p217 = scmp.eq.s32.totalorder %s18, 3
    %p218 = por %p216, %p217
    %p219 = scmp.ne.s32.totalorder %s208, %s209
    %p220 = scmp.eq.s32.totalorder %s18, 0
    %p221 = por %p219, %p220
    %p222 = scmp.ne.s32.totalorder %s208, %s209
    %p223 = scmp.eq.s32.totalorder %s19, 3
    %p224 = por %p222, %p223
    %p226 = scmp.ne.s32.totalorder %s209, %s225
    %p227 = scmp.eq.s32.totalorder %s19, 0
    %p228 = por %p226, %p227
    %p229 = scmp.le.s32.totalorder 1, %s13
    %p230 = scmp.lt.s32.totalorder %s13, 5
    %p231 = pnand %p229, %p230
    %p232 = pneg %p231
    // Predicated region
    $region9: #{block_forward.5} parent=5 // pred_check
      _
    $region10: #{block_forward.5} parent=5 // pred_check_branch
      %234 = sbr.rel (%p231) target = $region12
    $region11: #{block_forward.5} parent=5 // pred_region
      %s235 = ssub.s32 %s13, 1
      // Predicated region
      $region13: #{block_forward.5} parent=11 // pred_check
        %p236 = pneg %p102
      $region14: #{block_forward.5} parent=11 // pred_check_branch
        %238 = sbr.rel (%p236) target = $region16
      $region15: #{block_forward.5} parent=11 // pred_region
        _
      $region16: #{block_forward.5} parent=11 // pred_fallthru
        _
      // Predicated region
      $region17: #{block_forward.5} parent=11 // pred_check
        %p239 = pneg %p123
      $region18: #{block_forward.5} parent=11 // pred_check_branch
        %241 = sbr.rel (%p239) target = $region20
      $region19: #{block_forward.5} parent=11 // pred_region
        _
      $region20: #{block_forward.5} parent=11 // pred_fallthru
        _
      // Predicated region
      $region21: #{block_forward.5} parent=11 // pred_check
        %p242 = pneg %p172
      $region22: #{block_forward.5} parent=11 // pred_check_branch
        %244 = sbr.rel (%p242) target = $region24
      $region23: #{block_forward.5} parent=11 // pred_region
        _
      $region24: #{block_forward.5} parent=11 // pred_fallthru
        _
      // Predicated region
      $region25: #{block_forward.5} parent=11 // pred_check
        %p245 = pneg %p193
      $region26: #{block_forward.5} parent=11 // pred_check_branch
        %247 = sbr.rel (%p245) target = $region28
      $region27: #{block_forward.5} parent=11 // pred_region
        _
      $region28: #{block_forward.5} parent=11 // pred_fallthru
        _
    $region12: #{block_forward.5} parent=5 // pred_fallthru
      _
    %p248 = scmp.lt.s32.totalorder %s13, 4
    // Predicated region
    $region29: #{block_forward.5} parent=5 // pred_check
      %p249 = pneg %p248
    $region30: #{block_forward.5} parent=5 // pred_check_branch
      %251 = sbr.rel (%p249) target = $region32
    $region31: #{block_forward.5} parent=5 // pred_region
      // Predicated region
      $region33: #{block_forward.5} parent=31 // pred_check
        %p252 = pneg %p47
      $region34: #{block_forward.5} parent=31 // pred_check_branch
        %254 = sbr.rel (%p252) target = $region36
      $region35: #{block_forward.5} parent=31 // pred_region
        %s255 = smul.u32 8, %s21
        %s256 = ssub.s32 18, %s255
        %p257 = scmp.lt.s32.totalorder %s256, 8
        %s258 = scalar_select %p257, %s256, 8
        %s259 = smul.u32 128, %s258
        %s260 = smul.u32 %s259, 3
        %p261 = scmp.lt.s32.totalorder %s20, 1
        %s262 = scalar_select %p261, %s20, 1
        %p263 = scmp.lt.s32.totalorder %s255, 17
        %s264 = scalar_select %p263, %s255, 17
        %s265 = smul.addr %s264, 3
        %s266 = smul.addr %s262, 54
        %s267 = sadd.s32 %s265, %s266
        %s268 = smul.addr %s267, 8
        %s269 = scalar_lea.vmem %s0, %s268
        %s270 = smul.u32 8, %s21
        %s271 = ssub.s32 18, %s270
        %p272 = scmp.lt.s32.totalorder %s271, 8
        %s273 = scalar_select %p272, %s271, 8
        %s274 = smul.u32 128, %s273
        %s275 = smul.u32 %s274, 3
      $region36: #{block_forward.5} parent=31 // pred_fallthru
        _
      // Predicated region
      $region37: #{block_forward.5} parent=31 // pred_check
        %p276 = pneg %p75
      $region38: #{block_forward.5} parent=31 // pred_check_branch
        %278 = sbr.rel (%p276) target = $region40
      $region39: #{block_forward.5} parent=31 // pred_region
        %s279 = smul.u32 2, %s21
        %p280 = scmp.lt.s32.totalorder %s20, 1
        %s281 = scalar_select %p280, %s20, 1
        %p282 = scmp.lt.s32.totalorder %s279, 3
        %s283 = scalar_select %p282, %s279, 3
        %s284 = smul.addr %s283, 3
        %s285 = smul.addr %s281, 12
        %s286 = sadd.s32 %s284, %s285
        %s287 = smul.addr %s286, 8
        %s288 = scalar_lea.vmem %s1, %s287
        %s289 = smul.u32 2, %s21
      $region40: #{block_forward.5} parent=31 // pred_fallthru
        _
      // Predicated region
      $region41: #{block_forward.5} parent=31 // pred_check
        %p290 = pneg %p145
      $region42: #{block_forward.5} parent=31 // pred_check_branch
        %292 = sbr.rel (%p290) target = $region44
      $region43: #{block_forward.5} parent=31 // pred_region
        %s293 = smul.u32 8, %s21
        %p294 = scmp.lt.s32.totalorder %s20, 1
        %s295 = scalar_select %p294, %s20, 1
        %p296 = scmp.lt.s32.totalorder %s293, 15
        %s297 = scalar_select %p296, %s293, 15
        %s298 = smul.addr %s297, 2
        %s299 = smul.addr %s295, 32
        %s300 = sadd.s32 %s298, %s299
        %s301 = smul.addr %s300, 8
        %s302 = scalar_lea.vmem %s4, %s301
        %s303 = smul.u32 8, %s21
      $region44: #{block_forward.5} parent=31 // pred_fallthru
        _
    $region32: #{block_forward.5} parent=5 // pred_fallthru
      _
    %p304 = scmp.le.s32.totalorder 1, %s13
    %p305 = scmp.lt.s32.totalorder %s13, 5
    %p306 = pnand %p304, %p305
    %p307 = pneg %p306
    // Predicated region
    $region45: #{block_forward.5} parent=5 // pred_check
      _
    $region46: #{block_forward.5} parent=5 // pred_check_branch
      %309 = sbr.rel (%p306) target = $region48
    $region47: #{block_forward.5} parent=5 // pred_region
      %s310 = ssub.s32 %s13, 1
      %s311 = smul.u32 8, %s23
      %s312 = ssub.s32 18, %s311
      %p313 = scmp.lt.s32.totalorder %s312, 8
      %s314 = scalar_select %p313, %s312, 8
      %s315 = smul.u32 128, %s314
      %s316 = smul.u32 %s315, 3
      %p317 = scmp.lt.s32.totalorder %s22, 1
      %s318 = scalar_select %p317, %s22, 1
      %p319 = scmp.lt.s32.totalorder %s311, 17
      %s320 = scalar_select %p319, %s311, 17
      %s321 = smul.addr %s320, 3
      %s322 = smul.addr %s318, 54
      %s323 = sadd.s32 %s321, %s322
      %s324 = smul.addr %s323, 8
      %s325 = scalar_lea.vmem %s0, %s324
      %p326 = pneg %p53
      %p327 = pneg %p50
      %s328 = smul.u32 2, %s23
      %p329 = scmp.lt.s32.totalorder %s22, 1
      %s330 = scalar_select %p329, %s22, 1
      %p331 = scmp.lt.s32.totalorder %s328, 3
      %s332 = scalar_select %p331, %s328, 3
      %s333 = smul.addr %s332, 3
      %s334 = smul.addr %s330, 12
      %s335 = sadd.s32 %s333, %s334
      %s336 = smul.addr %s335, 8
      %s337 = scalar_lea.vmem %s1, %s336
      %p338 = pneg %p81
      %p339 = pneg %p78
      %p340 = pneg %p102
      %p341 = pneg %p99
      %p342 = pneg %p123
      %p343 = pneg %p120
      %s344 = smul.u32 8, %s23
      %p345 = scmp.lt.s32.totalorder %s22, 1
      %s346 = scalar_select %p345, %s22, 1
      %p347 = scmp.lt.s32.totalorder %s344, 15
      %s348 = scalar_select %p347, %s344, 15
      %s349 = smul.addr %s348, 2
      %s350 = smul.addr %s346, 32
      %s351 = sadd.s32 %s349, %s350
      %s352 = smul.addr %s351, 8
      %s353 = scalar_lea.vmem %s4, %s352
      %p354 = pneg %p151
      %p355 = pneg %p148
      %p356 = pneg %p172
      %p357 = pneg %p169
      %p358 = pneg %p193
      %p359 = pneg %p190
      %p360 = pneg %p221
      %p361 = pneg %p218
      %s362 = smul.u32 8, %s23
      %p363 = scmp.lt.s32.totalorder %s22, 1
      %s364 = scalar_select %p363, %s22, 1
      %p365 = scmp.lt.s32.totalorder %s362, 15
      %s366 = scalar_select %p365, %s362, 15
      %s367 = smul.addr %s366, 2
      %s368 = smul.addr %s364, 32
      %s369 = sadd.s32 %s367, %s368
      %s370 = smul.addr %s369, 8
      %s371 = scalar_lea.vmem %s7, %s370
      %s372 = smul.u32 8, %s23
      %s373 = ssub.s32 18, %s372
      %p374 = scmp.lt.s32.totalorder %s373, 8
      %s375 = scalar_select %p374, %s373, 8
      %s376 = smul.u32 128, %s375
      %s377 = smul.u32 %s376, 3
      %p378 = scmp.lt.s32.totalorder %s22, 1
      %s379 = scalar_select %p378, %s22, 1
      %p380 = scmp.lt.s32.totalorder %s372, 17
      %s381 = scalar_select %p380, %s372, 17
      %s382 = smul.addr %s381, 3
      %s383 = smul.addr %s379, 54
      %s384 = sadd.s32 %s382, %s383
      %s385 = smul.addr %s384, 8
      %s386 = scalar_lea.vmem %s0, %s385
      %s387 = smul.u32 8, %s23
      %s388 = ssub.s32 18, %s387
      %p389 = scmp.lt.s32.totalorder %s388, 8
      %s390 = scalar_select %p389, %s388, 8
      %s391 = smul.u32 128, %s390
      %s392 = smul.u32 %s391, 3
      %s393 = smul.u32 2, %s23
      %p394 = scmp.lt.s32.totalorder %s22, 1
      %s395 = scalar_select %p394, %s22, 1
      %p396 = scmp.lt.s32.totalorder %s393, 3
      %s397 = scalar_select %p396, %s393, 3
      %s398 = smul.addr %s397, 3
      %s399 = smul.addr %s395, 12
      %s400 = sadd.s32 %s398, %s399
      %s401 = smul.addr %s400, 8
      %s402 = scalar_lea.vmem %s1, %s401
      %s403 = smul.u32 2, %s23
      %s404 = smul.u32 8, %s23
      %p405 = scmp.lt.s32.totalorder %s22, 1
      %s406 = scalar_select %p405, %s22, 1
      %p407 = scmp.lt.s32.totalorder %s404, 15
      %s408 = scalar_select %p407, %s404, 15
      %s409 = smul.addr %s408, 2
      %s410 = smul.addr %s406, 32
      %s411 = sadd.s32 %s409, %s410
      %s412 = smul.addr %s411, 8
      %s413 = scalar_lea.vmem %s4, %s412
      %s414 = smul.u32 8, %s23
      %s415 = smul.u32 8, %s23
      %p416 = scmp.lt.s32.totalorder %s22, 1
      %s417 = scalar_select %p416, %s22, 1
      %p418 = scmp.lt.s32.totalorder %s415, 15
      %s419 = scalar_select %p418, %s415, 15
      %s420 = smul.addr %s419, 2
      %s421 = smul.addr %s417, 32
      %s422 = sadd.s32 %s420, %s421
      %s423 = smul.addr %s422, 8
      %s424 = scalar_lea.vmem %s7, %s423
      %s425 = smul.u32 8, %s23
      %v426 = vld [vmem:[%s386] sm:$0xff]
      %v427 = vld [vmem:[%s386 + $0x8] sm:$0xff]
      %v428 = vld [vmem:[%s386 + $0x10] sm:$0x3]
      %v429 = vld [vmem:[%s386 + $0x18] sm:$0xff]
      %v430 = vld [vmem:[%s386 + $0x20] sm:$0xff]
      %v431 = vld [vmem:[%s386 + $0x28] sm:$0x3]
      %v432 = vld [vmem:[%s386 + $0x30] sm:$0xff]
      %v433 = vld [vmem:[%s386 + $0x38] sm:$0xff]
      %v434 = vld [vmem:[%s386 + $0x40] sm:$0x3]
      %v435 = vld [vmem:[%s386 + $0x48] sm:$0xff]
      %v436 = vld [vmem:[%s386 + $0x50] sm:$0xff]
      %v437 = vld [vmem:[%s386 + $0x58] sm:$0x3]
      %v438 = vld [vmem:[%s386 + $0x60] sm:$0xff]
      %v439 = vld [vmem:[%s386 + $0x68] sm:$0xff]
      %v440 = vld [vmem:[%s386 + $0x70] sm:$0x3]
      %v441 = vld [vmem:[%s386 + $0x78] sm:$0xff]
      %v442 = vld [vmem:[%s386 + $0x80] sm:$0xff]
      %v443 = vld [vmem:[%s386 + $0x88] sm:$0x3]
      %v444 = vld [vmem:[%s386 + $0x90] sm:$0xff]
      %v445 = vld [vmem:[%s386 + $0x98] sm:$0xff]
      %v446 = vld [vmem:[%s386 + $0xa0] sm:$0x3]
      %v447 = vld [vmem:[%s386 + $0xa8] sm:$0xff]
      %v448 = vld [vmem:[%s386 + $0xb0] sm:$0xff]
      %v449 = vld [vmem:[%s386 + $0xb8] sm:$0x3]
      %v450 = vld [vmem:[%s402] sm:$0xff]
      %v451 = vld [vmem:[%s402 + $0x8] sm:$0xff]
      %v452 = vld [vmem:[%s402 + $0x10] sm:$0x3]
      %v453 = vld [vmem:[%s402 + $0x18] sm:$0xff]
      %v454 = vld [vmem:[%s402 + $0x20] sm:$0xff]
      %v455 = vld [vmem:[%s402 + $0x28] sm:$0x3]
      %vm480 = vcmask 1046528
      %v481 = vrot.slane %v426, 1
      %v482 = vrot.slane %v427, 1
      %v483 = vsel %vm480, %v481, %v482
      %v484 = vrot.slane %v428, 1
      %v485 = vsel %vm480, %v482, %v484
      %v486 = vrot.slane %v429, 1
      %v487 = vrot.slane %v430, 1
      %v488 = vsel %vm480, %v486, %v487
      %v489 = vrot.slane %v431, 1
      %v490 = vsel %vm480, %v487, %v489
      %v491 = vrot.slane %v432, 1
      %v492 = vrot.slane %v433, 1
      %v493 = vsel %vm480, %v491, %v492
      %v494 = vrot.slane %v434, 1
      %v495 = vsel %vm480, %v492, %v494
      %v496 = vrot.slane %v435, 1
      %v497 = vrot.slane %v436, 1
      %v498 = vsel %vm480, %v496, %v497
      %v499 = vrot.slane %v437, 1
      %v500 = vsel %vm480, %v497, %v499
      %v501 = vrot.slane %v438, 1
      %v502 = vrot.slane %v439, 1
      %v503 = vsel %vm480, %v501, %v502
      %v504 = vrot.slane %v440, 1
      %v505 = vsel %vm480, %v502, %v504
      %v506 = vrot.slane %v441, 1
      %v507 = vrot.slane %v442, 1
      %v508 = vsel %vm480, %v506, %v507
      %v509 = vrot.slane %v443, 1
      %v510 = vsel %vm480, %v507, %v509
      %v511 = vrot.slane %v444, 1
      %v512 = vrot.slane %v445, 1
      %v513 = vsel %vm480, %v511, %v512
      %v514 = vrot.slane %v446, 1
      %v515 = vsel %vm480, %v512, %v514
      %v516 = vrot.slane %v447, 1
      %v517 = vrot.slane %v448, 1
      %v518 = vsel %vm480, %v516, %v517
      %v519 = vrot.slane %v449, 1
      %v520 = vsel %vm480, %v517, %v519
      %vm537 = vcmask 1045504
      %v538 = vrot.slane %v426, 2
      %v539 = vrot.slane %v427, 2
      %v540 = vsel %vm537, %v538, %v539
      %v541 = vrot.slane %v428, 2
      %v542 = vsel %vm537, %v539, %v541
      %v543 = vrot.slane %v429, 2
      %v544 = vrot.slane %v430, 2
      %v545 = vsel %vm537, %v543, %v544
      %v546 = vrot.slane %v431, 2
      %v547 = vsel %vm537, %v544, %v546
      %v548 = vrot.slane %v432, 2
      %v549 = vrot.slane %v433, 2
      %v550 = vsel %vm537, %v548, %v549
      %v551 = vrot.slane %v434, 2
      %v552 = vsel %vm537, %v549, %v551
      %v553 = vrot.slane %v435, 2
      %v554 = vrot.slane %v436, 2
      %v555 = vsel %vm537, %v553, %v554
      %v556 = vrot.slane %v437, 2
      %v557 = vsel %vm537, %v554, %v556
      %v558 = vrot.slane %v438, 2
      %v559 = vrot.slane %v439, 2
      %v560 = vsel %vm537, %v558, %v559
      %v561 = vrot.slane %v440, 2
      %v562 = vsel %vm537, %v559, %v561
      %v563 = vrot.slane %v441, 2
      %v564 = vrot.slane %v442, 2
      %v565 = vsel %vm537, %v563, %v564
      %v566 = vrot.slane %v443, 2
      %v567 = vsel %vm537, %v564, %v566
      %v568 = vrot.slane %v444, 2
      %v569 = vrot.slane %v445, 2
      %v570 = vsel %vm537, %v568, %v569
      %v571 = vrot.slane %v446, 2
      %v572 = vsel %vm537, %v569, %v571
      %v573 = vrot.slane %v447, 2
      %v574 = vrot.slane %v448, 2
      %v575 = vsel %vm537, %v573, %v574
      %v576 = vrot.slane %v449, 2
      %v577 = vsel %vm537, %v574, %v576
      %v594 = vld [vmem:[%s2] sm:$0xff]
      %v595 = vld [vmem:[%s2 + $0x8] sm:$0xff]
      %v596 = vld [vmem:[%s2 + $0x10] sm:$0xff]
      %v597 = vld [vmem:[%s2 + $0x18] sm:$0xff]
      %v598 = vld [vmem:[%s2 + $0x20] sm:$0xff]
      %v599 = vld [vmem:[%s2 + $0x28] sm:$0xff]
      %v600 = vld [vmem:[%s2 + $0x30] sm:$0xff]
      %v601 = vld [vmem:[%s2 + $0x38] sm:$0xff]
      %v602 = vld [vmem:[%s2 + $0x40] sm:$0xff]
      %v603 = vld [vmem:[%s2 + $0x48] sm:$0xff]
      %v604 = vld [vmem:[%s2 + $0x50] sm:$0xff]
      %v605 = vld [vmem:[%s2 + $0x58] sm:$0xff]
      %v606 = vld [vmem:[%s2 + $0x60] sm:$0xff]
      %v607 = vld [vmem:[%s2 + $0x68] sm:$0xff]
      %v608 = vld [vmem:[%s2 + $0x70] sm:$0xff]
      %v609 = vld [vmem:[%s2 + $0x78] sm:$0xff]
      %v610 = vld [vmem:[%s2 + $0x80] sm:$0xff]
      %v611 = vld [vmem:[%s2 + $0x88] sm:$0xff]
      %v612 = vld [vmem:[%s2 + $0x90] sm:$0xff]
      %v613 = vld [vmem:[%s2 + $0x98] sm:$0xff]
      %v614 = vld [vmem:[%s2 + $0xa0] sm:$0xff]
      %v615 = vld [vmem:[%s2 + $0xa8] sm:$0xff]
      %v616 = vld [vmem:[%s2 + $0xb0] sm:$0xff]
      %v617 = vld [vmem:[%s2 + $0xb8] sm:$0xff]
      %v618 = vld [vmem:[%s2 + $0xc0] sm:$0xff]
      %v619 = vld [vmem:[%s2 + $0xc8] sm:$0xff]
      %v620 = vld [vmem:[%s2 + $0xd0] sm:$0xff]
      %v621 = vld [vmem:[%s2 + $0xd8] sm:$0xff]
      %v622 = vld [vmem:[%s2 + $0xe0] sm:$0xff]
      %v623 = vld [vmem:[%s2 + $0xe8] sm:$0xff]
      %v624 = vld [vmem:[%s2 + $0xf0] sm:$0xff]
      %v625 = vld [vmem:[%s2 + $0xf8] sm:$0xff]
      %v626 = vld [vmem:[%s2 + $0x100] sm:$0xff]
      %v627 = vld [vmem:[%s2 + $0x108] sm:$0xff]
      %v628 = vld [vmem:[%s2 + $0x110] sm:$0xff]
      %v629 = vld [vmem:[%s2 + $0x118] sm:$0xff]
      %v630 = vld [vmem:[%s2 + $0x120] sm:$0xff]
      %v631 = vld [vmem:[%s2 + $0x128] sm:$0xff]
      %v632 = vld [vmem:[%s2 + $0x130] sm:$0xff]
      %v633 = vld [vmem:[%s2 + $0x138] sm:$0xff]
      %v634 = vld [vmem:[%s2 + $0x140] sm:$0xff]
      %v635 = vld [vmem:[%s2 + $0x148] sm:$0xff]
      %v636 = vld [vmem:[%s2 + $0x150] sm:$0xff]
      %v637 = vld [vmem:[%s2 + $0x158] sm:$0xff]
      %v638 = vld [vmem:[%s2 + $0x160] sm:$0xff]
      %v639 = vld [vmem:[%s2 + $0x168] sm:$0xff]
      %v640 = vld [vmem:[%s2 + $0x170] sm:$0xff]
      %v641 = vld [vmem:[%s2 + $0x178] sm:$0xff]
      %v645 = vrot.slane %v450, 1
      %v646 = vrot.slane %v451, 1
      %v647 = vsel %vm480, %v645, %v646
      %v648 = vrot.slane %v452, 1
      %v649 = vsel %vm480, %v646, %v648
      %v652 = vrot.slane %v450, 2
      %v653 = vrot.slane %v451, 2
      %v654 = vsel %vm537, %v652, %v653
      %v655 = vrot.slane %v452, 2
      %v656 = vsel %vm537, %v653, %v655
      %s659 = scalar_lea.vmem %s2, 384
      %v660 = vld [vmem:[%s659] sm:$0xff]
      %v661 = vld [vmem:[%s659 + $0x8] sm:$0xff]
      %v662 = vld [vmem:[%s659 + $0x10] sm:$0xff]
      %v663 = vld [vmem:[%s659 + $0x18] sm:$0xff]
      %v664 = vld [vmem:[%s659 + $0x20] sm:$0xff]
      %v665 = vld [vmem:[%s659 + $0x28] sm:$0xff]
      %v666 = vld [vmem:[%s659 + $0x30] sm:$0xff]
      %v667 = vld [vmem:[%s659 + $0x38] sm:$0xff]
      %v668 = vld [vmem:[%s659 + $0x40] sm:$0xff]
      %v669 = vld [vmem:[%s659 + $0x48] sm:$0xff]
      %v670 = vld [vmem:[%s659 + $0x50] sm:$0xff]
      %v671 = vld [vmem:[%s659 + $0x58] sm:$0xff]
      %v672 = vld [vmem:[%s659 + $0x60] sm:$0xff]
      %v673 = vld [vmem:[%s659 + $0x68] sm:$0xff]
      %v674 = vld [vmem:[%s659 + $0x70] sm:$0xff]
      %v675 = vld [vmem:[%s659 + $0x78] sm:$0xff]
      %v676 = vld [vmem:[%s659 + $0x80] sm:$0xff]
      %v677 = vld [vmem:[%s659 + $0x88] sm:$0xff]
      %v678 = vld [vmem:[%s659 + $0x90] sm:$0xff]
      %v679 = vld [vmem:[%s659 + $0x98] sm:$0xff]
      %v680 = vld [vmem:[%s659 + $0xa0] sm:$0xff]
      %v681 = vld [vmem:[%s659 + $0xa8] sm:$0xff]
      %v682 = vld [vmem:[%s659 + $0xb0] sm:$0xff]
      %v683 = vld [vmem:[%s659 + $0xb8] sm:$0xff]
      %v684 = vld [vmem:[%s659 + $0xc0] sm:$0xff]
      %v685 = vld [vmem:[%s659 + $0xc8] sm:$0xff]
      %v686 = vld [vmem:[%s659 + $0xd0] sm:$0xff]
      %v687 = vld [vmem:[%s659 + $0xd8] sm:$0xff]
      %v688 = vld [vmem:[%s659 + $0xe0] sm:$0xff]
      %v689 = vld [vmem:[%s659 + $0xe8] sm:$0xff]
      %v690 = vld [vmem:[%s659 + $0xf0] sm:$0xff]
      %v691 = vld [vmem:[%s659 + $0xf8] sm:$0xff]
      %v692 = vld [vmem:[%s659 + $0x100] sm:$0xff]
      %v693 = vld [vmem:[%s659 + $0x108] sm:$0xff]
      %v694 = vld [vmem:[%s659 + $0x110] sm:$0xff]
      %v695 = vld [vmem:[%s659 + $0x118] sm:$0xff]
      %v696 = vld [vmem:[%s659 + $0x120] sm:$0xff]
      %v697 = vld [vmem:[%s659 + $0x128] sm:$0xff]
      %v698 = vld [vmem:[%s659 + $0x130] sm:$0xff]
      %v699 = vld [vmem:[%s659 + $0x138] sm:$0xff]
      %v700 = vld [vmem:[%s659 + $0x140] sm:$0xff]
      %v701 = vld [vmem:[%s659 + $0x148] sm:$0xff]
      %v702 = vld [vmem:[%s659 + $0x150] sm:$0xff]
      %v703 = vld [vmem:[%s659 + $0x158] sm:$0xff]
      %v704 = vld [vmem:[%s659 + $0x160] sm:$0xff]
      %v705 = vld [vmem:[%s659 + $0x168] sm:$0xff]
      %v706 = vld [vmem:[%s659 + $0x170] sm:$0xff]
      %v707 = vld [vmem:[%s659 + $0x178] sm:$0xff]
      %708 = vmatprep.subr.mxu0 0.0
      %709 = vmatpush1.msra.mxu0 %v675
      %710 = vmatprep.subr.mxu0 0.0
      %711 = vmatpush1.msra.mxu0 %v674
      %712 = vmatprep.subr.mxu0 0.0
      %713 = vmatpush1.msra.mxu0 %v673
      %714 = vmatprep.subr.mxu0 0.0
      %715 = vmatpush1.msra.mxu0 %v672
      %716 = vmatprep.subr.mxu0 0.0
      %717 = vmatpush1.msra.mxu0 %v671
      %718 = vmatprep.subr.mxu0 0.0
      %719 = vmatpush1.msra.mxu0 %v670
      %720 = vmatprep.subr.mxu0 0.0
      %721 = vmatpush1.msra.mxu0 %v669
      %722 = vmatprep.subr.mxu0 0.0
      %723 = vmatpush1.msra.mxu0 %v668
      %724 = vmatprep.subr.mxu0 0.0
      %725 = vmatpush1.msra.mxu0 %v667
      %726 = vmatprep.subr.mxu0 0.0
      %727 = vmatpush1.msra.mxu0 %v666
      %728 = vmatprep.subr.mxu0 0.0
      %729 = vmatpush1.msra.mxu0 %v665
      %730 = vmatprep.subr.mxu0 0.0
      %731 = vmatpush1.msra.mxu0 %v664
      %732 = vmatprep.subr.mxu0 0.0
      %733 = vmatpush1.msra.mxu0 %v663
      %734 = vmatprep.subr.mxu0 0.0
      %735 = vmatpush1.msra.mxu0 %v662
      %736 = vmatprep.subr.mxu0 0.0
      %737 = vmatpush1.msra.mxu0 %v661
      %738 = vmatprep.subr.mxu0 0.0
      %739 = vmatpush1.msra.mxu0 %v660
      %740 = vmatprep.subr.mxu0 0.0
      %741 = vmatpush2.msra.mxu0 %v691
      %742 = vmatprep.subr.mxu0 0.0
      %743 = vmatpush2.msra.mxu0 %v690
      %744 = vmatprep.subr.mxu0 0.0
      %745 = vmatpush2.msra.mxu0 %v689
      %746 = vmatprep.subr.mxu0 0.0
      %747 = vmatpush2.msra.mxu0 %v688
      %748 = vmatprep.subr.mxu0 0.0
      %749 = vmatpush2.msra.mxu0 %v687
      %750 = vmatprep.subr.mxu0 0.0
      %751 = vmatpush2.msra.mxu0 %v686
      %752 = vmatprep.subr.mxu0 0.0
      %753 = vmatpush2.msra.mxu0 %v685
      %754 = vmatprep.subr.mxu0 0.0
      %755 = vmatpush2.msra.mxu0 %v684
      %756 = vmatprep.subr.mxu0 0.0
      %757 = vmatpush2.msra.mxu0 %v683
      %758 = vmatprep.subr.mxu0 0.0
      %759 = vmatpush2.msra.mxu0 %v682
      %760 = vmatprep.subr.mxu0 0.0
      %761 = vmatpush2.msra.mxu0 %v681
      %762 = vmatprep.subr.mxu0 0.0
      %763 = vmatpush2.msra.mxu0 %v680
      %764 = vmatprep.subr.mxu0 0.0
      %765 = vmatpush2.msra.mxu0 %v679
      %766 = vmatprep.subr.mxu0 0.0
      %767 = vmatpush2.msra.mxu0 %v678
      %768 = vmatprep.subr.mxu0 0.0
      %769 = vmatpush2.msra.mxu0 %v677
      %770 = vmatprep.subr.mxu0 0.0
      %771 = vmatpush2.msra.mxu0 %v676
      %772 = vmatprep.mubr.f32.mxu0 %v488
      %773 = vmatmul.mubr.f32.gmra.mxu0 %v429
      %v774 = vpop.f32.mrf.mxu0
      %v775 = vadd.f32 0.0, %v774
      %v776 = vpop.f32.mrf.mxu0
      %777 = vmatprep.mubr.f32.mxu0 %v490
      %778 = vmatmul.mubr.f32.gmra.mxu0 %v430
      %v779 = vpop.f32.mrf.mxu0
      %v780 = vadd.f32 0.0, %v779
      %v781 = vpop.f32.mrf.mxu0
      %782 = vmatprep.mubr.f32.mxu0 %v493
      %783 = vmatmul.mubr.f32.gmra.mxu0 %v432
      %v784 = vpop.f32.mrf.mxu0
      %v785 = vadd.f32 0.0, %v784
      %v786 = vpop.f32.mrf.mxu0
      %787 = vmatprep.mubr.f32.mxu0 %v495
      %788 = vmatmul.mubr.f32.gmra.mxu0 %v433
      %v789 = vpop.f32.mrf.mxu0
      %v790 = vadd.f32 0.0, %v789
      %v791 = vpop.f32.mrf.mxu0
      %792 = vmatprep.mubr.f32.mxu0 %v498
      %793 = vmatmul.mubr.f32.gmra.mxu0 %v435
      %v794 = vpop.f32.mrf.mxu0
      %v795 = vadd.f32 0.0, %v794
      %v796 = vpop.f32.mrf.mxu0
      %797 = vmatprep.mubr.f32.mxu0 %v500
      %798 = vmatmul.mubr.f32.gmra.mxu0 %v436
      %v799 = vpop.f32.mrf.mxu0
      %v800 = vadd.f32 0.0, %v799
      %v801 = vpop.f32.mrf.mxu0
      %802 = vmatprep.mubr.f32.mxu0 %v503
      %803 = vmatmul.mubr.f32.gmra.mxu0 %v438
      %v804 = vpop.f32.mrf.mxu0
      %v805 = vadd.f32 0.0, %v804
      %v806 = vpop.f32.mrf.mxu0
      %807 = vmatprep.mubr.f32.mxu0 %v505
      %808 = vmatmul.mubr.f32.gmra.mxu0 %v439
      %v809 = vpop.f32.mrf.mxu0
      %v810 = vadd.f32 0.0, %v809
      %v811 = vpop.f32.mrf.mxu0
      %812 = vmatprep.mubr.f32.mxu0 %v508
      %813 = vmatmul.mubr.f32.gmra.mxu0 %v441
      %v814 = vpop.f32.mrf.mxu0
      %v815 = vadd.f32 0.0, %v814
      %v816 = vpop.f32.mrf.mxu0
      %817 = vmatprep.mubr.f32.mxu0 %v510
      %818 = vmatmul.mubr.f32.gmra.mxu0 %v442
      %v819 = vpop.f32.mrf.mxu0
      %v820 = vadd.f32 0.0, %v819
      %v821 = vpop.f32.mrf.mxu0
      %822 = vmatprep.mubr.f32.mxu0 %v513
      %823 = vmatmul.mubr.f32.gmra.mxu0 %v444
      %v824 = vpop.f32.mrf.mxu0
      %v825 = vadd.f32 0.0, %v824
      %v826 = vpop.f32.mrf.mxu0
      %827 = vmatprep.mubr.f32.mxu0 %v515
      %828 = vmatmul.mubr.f32.gmra.mxu0 %v445
      %v829 = vpop.f32.mrf.mxu0
      %v830 = vadd.f32 0.0, %v829
      %v831 = vpop.f32.mrf.mxu0
      %832 = vmatprep.mubr.f32.mxu0 %v518
      %833 = vmatmul.mubr.f32.gmra.mxu0 %v447
      %v834 = vpop.f32.mrf.mxu0
      %v835 = vadd.f32 0.0, %v834
      %v836 = vpop.f32.mrf.mxu0
      %837 = vmatprep.mubr.f32.mxu0 %v520
      %838 = vmatmul.mubr.f32.gmra.mxu0 %v448
      %v839 = vpop.f32.mrf.mxu0
      %v840 = vadd.f32 0.0, %v839
      %v841 = vpop.f32.mrf.mxu0
      %842 = vmatprep.mubr.f32.mxu0 %v647
      %843 = vmatmul.mubr.f32.gmra.mxu0 %v450
      %v844 = vpop.f32.mrf.mxu0
      %v845 = vadd.f32 0.0, %v844
      %v846 = vpop.f32.mrf.mxu0
      %847 = vmatprep.mubr.f32.mxu0 %v649
      %848 = vmatmul.mubr.f32.gmra.mxu0 %v451
      %v849 = vpop.f32.mrf.mxu0
      %v850 = vadd.f32 0.0, %v849
      %v851 = vpop.f32.mrf.mxu0
      %852 = vdwg.mxu0
      %853 = vmatprep.subr.mxu0 0.0
      %854 = vmatpush1.msra.mxu0 %v707
      %855 = vmatprep.subr.mxu0 0.0
      %856 = vmatpush1.msra.mxu0 %v706
      %857 = vmatprep.subr.mxu0 0.0
      %858 = vmatpush1.msra.mxu0 %v705
      %859 = vmatprep.subr.mxu0 0.0
      %860 = vmatpush1.msra.mxu0 %v704
      %861 = vmatprep.subr.mxu0 0.0
      %862 = vmatpush1.msra.mxu0 %v703
      %863 = vmatprep.subr.mxu0 0.0
      %864 = vmatpush1.msra.mxu0 %v702
      %865 = vmatprep.subr.mxu0 0.0
      %866 = vmatpush1.msra.mxu0 %v701
      %867 = vmatprep.subr.mxu0 0.0
      %868 = vmatpush1.msra.mxu0 %v700
      %869 = vmatprep.subr.mxu0 0.0
      %870 = vmatpush1.msra.mxu0 %v699
      %871 = vmatprep.subr.mxu0 0.0
      %872 = vmatpush1.msra.mxu0 %v698
      %873 = vmatprep.subr.mxu0 0.0
      %874 = vmatpush1.msra.mxu0 %v697
      %875 = vmatprep.subr.mxu0 0.0
      %876 = vmatpush1.msra.mxu0 %v696
      %877 = vmatprep.subr.mxu0 0.0
      %878 = vmatpush1.msra.mxu0 %v695
      %879 = vmatprep.subr.mxu0 0.0
      %880 = vmatpush1.msra.mxu0 %v694
      %881 = vmatprep.subr.mxu0 0.0
      %882 = vmatpush1.msra.mxu0 %v693
      %883 = vmatprep.subr.mxu0 0.0
      %884 = vmatpush1.msra.mxu0 %v692
      %885 = vmatprep.subr.mxu0 0.0
      %886 = vmatpush2.msra.mxu0 0.0
      %887 = vmatprep.subr.mxu0 0.0
      %888 = vmatpush2.msra.mxu0 0.0
      %889 = vmatprep.subr.mxu0 0.0
      %890 = vmatpush2.msra.mxu0 0.0
      %891 = vmatprep.subr.mxu0 0.0
      %892 = vmatpush2.msra.mxu0 0.0
      %893 = vmatprep.subr.mxu0 0.0
      %894 = vmatpush2.msra.mxu0 0.0
      %895 = vmatprep.subr.mxu0 0.0
      %896 = vmatpush2.msra.mxu0 0.0
      %897 = vmatprep.subr.mxu0 0.0
      %898 = vmatpush2.msra.mxu0 0.0
      %899 = vmatprep.subr.mxu0 0.0
      %900 = vmatpush2.msra.mxu0 0.0
      %901 = vmatprep.subr.mxu0 0.0
      %902 = vmatpush2.msra.mxu0 0.0
      %903 = vmatprep.subr.mxu0 0.0
      %904 = vmatpush2.msra.mxu0 0.0
      %905 = vmatprep.subr.mxu0 0.0
      %906 = vmatpush2.msra.mxu0 0.0
      %907 = vmatprep.subr.mxu0 0.0
      %908 = vmatpush2.msra.mxu0 0.0
      %909 = vmatprep.subr.mxu0 0.0
      %910 = vmatpush2.msra.mxu0 0.0
      %911 = vmatprep.subr.mxu0 0.0
      %912 = vmatpush2.msra.mxu0 0.0
      %913 = vmatprep.subr.mxu0 0.0
      %914 = vmatpush2.msra.mxu0 0.0
      %915 = vmatprep.subr.mxu0 0.0
      %916 = vmatpush2.msra.mxu0 0.0
      %917 = vmatprep.mubr.f32.mxu0 0.0
      %918 = vmatmul.mubr.f32.gmra.mxu0 %v545
      %v919 = vpop.f32.mrf.mxu0
      %v920 = vadd.f32 %v775, %v919
      %v921 = vpop.f32.mrf.mxu0
      %922 = vmatprep.mubr.f32.mxu0 0.0
      %923 = vmatmul.mubr.f32.gmra.mxu0 %v547
      %v924 = vpop.f32.mrf.mxu0
      %v925 = vadd.f32 %v780, %v924
      %v926 = vpop.f32.mrf.mxu0
      %927 = vmatprep.mubr.f32.mxu0 0.0
      %928 = vmatmul.mubr.f32.gmra.mxu0 %v550
      %v929 = vpop.f32.mrf.mxu0
      %v930 = vadd.f32 %v785, %v929
      %v931 = vpop.f32.mrf.mxu0
      %932 = vmatprep.mubr.f32.mxu0 0.0
      %933 = vmatmul.mubr.f32.gmra.mxu0 %v552
      %v934 = vpop.f32.mrf.mxu0
      %v935 = vadd.f32 %v790, %v934
      %v936 = vpop.f32.mrf.mxu0
      %937 = vmatprep.mubr.f32.mxu0 0.0
      %938 = vmatmul.mubr.f32.gmra.mxu0 %v555
      %v939 = vpop.f32.mrf.mxu0
      %v940 = vadd.f32 %v795, %v939
      %v941 = vpop.f32.mrf.mxu0
      %942 = vmatprep.mubr.f32.mxu0 0.0
      %943 = vmatmul.mubr.f32.gmra.mxu0 %v557
      %v944 = vpop.f32.mrf.mxu0
      %v945 = vadd.f32 %v800, %v944
      %v946 = vpop.f32.mrf.mxu0
      %947 = vmatprep.mubr.f32.mxu0 0.0
      %948 = vmatmul.mubr.f32.gmra.mxu0 %v560
      %v949 = vpop.f32.mrf.mxu0
      %v950 = vadd.f32 %v805, %v949
      %v951 = vpop.f32.mrf.mxu0
      %952 = vmatprep.mubr.f32.mxu0 0.0
      %953 = vmatmul.mubr.f32.gmra.mxu0 %v562
      %v954 = vpop.f32.mrf.mxu0
      %v955 = vadd.f32 %v810, %v954
      %v956 = vpop.f32.mrf.mxu0
      %957 = vmatprep.mubr.f32.mxu0 0.0
      %958 = vmatmul.mubr.f32.gmra.mxu0 %v565
      %v959 = vpop.f32.mrf.mxu0
      %v960 = vadd.f32 %v815, %v959
      %v961 = vpop.f32.mrf.mxu0
      %962 = vmatprep.mubr.f32.mxu0 0.0
      %963 = vmatmul.mubr.f32.gmra.mxu0 %v567
      %v964 = vpop.f32.mrf.mxu0
      %v965 = vadd.f32 %v820, %v964
      %v966 = vpop.f32.mrf.mxu0
      %967 = vmatprep.mubr.f32.mxu0 0.0
      %968 = vmatmul.mubr.f32.gmra.mxu0 %v570
      %v969 = vpop.f32.mrf.mxu0
      %v970 = vadd.f32 %v825, %v969
      %v971 = vpop.f32.mrf.mxu0
      %972 = vmatprep.mubr.f32.mxu0 0.0
      %973 = vmatmul.mubr.f32.gmra.mxu0 %v572
      %v974 = vpop.f32.mrf.mxu0
      %v975 = vadd.f32 %v830, %v974
      %v976 = vpop.f32.mrf.mxu0
      %977 = vmatprep.mubr.f32.mxu0 0.0
      %978 = vmatmul.mubr.f32.gmra.mxu0 %v575
      %v979 = vpop.f32.mrf.mxu0
      %v980 = vadd.f32 %v835, %v979
      %v981 = vpop.f32.mrf.mxu0
      %982 = vmatprep.mubr.f32.mxu0 0.0
      %983 = vmatmul.mubr.f32.gmra.mxu0 %v577
      %v984 = vpop.f32.mrf.mxu0
      %v985 = vadd.f32 %v840, %v984
      %v986 = vpop.f32.mrf.mxu0
      %987 = vmatprep.mubr.f32.mxu0 0.0
      %988 = vmatmul.mubr.f32.gmra.mxu0 %v654
      %v989 = vpop.f32.mrf.mxu0
      %v990 = vadd.f32 %v845, %v989
      %v991 = vpop.f32.mrf.mxu0
      %992 = vmatprep.mubr.f32.mxu0 0.0
      %993 = vmatmul.mubr.f32.gmra.mxu0 %v656
      %v994 = vpop.f32.mrf.mxu0
      %v995 = vadd.f32 %v850, %v994
      %v996 = vpop.f32.mrf.mxu0
      %997 = vdwg.mxu0
      %998 = vmatprep.subr.mxu0 0.0
      %999 = vmatpush1.msra.mxu0 %v609
      %1000 = vmatprep.subr.mxu0 0.0
      %1001 = vmatpush1.msra.mxu0 %v608
      %1002 = vmatprep.subr.mxu0 0.0
      %1003 = vmatpush1.msra.mxu0 %v607
      %1004 = vmatprep.subr.mxu0 0.0
      %1005 = vmatpush1.msra.mxu0 %v606
      %1006 = vmatprep.subr.mxu0 0.0
      %1007 = vmatpush1.msra.mxu0 %v605
      %1008 = vmatprep.subr.mxu0 0.0
      %1009 = vmatpush1.msra.mxu0 %v604
      %1010 = vmatprep.subr.mxu0 0.0
      %1011 = vmatpush1.msra.mxu0 %v603
      %1012 = vmatprep.subr.mxu0 0.0
      %1013 = vmatpush1.msra.mxu0 %v602
      %1014 = vmatprep.subr.mxu0 0.0
      %1015 = vmatpush1.msra.mxu0 %v601
      %1016 = vmatprep.subr.mxu0 0.0
      %1017 = vmatpush1.msra.mxu0 %v600
      %1018 = vmatprep.subr.mxu0 0.0
      %1019 = vmatpush1.msra.mxu0 %v599
      %1020 = vmatprep.subr.mxu0 0.0
      %1021 = vmatpush1.msra.mxu0 %v598
      %1022 = vmatprep.subr.mxu0 0.0
      %1023 = vmatpush1.msra.mxu0 %v597
      %1024 = vmatprep.subr.mxu0 0.0
      %1025 = vmatpush1.msra.mxu0 %v596
      %1026 = vmatprep.subr.mxu0 0.0
      %1027 = vmatpush1.msra.mxu0 %v595
      %1028 = vmatprep.subr.mxu0 0.0
      %1029 = vmatpush1.msra.mxu0 %v594
      %1030 = vmatprep.subr.mxu0 0.0
      %1031 = vmatpush2.msra.mxu0 %v625
      %1032 = vmatprep.subr.mxu0 0.0
      %1033 = vmatpush2.msra.mxu0 %v624
      %1034 = vmatprep.subr.mxu0 0.0
      %1035 = vmatpush2.msra.mxu0 %v623
      %1036 = vmatprep.subr.mxu0 0.0
      %1037 = vmatpush2.msra.mxu0 %v622
      %1038 = vmatprep.subr.mxu0 0.0
      %1039 = vmatpush2.msra.mxu0 %v621
      %1040 = vmatprep.subr.mxu0 0.0
      %1041 = vmatpush2.msra.mxu0 %v620
      %1042 = vmatprep.subr.mxu0 0.0
      %1043 = vmatpush2.msra.mxu0 %v619
      %1044 = vmatprep.subr.mxu0 0.0
      %1045 = vmatpush2.msra.mxu0 %v618
      %1046 = vmatprep.subr.mxu0 0.0
      %1047 = vmatpush2.msra.mxu0 %v617
      %1048 = vmatprep.subr.mxu0 0.0
      %1049 = vmatpush2.msra.mxu0 %v616
      %1050 = vmatprep.subr.mxu0 0.0
      %1051 = vmatpush2.msra.mxu0 %v615
      %1052 = vmatprep.subr.mxu0 0.0
      %1053 = vmatpush2.msra.mxu0 %v614
      %1054 = vmatprep.subr.mxu0 0.0
      %1055 = vmatpush2.msra.mxu0 %v613
      %1056 = vmatprep.subr.mxu0 0.0
      %1057 = vmatpush2.msra.mxu0 %v612
      %1058 = vmatprep.subr.mxu0 0.0
      %1059 = vmatpush2.msra.mxu0 %v611
      %1060 = vmatprep.subr.mxu0 0.0
      %1061 = vmatpush2.msra.mxu0 %v610
      %1062 = vmatprep.mubr.f32.mxu0 %v483
      %1063 = vmatmul.mubr.f32.gmra.mxu0 %v426
      %v1064 = vpop.f32.mrf.mxu0
      %v1065 = vadd.f32 %v920, %v1064
      %v1066 = vpop.f32.mrf.mxu0
      %1067 = vmatprep.mubr.f32.mxu0 %v485
      %1068 = vmatmul.mubr.f32.gmra.mxu0 %v427
      %v1069 = vpop.f32.mrf.mxu0
      %v1070 = vadd.f32 %v925, %v1069
      %v1071 = vpop.f32.mrf.mxu0
      %1072 = vmatprep.mubr.f32.mxu0 %v488
      %1073 = vmatmul.mubr.f32.gmra.mxu0 %v429
      %v1074 = vpop.f32.mrf.mxu0
      %v1075 = vadd.f32 %v930, %v1074
      %v1076 = vpop.f32.mrf.mxu0
      %1077 = vmatprep.mubr.f32.mxu0 %v490
      %1078 = vmatmul.mubr.f32.gmra.mxu0 %v430
      %v1079 = vpop.f32.mrf.mxu0
      %v1080 = vadd.f32 %v935, %v1079
      %v1081 = vpop.f32.mrf.mxu0
      %1082 = vmatprep.mubr.f32.mxu0 %v493
      %1083 = vmatmul.mubr.f32.gmra.mxu0 %v432
      %v1084 = vpop.f32.mrf.mxu0
      %v1085 = vadd.f32 %v940, %v1084
      %v1086 = vpop.f32.mrf.mxu0
      %1087 = vmatprep.mubr.f32.mxu0 %v495
      %1088 = vmatmul.mubr.f32.gmra.mxu0 %v433
      %v1089 = vpop.f32.mrf.mxu0
      %v1090 = vadd.f32 %v945, %v1089
      %v1091 = vpop.f32.mrf.mxu0
      %1092 = vmatprep.mubr.f32.mxu0 %v498
      %1093 = vmatmul.mubr.f32.gmra.mxu0 %v435
      %v1094 = vpop.f32.mrf.mxu0
      %v1095 = vadd.f32 %v950, %v1094
      %v1096 = vpop.f32.mrf.mxu0
      %1097 = vmatprep.mubr.f32.mxu0 %v500
      %1098 = vmatmul.mubr.f32.gmra.mxu0 %v436
      %v1099 = vpop.f32.mrf.mxu0
      %v1100 = vadd.f32 %v955, %v1099
      %v1101 = vpop.f32.mrf.mxu0
      %1102 = vmatprep.mubr.f32.mxu0 %v503
      %1103 = vmatmul.mubr.f32.gmra.mxu0 %v438
      %v1104 = vpop.f32.mrf.mxu0
      %v1105 = vadd.f32 %v960, %v1104
      %v1106 = vpop.f32.mrf.mxu0
      %1107 = vmatprep.mubr.f32.mxu0 %v505
      %1108 = vmatmul.mubr.f32.gmra.mxu0 %v439
      %v1109 = vpop.f32.mrf.mxu0
      %v1110 = vadd.f32 %v965, %v1109
      %v1111 = vpop.f32.mrf.mxu0
      %1112 = vmatprep.mubr.f32.mxu0 %v508
      %1113 = vmatmul.mubr.f32.gmra.mxu0 %v441
      %v1114 = vpop.f32.mrf.mxu0
      %v1115 = vadd.f32 %v970, %v1114
      %v1116 = vpop.f32.mrf.mxu0
      %1117 = vmatprep.mubr.f32.mxu0 %v510
      %1118 = vmatmul.mubr.f32.gmra.mxu0 %v442
      %v1119 = vpop.f32.mrf.mxu0
      %v1120 = vadd.f32 %v975, %v1119
      %v1121 = vpop.f32.mrf.mxu0
      %1122 = vmatprep.mubr.f32.mxu0 %v513
      %1123 = vmatmul.mubr.f32.gmra.mxu0 %v444
      %v1124 = vpop.f32.mrf.mxu0
      %v1125 = vadd.f32 %v980, %v1124
      %v1126 = vpop.f32.mrf.mxu0
      %1127 = vmatprep.mubr.f32.mxu0 %v515
      %1128 = vmatmul.mubr.f32.gmra.mxu0 %v445
      %v1129 = vpop.f32.mrf.mxu0
      %v1130 = vadd.f32 %v985, %v1129
      %v1131 = vpop.f32.mrf.mxu0
      %1132 = vmatprep.mubr.f32.mxu0 %v518
      %1133 = vmatmul.mubr.f32.gmra.mxu0 %v447
      %v1134 = vpop.f32.mrf.mxu0
      %v1135 = vadd.f32 %v990, %v1134
      %v1136 = vpop.f32.mrf.mxu0
      %1137 = vmatprep.mubr.f32.mxu0 %v520
      %1138 = vmatmul.mubr.f32.gmra.mxu0 %v448
      %v1139 = vpop.f32.mrf.mxu0
      %v1140 = vadd.f32 %v995, %v1139
      %v1141 = vpop.f32.mrf.mxu0
      %1142 = vdwg.mxu0
      %1143 = vmatprep.subr.mxu0 0.0
      %1144 = vmatpush1.msra.mxu0 %v641
      %1145 = vmatprep.subr.mxu0 0.0
      %1146 = vmatpush1.msra.mxu0 %v640
      %1147 = vmatprep.subr.mxu0 0.0
      %1148 = vmatpush1.msra.mxu0 %v639
      %1149 = vmatprep.subr.mxu0 0.0
      %1150 = vmatpush1.msra.mxu0 %v638
      %1151 = vmatprep.subr.mxu0 0.0
      %1152 = vmatpush1.msra.mxu0 %v637
      %1153 = vmatprep.subr.mxu0 0.0
      %1154 = vmatpush1.msra.mxu0 %v636
      %1155 = vmatprep.subr.mxu0 0.0
      %1156 = vmatpush1.msra.mxu0 %v635
      %1157 = vmatprep.subr.mxu0 0.0
      %1158 = vmatpush1.msra.mxu0 %v634
      %1159 = vmatprep.subr.mxu0 0.0
      %1160 = vmatpush1.msra.mxu0 %v633
      %1161 = vmatprep.subr.mxu0 0.0
      %1162 = vmatpush1.msra.mxu0 %v632
      %1163 = vmatprep.subr.mxu0 0.0
      %1164 = vmatpush1.msra.mxu0 %v631
      %1165 = vmatprep.subr.mxu0 0.0
      %1166 = vmatpush1.msra.mxu0 %v630
      %1167 = vmatprep.subr.mxu0 0.0
      %1168 = vmatpush1.msra.mxu0 %v629
      %1169 = vmatprep.subr.mxu0 0.0
      %1170 = vmatpush1.msra.mxu0 %v628
      %1171 = vmatprep.subr.mxu0 0.0
      %1172 = vmatpush1.msra.mxu0 %v627
      %1173 = vmatprep.subr.mxu0 0.0
      %1174 = vmatpush1.msra.mxu0 %v626
      %1175 = vmatprep.subr.mxu0 0.0
      %1176 = vmatpush2.msra.mxu0 0.0
      %1177 = vmatprep.subr.mxu0 0.0
      %1178 = vmatpush2.msra.mxu0 0.0
      %1179 = vmatprep.subr.mxu0 0.0
      %1180 = vmatpush2.msra.mxu0 0.0
      %1181 = vmatprep.subr.mxu0 0.0
      %1182 = vmatpush2.msra.mxu0 0.0
      %1183 = vmatprep.subr.mxu0 0.0
      %1184 = vmatpush2.msra.mxu0 0.0
      %1185 = vmatprep.subr.mxu0 0.0
      %1186 = vmatpush2.msra.mxu0 0.0
      %1187 = vmatprep.subr.mxu0 0.0
      %1188 = vmatpush2.msra.mxu0 0.0
      %1189 = vmatprep.subr.mxu0 0.0
      %1190 = vmatpush2.msra.mxu0 0.0
      %1191 = vmatprep.subr.mxu0 0.0
      %1192 = vmatpush2.msra.mxu0 0.0
      %1193 = vmatprep.subr.mxu0 0.0
      %1194 = vmatpush2.msra.mxu0 0.0
      %1195 = vmatprep.subr.mxu0 0.0
      %1196 = vmatpush2.msra.mxu0 0.0
      %1197 = vmatprep.subr.mxu0 0.0
      %1198 = vmatpush2.msra.mxu0 0.0
      %1199 = vmatprep.subr.mxu0 0.0
      %1200 = vmatpush2.msra.mxu0 0.0
      %1201 = vmatprep.subr.mxu0 0.0
      %1202 = vmatpush2.msra.mxu0 0.0
      %1203 = vmatprep.subr.mxu0 0.0
      %1204 = vmatpush2.msra.mxu0 0.0
      %1205 = vmatprep.subr.mxu0 0.0
      %1206 = vmatpush2.msra.mxu0 0.0
      %1207 = vmatprep.mubr.f32.mxu0 0.0
      %1208 = vmatmul.mubr.f32.gmra.mxu0 %v540
      %v1209 = vpop.f32.mrf.mxu0
      %v1210 = vadd.f32 %v1065, %v1209
      %v1211 = vpop.f32.mrf.mxu0
      %1212 = vmatprep.mubr.f32.mxu0 0.0
      %1213 = vmatmul.mubr.f32.gmra.mxu0 %v542
      %v1214 = vpop.f32.mrf.mxu0
      %v1215 = vadd.f32 %v1070, %v1214
      %v1216 = vpop.f32.mrf.mxu0
      %1217 = vmatprep.mubr.f32.mxu0 0.0
      %1218 = vmatmul.mubr.f32.gmra.mxu0 %v545
      %v1219 = vpop.f32.mrf.mxu0
      %v1220 = vadd.f32 %v1075, %v1219
      %v1221 = vpop.f32.mrf.mxu0
      %1222 = vmatprep.mubr.f32.mxu0 0.0
      %1223 = vmatmul.mubr.f32.gmra.mxu0 %v547
      %v1224 = vpop.f32.mrf.mxu0
      %v1225 = vadd.f32 %v1080, %v1224
      %v1226 = vpop.f32.mrf.mxu0
      %1227 = vmatprep.mubr.f32.mxu0 0.0
      %1228 = vmatmul.mubr.f32.gmra.mxu0 %v550
      %v1229 = vpop.f32.mrf.mxu0
      %v1230 = vadd.f32 %v1085, %v1229
      %v1231 = vpop.f32.mrf.mxu0
      %1232 = vmatprep.mubr.f32.mxu0 0.0
      %1233 = vmatmul.mubr.f32.gmra.mxu0 %v552
      %v1234 = vpop.f32.mrf.mxu0
      %v1235 = vadd.f32 %v1090, %v1234
      %v1236 = vpop.f32.mrf.mxu0
      %1237 = vmatprep.mubr.f32.mxu0 0.0
      %1238 = vmatmul.mubr.f32.gmra.mxu0 %v555
      %v1239 = vpop.f32.mrf.mxu0
      %v1240 = vadd.f32 %v1095, %v1239
      %v1241 = vpop.f32.mrf.mxu0
      %1242 = vmatprep.mubr.f32.mxu0 0.0
      %1243 = vmatmul.mubr.f32.gmra.mxu0 %v557
      %v1244 = vpop.f32.mrf.mxu0
      %v1245 = vadd.f32 %v1100, %v1244
      %v1246 = vpop.f32.mrf.mxu0
      %1247 = vmatprep.mubr.f32.mxu0 0.0
      %1248 = vmatmul.mubr.f32.gmra.mxu0 %v560
      %v1249 = vpop.f32.mrf.mxu0
      %v1250 = vadd.f32 %v1105, %v1249
      %v1251 = vpop.f32.mrf.mxu0
      %1252 = vmatprep.mubr.f32.mxu0 0.0
      %1253 = vmatmul.mubr.f32.gmra.mxu0 %v562
      %v1254 = vpop.f32.mrf.mxu0
      %v1255 = vadd.f32 %v1110, %v1254
      %v1256 = vpop.f32.mrf.mxu0
      %1257 = vmatprep.mubr.f32.mxu0 0.0
      %1258 = vmatmul.mubr.f32.gmra.mxu0 %v565
      %v1259 = vpop.f32.mrf.mxu0
      %v1260 = vadd.f32 %v1115, %v1259
      %v1261 = vpop.f32.mrf.mxu0
      %1262 = vmatprep.mubr.f32.mxu0 0.0
      %1263 = vmatmul.mubr.f32.gmra.mxu0 %v567
      %v1264 = vpop.f32.mrf.mxu0
      %v1265 = vadd.f32 %v1120, %v1264
      %v1266 = vpop.f32.mrf.mxu0
      %1267 = vmatprep.mubr.f32.mxu0 0.0
      %1268 = vmatmul.mubr.f32.gmra.mxu0 %v570
      %v1269 = vpop.f32.mrf.mxu0
      %v1270 = vadd.f32 %v1125, %v1269
      %v1271 = vpop.f32.mrf.mxu0
      %1272 = vmatprep.mubr.f32.mxu0 0.0
      %1273 = vmatmul.mubr.f32.gmra.mxu0 %v572
      %v1274 = vpop.f32.mrf.mxu0
      %v1275 = vadd.f32 %v1130, %v1274
      %v1276 = vpop.f32.mrf.mxu0
      %1277 = vmatprep.mubr.f32.mxu0 0.0
      %1278 = vmatmul.mubr.f32.gmra.mxu0 %v575
      %v1279 = vpop.f32.mrf.mxu0
      %v1280 = vadd.f32 %v1135, %v1279
      %v1281 = vpop.f32.mrf.mxu0
      %1282 = vmatprep.mubr.f32.mxu0 0.0
      %1283 = vmatmul.mubr.f32.gmra.mxu0 %v577
      %v1284 = vpop.f32.mrf.mxu0
      %v1285 = vadd.f32 %v1140, %v1284
      %v1286 = vpop.f32.mrf.mxu0
      %1287 = vdwg.mxu0
      %v1291 = vrot.slane %v453, 1
      %v1292 = vrot.slane %v454, 1
      %v1293 = vsel %vm480, %v1291, %v1292
      %v1294 = vrot.slane %v455, 1
      %v1295 = vsel %vm480, %v1292, %v1294
      %v1298 = vrot.slane %v453, 2
      %v1299 = vrot.slane %v454, 2
      %v1300 = vsel %vm537, %v1298, %v1299
      %v1301 = vrot.slane %v455, 2
      %v1302 = vsel %vm537, %v1299, %v1301
      %s1305 = scalar_lea.vmem %s2, 768
      %v1306 = vld [vmem:[%s1305] sm:$0xff]
      %v1307 = vld [vmem:[%s1305 + $0x8] sm:$0xff]
      %v1308 = vld [vmem:[%s1305 + $0x10] sm:$0xff]
      %v1309 = vld [vmem:[%s1305 + $0x18] sm:$0xff]
      %v1310 = vld [vmem:[%s1305 + $0x20] sm:$0xff]
      %v1311 = vld [vmem:[%s1305 + $0x28] sm:$0xff]
      %v1312 = vld [vmem:[%s1305 + $0x30] sm:$0xff]
      %v1313 = vld [vmem:[%s1305 + $0x38] sm:$0xff]
      %v1314 = vld [vmem:[%s1305 + $0x40] sm:$0xff]
      %v1315 = vld [vmem:[%s1305 + $0x48] sm:$0xff]
      %v1316 = vld [vmem:[%s1305 + $0x50] sm:$0xff]
      %v1317 = vld [vmem:[%s1305 + $0x58] sm:$0xff]
      %v1318 = vld [vmem:[%s1305 + $0x60] sm:$0xff]
      %v1319 = vld [vmem:[%s1305 + $0x68] sm:$0xff]
      %v1320 = vld [vmem:[%s1305 + $0x70] sm:$0xff]
      %v1321 = vld [vmem:[%s1305 + $0x78] sm:$0xff]
      %v1322 = vld [vmem:[%s1305 + $0x80] sm:$0xff]
      %v1323 = vld [vmem:[%s1305 + $0x88] sm:$0xff]
      %v1324 = vld [vmem:[%s1305 + $0x90] sm:$0xff]
      %v1325 = vld [vmem:[%s1305 + $0x98] sm:$0xff]
      %v1326 = vld [vmem:[%s1305 + $0xa0] sm:$0xff]
      %v1327 = vld [vmem:[%s1305 + $0xa8] sm:$0xff]
      %v1328 = vld [vmem:[%s1305 + $0xb0] sm:$0xff]
      %v1329 = vld [vmem:[%s1305 + $0xb8] sm:$0xff]
      %v1330 = vld [vmem:[%s1305 + $0xc0] sm:$0xff]
      %v1331 = vld [vmem:[%s1305 + $0xc8] sm:$0xff]
      %v1332 = vld [vmem:[%s1305 + $0xd0] sm:$0xff]
      %v1333 = vld [vmem:[%s1305 + $0xd8] sm:$0xff]
      %v1334 = vld [vmem:[%s1305 + $0xe0] sm:$0xff]
      %v1335 = vld [vmem:[%s1305 + $0xe8] sm:$0xff]
      %v1336 = vld [vmem:[%s1305 + $0xf0] sm:$0xff]
      %v1337 = vld [vmem:[%s1305 + $0xf8] sm:$0xff]
      %v1338 = vld [vmem:[%s1305 + $0x100] sm:$0xff]
      %v1339 = vld [vmem:[%s1305 + $0x108] sm:$0xff]
      %v1340 = vld [vmem:[%s1305 + $0x110] sm:$0xff]
      %v1341 = vld [vmem:[%s1305 + $0x118] sm:$0xff]
      %v1342 = vld [vmem:[%s1305 + $0x120] sm:$0xff]
      %v1343 = vld [vmem:[%s1305 + $0x128] sm:$0xff]
      %v1344 = vld [vmem:[%s1305 + $0x130] sm:$0xff]
      %v1345 = vld [vmem:[%s1305 + $0x138] sm:$0xff]
      %v1346 = vld [vmem:[%s1305 + $0x140] sm:$0xff]
      %v1347 = vld [vmem:[%s1305 + $0x148] sm:$0xff]
      %v1348 = vld [vmem:[%s1305 + $0x150] sm:$0xff]
      %v1349 = vld [vmem:[%s1305 + $0x158] sm:$0xff]
      %v1350 = vld [vmem:[%s1305 + $0x160] sm:$0xff]
      %v1351 = vld [vmem:[%s1305 + $0x168] sm:$0xff]
      %v1352 = vld [vmem:[%s1305 + $0x170] sm:$0xff]
      %v1353 = vld [vmem:[%s1305 + $0x178] sm:$0xff]
      %1354 = vmatprep.subr.mxu0 0.0
      %1355 = vmatpush1.msra.mxu0 %v1321
      %1356 = vmatprep.subr.mxu0 0.0
      %1357 = vmatpush1.msra.mxu0 %v1320
      %1358 = vmatprep.subr.mxu0 0.0
      %1359 = vmatpush1.msra.mxu0 %v1319
      %1360 = vmatprep.subr.mxu0 0.0
      %1361 = vmatpush1.msra.mxu0 %v1318
      %1362 = vmatprep.subr.mxu0 0.0
      %1363 = vmatpush1.msra.mxu0 %v1317
      %1364 = vmatprep.subr.mxu0 0.0
      %1365 = vmatpush1.msra.mxu0 %v1316
      %1366 = vmatprep.subr.mxu0 0.0
      %1367 = vmatpush1.msra.mxu0 %v1315
      %1368 = vmatprep.subr.mxu0 0.0
      %1369 = vmatpush1.msra.mxu0 %v1314
      %1370 = vmatprep.subr.mxu0 0.0
      %1371 = vmatpush1.msra.mxu0 %v1313
      %1372 = vmatprep.subr.mxu0 0.0
      %1373 = vmatpush1.msra.mxu0 %v1312
      %1374 = vmatprep.subr.mxu0 0.0
      %1375 = vmatpush1.msra.mxu0 %v1311
      %1376 = vmatprep.subr.mxu0 0.0
      %1377 = vmatpush1.msra.mxu0 %v1310
      %1378 = vmatprep.subr.mxu0 0.0
      %1379 = vmatpush1.msra.mxu0 %v1309
      %1380 = vmatprep.subr.mxu0 0.0
      %1381 = vmatpush1.msra.mxu0 %v1308
      %1382 = vmatprep.subr.mxu0 0.0
      %1383 = vmatpush1.msra.mxu0 %v1307
      %1384 = vmatprep.subr.mxu0 0.0
      %1385 = vmatpush1.msra.mxu0 %v1306
      %1386 = vmatprep.subr.mxu0 0.0
      %1387 = vmatpush2.msra.mxu0 %v1337
      %1388 = vmatprep.subr.mxu0 0.0
      %1389 = vmatpush2.msra.mxu0 %v1336
      %1390 = vmatprep.subr.mxu0 0.0
      %1391 = vmatpush2.msra.mxu0 %v1335
      %1392 = vmatprep.subr.mxu0 0.0
      %1393 = vmatpush2.msra.mxu0 %v1334
      %1394 = vmatprep.subr.mxu0 0.0
      %1395 = vmatpush2.msra.mxu0 %v1333
      %1396 = vmatprep.subr.mxu0 0.0
      %1397 = vmatpush2.msra.mxu0 %v1332
      %1398 = vmatprep.subr.mxu0 0.0
      %1399 = vmatpush2.msra.mxu0 %v1331
      %1400 = vmatprep.subr.mxu0 0.0
      %1401 = vmatpush2.msra.mxu0 %v1330
      %1402 = vmatprep.subr.mxu0 0.0
      %1403 = vmatpush2.msra.mxu0 %v1329
      %1404 = vmatprep.subr.mxu0 0.0
      %1405 = vmatpush2.msra.mxu0 %v1328
      %1406 = vmatprep.subr.mxu0 0.0
      %1407 = vmatpush2.msra.mxu0 %v1327
      %1408 = vmatprep.subr.mxu0 0.0
      %1409 = vmatpush2.msra.mxu0 %v1326
      %1410 = vmatprep.subr.mxu0 0.0
      %1411 = vmatpush2.msra.mxu0 %v1325
      %1412 = vmatprep.subr.mxu0 0.0
      %1413 = vmatpush2.msra.mxu0 %v1324
      %1414 = vmatprep.subr.mxu0 0.0
      %1415 = vmatpush2.msra.mxu0 %v1323
      %1416 = vmatprep.subr.mxu0 0.0
      %1417 = vmatpush2.msra.mxu0 %v1322
      %1418 = vmatprep.mubr.f32.mxu0 %v493
      %1419 = vmatmul.mubr.f32.gmra.mxu0 %v432
      %v1420 = vpop.f32.mrf.mxu0
      %v1421 = vadd.f32 0.0, %v1420
      %v1422 = vpop.f32.mrf.mxu0
      %1423 = vmatprep.mubr.f32.mxu0 %v495
      %1424 = vmatmul.mubr.f32.gmra.mxu0 %v433
      %v1425 = vpop.f32.mrf.mxu0
      %v1426 = vadd.f32 0.0, %v1425
      %v1427 = vpop.f32.mrf.mxu0
      %1428 = vmatprep.mubr.f32.mxu0 %v498
      %1429 = vmatmul.mubr.f32.gmra.mxu0 %v435
      %v1430 = vpop.f32.mrf.mxu0
      %v1431 = vadd.f32 0.0, %v1430
      %v1432 = vpop.f32.mrf.mxu0
      %1433 = vmatprep.mubr.f32.mxu0 %v500
      %1434 = vmatmul.mubr.f32.gmra.mxu0 %v436
      %v1435 = vpop.f32.mrf.mxu0
      %v1436 = vadd.f32 0.0, %v1435
      %v1437 = vpop.f32.mrf.mxu0
      %1438 = vmatprep.mubr.f32.mxu0 %v503
      %1439 = vmatmul.mubr.f32.gmra.mxu0 %v438
      %v1440 = vpop.f32.mrf.mxu0
      %v1441 = vadd.f32 0.0, %v1440
      %v1442 = vpop.f32.mrf.mxu0
      %1443 = vmatprep.mubr.f32.mxu0 %v505
      %1444 = vmatmul.mubr.f32.gmra.mxu0 %v439
      %v1445 = vpop.f32.mrf.mxu0
      %v1446 = vadd.f32 0.0, %v1445
      %v1447 = vpop.f32.mrf.mxu0
      %1448 = vmatprep.mubr.f32.mxu0 %v508
      %1449 = vmatmul.mubr.f32.gmra.mxu0 %v441
      %v1450 = vpop.f32.mrf.mxu0
      %v1451 = vadd.f32 0.0, %v1450
      %v1452 = vpop.f32.mrf.mxu0
      %1453 = vmatprep.mubr.f32.mxu0 %v510
      %1454 = vmatmul.mubr.f32.gmra.mxu0 %v442
      %v1455 = vpop.f32.mrf.mxu0
      %v1456 = vadd.f32 0.0, %v1455
      %v1457 = vpop.f32.mrf.mxu0
      %1458 = vmatprep.mubr.f32.mxu0 %v513
      %1459 = vmatmul.mubr.f32.gmra.mxu0 %v444
      %v1460 = vpop.f32.mrf.mxu0
      %v1461 = vadd.f32 0.0, %v1460
      %v1462 = vpop.f32.mrf.mxu0
      %1463 = vmatprep.mubr.f32.mxu0 %v515
      %1464 = vmatmul.mubr.f32.gmra.mxu0 %v445
      %v1465 = vpop.f32.mrf.mxu0
      %v1466 = vadd.f32 0.0, %v1465
      %v1467 = vpop.f32.mrf.mxu0
      %1468 = vmatprep.mubr.f32.mxu0 %v518
      %1469 = vmatmul.mubr.f32.gmra.mxu0 %v447
      %v1470 = vpop.f32.mrf.mxu0
      %v1471 = vadd.f32 0.0, %v1470
      %v1472 = vpop.f32.mrf.mxu0
      %1473 = vmatprep.mubr.f32.mxu0 %v520
      %1474 = vmatmul.mubr.f32.gmra.mxu0 %v448
      %v1475 = vpop.f32.mrf.mxu0
      %v1476 = vadd.f32 0.0, %v1475
      %v1477 = vpop.f32.mrf.mxu0
      %1478 = vmatprep.mubr.f32.mxu0 %v647
      %1479 = vmatmul.mubr.f32.gmra.mxu0 %v450
      %v1480 = vpop.f32.mrf.mxu0
      %v1481 = vadd.f32 0.0, %v1480
      %v1482 = vpop.f32.mrf.mxu0
      %1483 = vmatprep.mubr.f32.mxu0 %v649
      %1484 = vmatmul.mubr.f32.gmra.mxu0 %v451
      %v1485 = vpop.f32.mrf.mxu0
      %v1486 = vadd.f32 0.0, %v1485
      %v1487 = vpop.f32.mrf.mxu0
      %1488 = vmatprep.mubr.f32.mxu0 %v1293
      %1489 = vmatmul.mubr.f32.gmra.mxu0 %v453
      %v1490 = vpop.f32.mrf.mxu0
      %v1491 = vadd.f32 0.0, %v1490
      %v1492 = vpop.f32.mrf.mxu0
      %1493 = vmatprep.mubr.f32.mxu0 %v1295
      %1494 = vmatmul.mubr.f32.gmra.mxu0 %v454
      %v1495 = vpop.f32.mrf.mxu0
      %v1496 = vadd.f32 0.0, %v1495
      %v1497 = vpop.f32.mrf.mxu0
      %1498 = vdwg.mxu0
      %1499 = vmatprep.subr.mxu0 0.0
      %1500 = vmatpush1.msra.mxu0 %v1353
      %1501 = vmatprep.subr.mxu0 0.0
      %1502 = vmatpush1.msra.mxu0 %v1352
      %1503 = vmatprep.subr.mxu0 0.0
      %1504 = vmatpush1.msra.mxu0 %v1351
      %1505 = vmatprep.subr.mxu0 0.0
      %1506 = vmatpush1.msra.mxu0 %v1350
      %1507 = vmatprep.subr.mxu0 0.0
      %1508 = vmatpush1.msra.mxu0 %v1349
      %1509 = vmatprep.subr.mxu0 0.0
      %1510 = vmatpush1.msra.mxu0 %v1348
      %1511 = vmatprep.subr.mxu0 0.0
      %1512 = vmatpush1.msra.mxu0 %v1347
      %1513 = vmatprep.subr.mxu0 0.0
      %1514 = vmatpush1.msra.mxu0 %v1346
      %1515 = vmatprep.subr.mxu0 0.0
      %1516 = vmatpush1.msra.mxu0 %v1345
      %1517 = vmatprep.subr.mxu0 0.0
      %1518 = vmatpush1.msra.mxu0 %v1344
      %1519 = vmatprep.subr.mxu0 0.0
      %1520 = vmatpush1.msra.mxu0 %v1343
      %1521 = vmatprep.subr.mxu0 0.0
      %1522 = vmatpush1.msra.mxu0 %v1342
      %1523 = vmatprep.subr.mxu0 0.0
      %1524 = vmatpush1.msra.mxu0 %v1341
      %1525 = vmatprep.subr.mxu0 0.0
      %1526 = vmatpush1.msra.mxu0 %v1340
      %1527 = vmatprep.subr.mxu0 0.0
      %1528 = vmatpush1.msra.mxu0 %v1339
      %1529 = vmatprep.subr.mxu0 0.0
      %1530 = vmatpush1.msra.mxu0 %v1338
      %1531 = vmatprep.subr.mxu0 0.0
      %1532 = vmatpush2.msra.mxu0 0.0
      %1533 = vmatprep.subr.mxu0 0.0
      %1534 = vmatpush2.msra.mxu0 0.0
      %1535 = vmatprep.subr.mxu0 0.0
      %1536 = vmatpush2.msra.mxu0 0.0
      %1537 = vmatprep.subr.mxu0 0.0
      %1538 = vmatpush2.msra.mxu0 0.0
      %1539 = vmatprep.subr.mxu0 0.0
      %1540 = vmatpush2.msra.mxu0 0.0
      %1541 = vmatprep.subr.mxu0 0.0
      %1542 = vmatpush2.msra.mxu0 0.0
      %1543 = vmatprep.subr.mxu0 0.0
      %1544 = vmatpush2.msra.mxu0 0.0
      %1545 = vmatprep.subr.mxu0 0.0
      %1546 = vmatpush2.msra.mxu0 0.0
      %1547 = vmatprep.subr.mxu0 0.0
      %1548 = vmatpush2.msra.mxu0 0.0
      %1549 = vmatprep.subr.mxu0 0.0
      %1550 = vmatpush2.msra.mxu0 0.0
      %1551 = vmatprep.subr.mxu0 0.0
      %1552 = vmatpush2.msra.mxu0 0.0
      %1553 = vmatprep.subr.mxu0 0.0
      %1554 = vmatpush2.msra.mxu0 0.0
      %1555 = vmatprep.subr.mxu0 0.0
      %1556 = vmatpush2.msra.mxu0 0.0
      %1557 = vmatprep.subr.mxu0 0.0
      %1558 = vmatpush2.msra.mxu0 0.0
      %1559 = vmatprep.subr.mxu0 0.0
      %1560 = vmatpush2.msra.mxu0 0.0
      %1561 = vmatprep.subr.mxu0 0.0
      %1562 = vmatpush2.msra.mxu0 0.0
      %1563 = vmatprep.mubr.f32.mxu0 0.0
      %1564 = vmatmul.mubr.f32.gmra.mxu0 %v550
      %v1565 = vpop.f32.mrf.mxu0
      %v1566 = vadd.f32 %v1421, %v1565
      %v1567 = vpop.f32.mrf.mxu0
      %1568 = vmatprep.mubr.f32.mxu0 0.0
      %1569 = vmatmul.mubr.f32.gmra.mxu0 %v552
      %v1570 = vpop.f32.mrf.mxu0
      %v1571 = vadd.f32 %v1426, %v1570
      %v1572 = vpop.f32.mrf.mxu0
      %1573 = vmatprep.mubr.f32.mxu0 0.0
      %1574 = vmatmul.mubr.f32.gmra.mxu0 %v555
      %v1575 = vpop.f32.mrf.mxu0
      %v1576 = vadd.f32 %v1431, %v1575
      %v1577 = vpop.f32.mrf.mxu0
      %1578 = vmatprep.mubr.f32.mxu0 0.0
      %1579 = vmatmul.mubr.f32.gmra.mxu0 %v557
      %v1580 = vpop.f32.mrf.mxu0
      %v1581 = vadd.f32 %v1436, %v1580
      %v1582 = vpop.f32.mrf.mxu0
      %1583 = vmatprep.mubr.f32.mxu0 0.0
      %1584 = vmatmul.mubr.f32.gmra.mxu0 %v560
      %v1585 = vpop.f32.mrf.mxu0
      %v1586 = vadd.f32 %v1441, %v1585
      %v1587 = vpop.f32.mrf.mxu0
      %1588 = vmatprep.mubr.f32.mxu0 0.0
      %1589 = vmatmul.mubr.f32.gmra.mxu0 %v562
      %v1590 = vpop.f32.mrf.mxu0
      %v1591 = vadd.f32 %v1446, %v1590
      %v1592 = vpop.f32.mrf.mxu0
      %1593 = vmatprep.mubr.f32.mxu0 0.0
      %1594 = vmatmul.mubr.f32.gmra.mxu0 %v565
      %v1595 = vpop.f32.mrf.mxu0
      %v1596 = vadd.f32 %v1451, %v1595
      %v1597 = vpop.f32.mrf.mxu0
      %1598 = vmatprep.mubr.f32.mxu0 0.0
      %1599 = vmatmul.mubr.f32.gmra.mxu0 %v567
      %v1600 = vpop.f32.mrf.mxu0
      %v1601 = vadd.f32 %v1456, %v1600
      %v1602 = vpop.f32.mrf.mxu0
      %1603 = vmatprep.mubr.f32.mxu0 0.0
      %1604 = vmatmul.mubr.f32.gmra.mxu0 %v570
      %v1605 = vpop.f32.mrf.mxu0
      %v1606 = vadd.f32 %v1461, %v1605
      %v1607 = vpop.f32.mrf.mxu0
      %1608 = vmatprep.mubr.f32.mxu0 0.0
      %1609 = vmatmul.mubr.f32.gmra.mxu0 %v572
      %v1610 = vpop.f32.mrf.mxu0
      %v1611 = vadd.f32 %v1466, %v1610
      %v1612 = vpop.f32.mrf.mxu0
      %1613 = vmatprep.mubr.f32.mxu0 0.0
      %1614 = vmatmul.mubr.f32.gmra.mxu0 %v575
      %v1615 = vpop.f32.mrf.mxu0
      %v1616 = vadd.f32 %v1471, %v1615
      %v1617 = vpop.f32.mrf.mxu0
      %1618 = vmatprep.mubr.f32.mxu0 0.0
      %1619 = vmatmul.mubr.f32.gmra.mxu0 %v577
      %v1620 = vpop.f32.mrf.mxu0
      %v1621 = vadd.f32 %v1476, %v1620
      %v1622 = vpop.f32.mrf.mxu0
      %1623 = vmatprep.mubr.f32.mxu0 0.0
      %1624 = vmatmul.mubr.f32.gmra.mxu0 %v654
      %v1625 = vpop.f32.mrf.mxu0
      %v1626 = vadd.f32 %v1481, %v1625
      %v1627 = vpop.f32.mrf.mxu0
      %1628 = vmatprep.mubr.f32.mxu0 0.0
      %1629 = vmatmul.mubr.f32.gmra.mxu0 %v656
      %v1630 = vpop.f32.mrf.mxu0
      %v1631 = vadd.f32 %v1486, %v1630
      %v1632 = vpop.f32.mrf.mxu0
      %1633 = vmatprep.mubr.f32.mxu0 0.0
      %1634 = vmatmul.mubr.f32.gmra.mxu0 %v1300
      %v1635 = vpop.f32.mrf.mxu0
      %v1636 = vadd.f32 %v1491, %v1635
      %v1637 = vpop.f32.mrf.mxu0
      %1638 = vmatprep.mubr.f32.mxu0 0.0
      %1639 = vmatmul.mubr.f32.gmra.mxu0 %v1302
      %v1640 = vpop.f32.mrf.mxu0
      %v1641 = vadd.f32 %v1496, %v1640
      %v1642 = vpop.f32.mrf.mxu0
      %1643 = vdwg.mxu0
      %v1644 = vadd.f32 %v1210, %v1566
      %v1645 = vadd.f32 %v1215, %v1571
      %v1646 = vadd.f32 %v1220, %v1576
      %v1647 = vadd.f32 %v1225, %v1581
      %v1648 = vadd.f32 %v1230, %v1586
      %v1649 = vadd.f32 %v1235, %v1591
      %v1650 = vadd.f32 %v1240, %v1596
      %v1651 = vadd.f32 %v1245, %v1601
      %v1652 = vadd.f32 %v1250, %v1606
      %v1653 = vadd.f32 %v1255, %v1611
      %v1654 = vadd.f32 %v1260, %v1616
      %v1655 = vadd.f32 %v1265, %v1621
      %v1656 = vadd.f32 %v1270, %v1626
      %v1657 = vadd.f32 %v1275, %v1631
      %v1658 = vadd.f32 %v1280, %v1636
      %v1659 = vadd.f32 %v1285, %v1641
      %v1660 = vld [vmem:[%s3] sm:$0x1]
      %v1662 = vlaneseq
      %v1663 = vshrl.u32 %v1662, 7
      %v1664 = vsub.s32 0, %v1663
      %v1665 = vrot.slane %v1660, %v1664
      %v1667 = vadd.f32 %v1644, %v1665
      %v1668 = vadd.f32 %v1645, %v1665
      %v1669 = vadd.f32 %v1646, %v1665
      %v1670 = vadd.f32 %v1647, %v1665
      %v1671 = vadd.f32 %v1648, %v1665
      %v1672 = vadd.f32 %v1649, %v1665
      %v1673 = vadd.f32 %v1650, %v1665
      %v1674 = vadd.f32 %v1651, %v1665
      %v1675 = vadd.f32 %v1652, %v1665
      %v1676 = vadd.f32 %v1653, %v1665
      %v1677 = vadd.f32 %v1654, %v1665
      %v1678 = vadd.f32 %v1655, %v1665
      %v1679 = vadd.f32 %v1656, %v1665
      %v1680 = vadd.f32 %v1657, %v1665
      %v1681 = vadd.f32 %v1658, %v1665
      %v1682 = vadd.f32 %v1659, %v1665
      %v1683 = vld [vmem:[%s413] sm:$0xff]
      %v1684 = vld [vmem:[%s413 + $0x8] sm:$0xff]
      %v1685 = vld [vmem:[%s413 + $0x10] sm:$0xff]
      %v1686 = vld [vmem:[%s413 + $0x18] sm:$0xff]
      %v1687 = vld [vmem:[%s413 + $0x20] sm:$0xff]
      %v1688 = vld [vmem:[%s413 + $0x28] sm:$0xff]
      %v1689 = vld [vmem:[%s413 + $0x30] sm:$0xff]
      %v1690 = vld [vmem:[%s413 + $0x38] sm:$0xff]
      %v1691 = vld [vmem:[%s413 + $0x40] sm:$0xff]
      %v1692 = vld [vmem:[%s413 + $0x48] sm:$0xff]
      %v1693 = vld [vmem:[%s413 + $0x50] sm:$0xff]
      %v1694 = vld [vmem:[%s413 + $0x58] sm:$0xff]
      %v1695 = vld [vmem:[%s413 + $0x60] sm:$0xff]
      %v1696 = vld [vmem:[%s413 + $0x68] sm:$0xff]
      %v1697 = vld [vmem:[%s413 + $0x70] sm:$0xff]
      %v1698 = vld [vmem:[%s413 + $0x78] sm:$0xff]
      %v1699 = vld [vmem:[%s5] sm:$0xff]
      %v1700 = vld [vmem:[%s5 + $0x8] sm:$0xff]
      %v1701 = vld [vmem:[%s5 + $0x10] sm:$0xff]
      %v1702 = vld [vmem:[%s5 + $0x18] sm:$0xff]
      %v1703 = vld [vmem:[%s5 + $0x20] sm:$0xff]
      %v1704 = vld [vmem:[%s5 + $0x28] sm:$0xff]
      %v1705 = vld [vmem:[%s5 + $0x30] sm:$0xff]
      %v1706 = vld [vmem:[%s5 + $0x38] sm:$0xff]
      %v1707 = vld [vmem:[%s5 + $0x40] sm:$0xff]
      %v1708 = vld [vmem:[%s5 + $0x48] sm:$0xff]
      %v1709 = vld [vmem:[%s5 + $0x50] sm:$0xff]
      %v1710 = vld [vmem:[%s5 + $0x58] sm:$0xff]
      %v1711 = vld [vmem:[%s5 + $0x60] sm:$0xff]
      %v1712 = vld [vmem:[%s5 + $0x68] sm:$0xff]
      %v1713 = vld [vmem:[%s5 + $0x70] sm:$0xff]
      %v1714 = vld [vmem:[%s5 + $0x78] sm:$0xff]
      %v1715 = vld [vmem:[%s6] sm:$0x1]
      %v1717 = vlaneseq
      %v1718 = vshrl.u32 %v1717, 7
      %v1719 = vsub.s32 0, %v1718
      %v1720 = vrot.slane %v1715, %v1719
      %1722 = vmatprep.subr.mxu0 0.0
      %1723 = vmatpush1.msra.mxu0 %v1714
      %1724 = vmatprep.subr.mxu0 0.0
      %1725 = vmatpush1.msra.mxu0 %v1713
      %1726 = vmatprep.subr.mxu0 0.0
      %1727 = vmatpush1.msra.mxu0 %v1712
      %1728 = vmatprep.subr.mxu0 0.0
      %1729 = vmatpush1.msra.mxu0 %v1711
      %1730 = vmatprep.subr.mxu0 0.0
      %1731 = vmatpush1.msra.mxu0 %v1710
      %1732 = vmatprep.subr.mxu0 0.0
      %1733 = vmatpush1.msra.mxu0 %v1709
      %1734 = vmatprep.subr.mxu0 0.0
      %1735 = vmatpush1.msra.mxu0 %v1708
      %1736 = vmatprep.subr.mxu0 0.0
      %1737 = vmatpush1.msra.mxu0 %v1707
      %1738 = vmatprep.subr.mxu0 0.0
      %1739 = vmatpush1.msra.mxu0 %v1706
      %1740 = vmatprep.subr.mxu0 0.0
      %1741 = vmatpush1.msra.mxu0 %v1705
      %1742 = vmatprep.subr.mxu0 0.0
      %1743 = vmatpush1.msra.mxu0 %v1704
      %1744 = vmatprep.subr.mxu0 0.0
      %1745 = vmatpush1.msra.mxu0 %v1703
      %1746 = vmatprep.subr.mxu0 0.0
      %1747 = vmatpush1.msra.mxu0 %v1702
      %1748 = vmatprep.subr.mxu0 0.0
      %1749 = vmatpush1.msra.mxu0 %v1701
      %1750 = vmatprep.subr.mxu0 0.0
      %1751 = vmatpush1.msra.mxu0 %v1700
      %1752 = vmatprep.subr.mxu0 0.0
      %1753 = vmatpush1.msra.mxu0 %v1699
      %1754 = vmatprep.subr.mxu0 0.0
      %1755 = vmatpush2.msra.mxu0 0.0
      %1756 = vmatprep.subr.mxu0 0.0
      %1757 = vmatpush2.msra.mxu0 0.0
      %1758 = vmatprep.subr.mxu0 0.0
      %1759 = vmatpush2.msra.mxu0 0.0
      %1760 = vmatprep.subr.mxu0 0.0
      %1761 = vmatpush2.msra.mxu0 0.0
      %1762 = vmatprep.subr.mxu0 0.0
      %1763 = vmatpush2.msra.mxu0 0.0
      %1764 = vmatprep.subr.mxu0 0.0
      %1765 = vmatpush2.msra.mxu0 0.0
      %1766 = vmatprep.subr.mxu0 0.0
      %1767 = vmatpush2.msra.mxu0 0.0
      %1768 = vmatprep.subr.mxu0 0.0
      %1769 = vmatpush2.msra.mxu0 0.0
      %1770 = vmatprep.subr.mxu0 0.0
      %1771 = vmatpush2.msra.mxu0 0.0
      %1772 = vmatprep.subr.mxu0 0.0
      %1773 = vmatpush2.msra.mxu0 0.0
      %1774 = vmatprep.subr.mxu0 0.0
      %1775 = vmatpush2.msra.mxu0 0.0
      %1776 = vmatprep.subr.mxu0 0.0
      %1777 = vmatpush2.msra.mxu0 0.0
      %1778 = vmatprep.subr.mxu0 0.0
      %1779 = vmatpush2.msra.mxu0 0.0
      %1780 = vmatprep.subr.mxu0 0.0
      %1781 = vmatpush2.msra.mxu0 0.0
      %1782 = vmatprep.subr.mxu0 0.0
      %1783 = vmatpush2.msra.mxu0 0.0
      %1784 = vmatprep.subr.mxu0 0.0
      %1785 = vmatpush2.msra.mxu0 0.0
      %1786 = vmatprep.mubr.f32.mxu0 0.0
      %1787 = vmatmul.mubr.f32.gmra.mxu0 %v1683
      %v1788 = vpop.f32.mrf.mxu0
      %v1789 = vadd.f32 %v1720, %v1788
      %v1790 = vpop.f32.mrf.mxu0
      %1791 = vmatprep.mubr.f32.mxu0 0.0
      %1792 = vmatmul.mubr.f32.gmra.mxu0 %v1684
      %v1793 = vpop.f32.mrf.mxu0
      %v1794 = vadd.f32 %v1720, %v1793
      %v1795 = vpop.f32.mrf.mxu0
      %1796 = vmatprep.mubr.f32.mxu0 0.0
      %1797 = vmatmul.mubr.f32.gmra.mxu0 %v1685
      %v1798 = vpop.f32.mrf.mxu0
      %v1799 = vadd.f32 %v1720, %v1798
      %v1800 = vpop.f32.mrf.mxu0
      %1801 = vmatprep.mubr.f32.mxu0 0.0
      %1802 = vmatmul.mubr.f32.gmra.mxu0 %v1686
      %v1803 = vpop.f32.mrf.mxu0
      %v1804 = vadd.f32 %v1720, %v1803
      %v1805 = vpop.f32.mrf.mxu0
      %1806 = vmatprep.mubr.f32.mxu0 0.0
      %1807 = vmatmul.mubr.f32.gmra.mxu0 %v1687
      %v1808 = vpop.f32.mrf.mxu0
      %v1809 = vadd.f32 %v1720, %v1808
      %v1810 = vpop.f32.mrf.mxu0
      %1811 = vmatprep.mubr.f32.mxu0 0.0
      %1812 = vmatmul.mubr.f32.gmra.mxu0 %v1688
      %v1813 = vpop.f32.mrf.mxu0
      %v1814 = vadd.f32 %v1720, %v1813
      %v1815 = vpop.f32.mrf.mxu0
      %1816 = vmatprep.mubr.f32.mxu0 0.0
      %1817 = vmatmul.mubr.f32.gmra.mxu0 %v1689
      %v1818 = vpop.f32.mrf.mxu0
      %v1819 = vadd.f32 %v1720, %v1818
      %v1820 = vpop.f32.mrf.mxu0
      %1821 = vmatprep.mubr.f32.mxu0 0.0
      %1822 = vmatmul.mubr.f32.gmra.mxu0 %v1690
      %v1823 = vpop.f32.mrf.mxu0
      %v1824 = vadd.f32 %v1720, %v1823
      %v1825 = vpop.f32.mrf.mxu0
      %1826 = vmatprep.mubr.f32.mxu0 0.0
      %1827 = vmatmul.mubr.f32.gmra.mxu0 %v1691
      %v1828 = vpop.f32.mrf.mxu0
      %v1829 = vadd.f32 %v1720, %v1828
      %v1830 = vpop.f32.mrf.mxu0
      %1831 = vmatprep.mubr.f32.mxu0 0.0
      %1832 = vmatmul.mubr.f32.gmra.mxu0 %v1692
      %v1833 = vpop.f32.mrf.mxu0
      %v1834 = vadd.f32 %v1720, %v1833
      %v1835 = vpop.f32.mrf.mxu0
      %1836 = vmatprep.mubr.f32.mxu0 0.0
      %1837 = vmatmul.mubr.f32.gmra.mxu0 %v1693
      %v1838 = vpop.f32.mrf.mxu0
      %v1839 = vadd.f32 %v1720, %v1838
      %v1840 = vpop.f32.mrf.mxu0
      %1841 = vmatprep.mubr.f32.mxu0 0.0
      %1842 = vmatmul.mubr.f32.gmra.mxu0 %v1694
      %v1843 = vpop.f32.mrf.mxu0
      %v1844 = vadd.f32 %v1720, %v1843
      %v1845 = vpop.f32.mrf.mxu0
      %1846 = vmatprep.mubr.f32.mxu0 0.0
      %1847 = vmatmul.mubr.f32.gmra.mxu0 %v1695
      %v1848 = vpop.f32.mrf.mxu0
      %v1849 = vadd.f32 %v1720, %v1848
      %v1850 = vpop.f32.mrf.mxu0
      %1851 = vmatprep.mubr.f32.mxu0 0.0
      %1852 = vmatmul.mubr.f32.gmra.mxu0 %v1696
      %v1853 = vpop.f32.mrf.mxu0
      %v1854 = vadd.f32 %v1720, %v1853
      %v1855 = vpop.f32.mrf.mxu0
      %1856 = vmatprep.mubr.f32.mxu0 0.0
      %1857 = vmatmul.mubr.f32.gmra.mxu0 %v1697
      %v1858 = vpop.f32.mrf.mxu0
      %v1859 = vadd.f32 %v1720, %v1858
      %v1860 = vpop.f32.mrf.mxu0
      %1861 = vmatprep.mubr.f32.mxu0 0.0
      %1862 = vmatmul.mubr.f32.gmra.mxu0 %v1698
      %v1863 = vpop.f32.mrf.mxu0
      %v1864 = vadd.f32 %v1720, %v1863
      %v1865 = vpop.f32.mrf.mxu0
      %1866 = vdwg.mxu0
      %v1867 = vadd.f32 %v1667, %v1789
      %v1868 = vadd.f32 %v1668, %v1794
      %v1869 = vadd.f32 %v1669, %v1799
      %v1870 = vadd.f32 %v1670, %v1804
      %v1871 = vadd.f32 %v1671, %v1809
      %v1872 = vadd.f32 %v1672, %v1814
      %v1873 = vadd.f32 %v1673, %v1819
      %v1874 = vadd.f32 %v1674, %v1824
      %v1875 = vadd.f32 %v1675, %v1829
      %v1876 = vadd.f32 %v1676, %v1834
      %v1877 = vadd.f32 %v1677, %v1839
      %v1878 = vadd.f32 %v1678, %v1844
      %v1879 = vadd.f32 %v1679, %v1849
      %v1880 = vadd.f32 %v1680, %v1854
      %v1881 = vadd.f32 %v1681, %v1859
      %v1882 = vadd.f32 %v1682, %v1864
      %1883 = vst [vmem:[%s424] sm:$0xff] %v1867
      %1884 = vst [vmem:[%s424 + $0x8] sm:$0xff] %v1868
      %1885 = vst [vmem:[%s424 + $0x10] sm:$0xff] %v1869
      %1886 = vst [vmem:[%s424 + $0x18] sm:$0xff] %v1870
      %1887 = vst [vmem:[%s424 + $0x20] sm:$0xff] %v1871
      %1888 = vst [vmem:[%s424 + $0x28] sm:$0xff] %v1872
      %1889 = vst [vmem:[%s424 + $0x30] sm:$0xff] %v1873
      %1890 = vst [vmem:[%s424 + $0x38] sm:$0xff] %v1874
      %1891 = vst [vmem:[%s424 + $0x40] sm:$0xff] %v1875
      %1892 = vst [vmem:[%s424 + $0x48] sm:$0xff] %v1876
      %1893 = vst [vmem:[%s424 + $0x50] sm:$0xff] %v1877
      %1894 = vst [vmem:[%s424 + $0x58] sm:$0xff] %v1878
      %1895 = vst [vmem:[%s424 + $0x60] sm:$0xff] %v1879
      %1896 = vst [vmem:[%s424 + $0x68] sm:$0xff] %v1880
      %1897 = vst [vmem:[%s424 + $0x70] sm:$0xff] %v1881
      %1898 = vst [vmem:[%s424 + $0x78] sm:$0xff] %v1882
      %s1899 = smul.u32 8, %s23
      %p1900 = scmp.lt.s32.totalorder %s22, 1
      %s1901 = scalar_select %p1900, %s22, 1
      %p1902 = scmp.lt.s32.totalorder %s1899, 15
      %s1903 = scalar_select %p1902, %s1899, 15
      %s1904 = smul.addr %s1903, 2
      %s1905 = smul.addr %s1901, 32
      %s1906 = sadd.s32 %s1904, %s1905
      %s1907 = smul.addr %s1906, 8
      %s1908 = scalar_lea.vmem %s7, %s1907
      // Predicated region
      $region49: #{block_forward.5} parent=47 // pred_check
        %p1909 = pneg %p218
      $region50: #{block_forward.5} parent=47 // pred_check_branch
        %1911 = sbr.rel (%p1909) target = $region52
      $region51: #{block_forward.5} parent=47 // pred_region
        %s1912 = smul.u32 8, %s23
      $region52: #{block_forward.5} parent=47 // pred_fallthru
        _
    $region48: #{block_forward.5} parent=5 // pred_fallthru
      _
    %p1913 = scmp.le.s32.totalorder 2, %s13
    // Predicated region
    $region53: #{block_forward.5} parent=5 // pred_check
      %p1914 = pneg %p1913
    $region54: #{block_forward.5} parent=5 // pred_check_branch
      %1916 = sbr.rel (%p1914) target = $region56
    $region55: #{block_forward.5} parent=5 // pred_region
      %s1917 = ssub.s32 %s13, 2
      // Predicated region
      $region57: #{block_forward.5} parent=55 // pred_check
        %p1918 = pneg %p224
      $region58: #{block_forward.5} parent=55 // pred_check_branch
        %1920 = sbr.rel (%p1918) target = $region60
      $region59: #{block_forward.5} parent=55 // pred_region
        %s1921 = smul.u32 8, %s25
        %p1922 = scmp.lt.s32.totalorder %s24, 1
        %s1923 = scalar_select %p1922, %s24, 1
        %p1924 = scmp.lt.s32.totalorder %s1921, 15
        %s1925 = scalar_select %p1924, %s1921, 15
        %s1926 = smul.addr %s1925, 2
        %s1927 = smul.addr %s1923, 32
        %s1928 = sadd.s32 %s1926, %s1927
        %s1929 = smul.addr %s1928, 8
        %s1930 = scalar_lea.vmem %s7, %s1929
      $region60: #{block_forward.5} parent=55 // pred_fallthru
        _
    $region56: #{block_forward.5} parent=5 // pred_fallthru
      _
  $region6: #{block_forward.5} parent=0 // loop_footer
    %s17 = sadd.s32 1, %s13
  $region7: #{block_forward.5} parent=0 // loop_footer_branch
    %12 = sbr.rel target = $region3
  $region8: #{block_forward.5} parent=0 // loop_exit
    _

</llo_original>
